<compile_context>
chip_gen: v7x
topology: tpu7x:2x2x1
jax: 0.10.0
libtpu: 0.0.40
codegen_flags: <defaults>
</compile_context>

<pallas_src>
import functools
import math

import jax
import jax.numpy as jnp
from jax import lax
from jax.experimental import pallas as pl
from jax.experimental.pallas import tpu as pltpu

# ----------------------------- tiny Qwen2 config ------------------------------
VOCAB = 256
HIDDEN = 64
N_HEADS = 4
N_KV_HEADS = 2
HEAD_DIM = HIDDEN // N_HEADS          # 16
INTERMEDIATE = 128
N_LAYERS = 2
SEQ = 8
RMS_EPS = 1e-6
ROPE_THETA = 10000.0

REP = N_HEADS // N_KV_HEADS           # query heads per KV head
N_QKV = N_HEADS + 2 * N_KV_HEADS      # per-head-blocked QKV weight slots
SCALE = 1.0 / math.sqrt(HEAD_DIM)

WDTYPE = jnp.bfloat16                 # projection-weight storage dtype (MXU)


# ------------------------------ fused model kernel -----------------------------
def _fused_model_kernel(h0_ref, cos_ref, sin_ref, rot_ref,
                        in_ln_ref, post_ln_ref, wqkv_ref, bqkv_ref,
                        wo_ref, wgu_ref, wd_ref, final_ln_ref, wlm_ref,
                        logits_ref,
                        h_scr, res_scr, mask_scr, q_scr, k_scr, v_scr,
                        *, eps, scale):
    layer = pl.program_id(0)
    seq = h0_ref.shape[0]

    # -- once, at the first grid step: seed the carries + build the causal mask -
    @pl.when(layer == 0)
    def _():
        h_scr[...] = h0_ref[...]
        res_scr[...] = jnp.zeros_like(res_scr)
        row = lax.broadcasted_iota(jnp.int32, (seq, seq), 0)
        col = lax.broadcasted_iota(jnp.int32, (seq, seq), 1)
        # TODO(synk): pure-prefill mask (q/k positions both start at 0); a KV
        # cache / decode path would need position-aware masking.
        mask_scr[...] = jnp.where(col <= row, 0.0, -1e30).astype(jnp.float32)

    def rmsnorm(x, w):
        var = jnp.mean(x * x, axis=-1, keepdims=True)
        return x * lax.rsqrt(var + eps) * w

    def bdot(x, w):   # bf16 MXU matmul, f32 accumulation
        return jnp.dot(x.astype(jnp.bfloat16), w,
                       preferred_element_type=jnp.float32)

    rot = rot_ref[...]                  # (D, D) bf16 rotate-half matrix (0/+-1)
    cos = cos_ref[...]                  # (S, D) f32 (shared across heads)
    sin = sin_ref[...]

    def rope(x):                        # NeoX RoPE: x*cos + rotate_half(x)*sin
        return x * cos + bdot(x, rot) * sin

    # ---- input_layernorm (fused residual add) ---------------------------------
    s1 = h_scr[...] + res_scr[...]                        # (S, HIDDEN) f32
    xb = rmsnorm(s1, in_ln_ref[0]).astype(jnp.bfloat16)

    # ---- per-head QKV projection (+bias) + RoPE into (H, S, D) scratch --------
    # Per-head-blocked weights => every head's output starts at lane 0 (no
    # mid-vreg slices).  GQA: each KV head is stored into its REP query slots.
    for h in range(N_HEADS):
        qh = bdot(xb, wqkv_ref[0, h]) + bqkv_ref[0, h]    # (S, D)
        q_scr[h] = rope(qh) * scale                       # fold softmax scale in
    for g in range(N_KV_HEADS):
        kg = bdot(xb, wqkv_ref[0, N_HEADS + g]) + bqkv_ref[0, N_HEADS + g]
        vg = (bdot(xb, wqkv_ref[0, N_HEADS + N_KV_HEADS + g])
              + bqkv_ref[0, N_HEADS + N_KV_HEADS + g])
        kg = rope(kg)
        for r in range(REP):
            k_scr[g * REP + r] = kg
            v_scr[g * REP + r] = vg

    # ---- causal attention, batched over all heads (one QK^T, one softmax, one PV)
    q3 = q_scr[...].astype(jnp.bfloat16)                  # (H, S, D)
    k3 = k_scr[...].astype(jnp.bfloat16)
    v3 = v_scr[...].astype(jnp.bfloat16)
    sc = jnp.einsum("hqd,hkd->hqk", q3, k3,
                    preferred_element_type=jnp.float32)   # (H, S, S) f32
    sc = sc + mask_scr[...]                               # broadcast (S,S)->(H,S,S)
    m = jnp.max(sc, axis=-1, keepdims=True)
    p = jnp.exp(sc - m)
    denom = jnp.sum(p, axis=-1, keepdims=True)
    p = p * pl.reciprocal(denom, approx=True)             # EUP slot
    o3 = jnp.einsum("hqk,hkd->hqd", p.astype(jnp.bfloat16), v3,
                    preferred_element_type=jnp.float32)   # (H, S, D) f32

    # ---- O-projection as a sum of per-head contributions (no concat) ----------
    attn = bdot(o3[0], wo_ref[0, 0])
    for h in range(1, N_HEADS):
        attn = attn + bdot(o3[h], wo_ref[0, h])           # (S, HIDDEN)

    # ---- post_attention_layernorm (+ residual) ---------------------------------
    s2 = attn + s1
    x2b = rmsnorm(s2, post_ln_ref[0]).astype(jnp.bfloat16)

    # ---- MLP: down( silu(gate) * up ); gate/up fused, 128-lane-aligned slices --
    gu = bdot(x2b, wgu_ref[0])                            # (S, 2*INTER)
    gate = gu[:, :INTERMEDIATE]
    up = gu[:, INTERMEDIATE:]
    silu = gate * pl.reciprocal(1.0 + jnp.exp(-gate), approx=True)
    mlp_out = bdot(silu * up, wd_ref[0])                  # (S, HIDDEN)

    # carry (hidden, residual) to the next layer in VMEM
    h_scr[...] = mlp_out
    res_scr[...] = s2

    # ---- last layer: final RMSNorm + LM head fused in, lane-dense logits out ---
    @pl.when(layer == pl.num_programs(0) - 1)
    def _():
        hid = rmsnorm(mlp_out + s2, final_ln_ref[...])
        logits_ref[...] = bdot(hid, wlm_ref[...]).astype(logits_ref.dtype)


# -------------------------------- wrappers -------------------------------------
def _const_spec(shape):
    ndim = len(shape)
    # NOTE: layer-invariant inputs are tiny here; at large S they would warrant
    # pipeline_mode=pl.Buffered(1) to drop the default double-buffer.
    return pl.BlockSpec(tuple(shape), lambda l: (0,) * ndim)


def _per_layer_spec(shape):
    ndim = len(shape)
    return pl.BlockSpec((1,) + tuple(shape[1:]),
                        lambda l: (l,) + (0,) * (ndim - 1))


def rope_tables(positions):
    inv_freq = 1.0 / (ROPE_THETA ** (
        jnp.arange(0, HEAD_DIM, 2, dtype=jnp.float32) / HEAD_DIM))
    ang = positions.astype(jnp.float32)[:, None] * inv_freq[None, :]   # (S, D/2)
    cos = jnp.concatenate([jnp.cos(ang), jnp.cos(ang)], axis=-1)       # (S, D)
    sin = jnp.concatenate([jnp.sin(ang), jnp.sin(ang)], axis=-1)       # (S, D)
    return cos, sin


def rotate_half_matrix(dtype=WDTYPE):
    """R with rotate_half(x) == x @ R (NeoX), single head.  Entries 0/+-1."""
    half = HEAD_DIM // 2
    r = jnp.zeros((HEAD_DIM, HEAD_DIM), jnp.float32)
    r = r.at[half:, :half].set(-jnp.eye(half, dtype=jnp.float32))
    r = r.at[:half, half:].set(jnp.eye(half, dtype=jnp.float32))
    return r.astype(dtype)


def qwen2_forward(params, tokens, positions):
    seq = tokens.shape[0]
    cos, sin = rope_tables(positions)
    rot = rotate_half_matrix()

    # TODO(synk): VocabParallelEmbedding gather kept as plain JAX glue.
    h0 = jnp.take(params["embed"], tokens, axis=0).astype(jnp.float32)

    # TODO(synk): on v7x, add a leading 'parallel' grid axis over sequence tiles
    # or independent requests so the 2nd TensorCore has work (layer axis must
    # stay 'arbitrary').  At real Qwen2 dims the per-layer weights also need an
    # inner K/N tiling axis + vmem_limit_bytes instead of whole-matrix residency.
    return pl.pallas_call(
        functools.partial(_fused_model_kernel, eps=RMS_EPS, scale=SCALE),
        out_shape=jax.ShapeDtypeStruct((seq, VOCAB), jnp.float32),
        grid=(N_LAYERS,),
        in_specs=[
            _const_spec((seq, HIDDEN)),                 # h0 (embeddings)
            _const_spec((seq, HEAD_DIM)),               # cos (per-head RoPE table)
            _const_spec((seq, HEAD_DIM)),               # sin
            _const_spec((HEAD_DIM, HEAD_DIM)),          # rotate-half matrix (bf16)
            _per_layer_spec(params["input_ln"].shape),  # (L, 1, HIDDEN)
            _per_layer_spec(params["post_ln"].shape),   # (L, 1, HIDDEN)
            _per_layer_spec(params["wqkv"].shape),      # (L, N_QKV, HIDDEN, D)
            _per_layer_spec(params["bqkv"].shape),      # (L, N_QKV, 1, D)
            _per_layer_spec(params["wo"].shape),        # (L, H, D, HIDDEN)
            _per_layer_spec(params["wgu"].shape),       # (L, HIDDEN, 2*INTER)
            _per_layer_spec(params["wd"].shape),        # (L, INTER, HIDDEN)
            _const_spec((1, HIDDEN)),                   # final_ln
            _const_spec((HIDDEN, VOCAB)),               # lm_head (fused in)
        ],
        out_specs=pl.BlockSpec((seq, VOCAB), lambda l: (0, 0)),
        scratch_shapes=[
            pltpu.VMEM((seq, HIDDEN), jnp.float32),            # hidden carry
            pltpu.VMEM((seq, HIDDEN), jnp.float32),            # residual carry
            pltpu.VMEM((seq, seq), jnp.float32),               # causal mask (built once)
            pltpu.VMEM((N_HEADS, seq, HEAD_DIM), jnp.float32),  # q (head-batched)
            pltpu.VMEM((N_HEADS, seq, HEAD_DIM), jnp.float32),  # k (GQA-expanded)
            pltpu.VMEM((N_HEADS, seq, HEAD_DIM), jnp.float32),  # v (GQA-expanded)
        ],
        compiler_params=pltpu.CompilerParams(
            dimension_semantics=("arbitrary",)),        # layers are sequential
    )(h0, cos, sin, rot,
      params["input_ln"], params["post_ln"], params["wqkv"], params["bqkv"],
      params["wo"], params["wgu"], params["wd"], params["final_ln"],
      params["lm_head"])


def compute_logits(token_logits, query_start_loc):
    # lm_head is fused into the last grid step of qwen2_forward; only the
    # last-token gather (hidden_states[query_start_loc - 1][1:]) remains here.
    idx = (query_start_loc - 1)[1:]
    return jnp.take(token_logits, idx, axis=0)


# ----------------------------- pure-JAX reference -------------------------------
def reference_logits(params, tokens, positions):
    f32 = jnp.float32
    cos, sin = rope_tables(positions)
    rot = rotate_half_matrix(f32)
    seq = tokens.shape[0]
    mask = jnp.arange(seq)[None, :] <= jnp.arange(seq)[:, None]

    def rms(x, w):
        return x * lax.rsqrt(jnp.mean(x * x, axis=-1, keepdims=True) + RMS_EPS) * w

    def rope(x):
        return x * cos + (x @ rot) * sin

    h = jnp.take(params["embed"].astype(f32), tokens, axis=0)
    res = jnp.zeros_like(h)
    for l in range(N_LAYERS):
        wqkv = params["wqkv"][l].astype(f32)
        bqkv = params["bqkv"][l].astype(f32)
        s1 = h + res
        x = rms(s1, params["input_ln"][l, 0])
        q = [rope(x @ wqkv[hh] + bqkv[hh]) for hh in range(N_HEADS)]
        k = [rope(x @ wqkv[N_HEADS + g] + bqkv[N_HEADS + g])
             for g in range(N_KV_HEADS)]
        v = [x @ wqkv[N_HEADS + N_KV_HEADS + g] + bqkv[N_HEADS + N_KV_HEADS + g]
             for g in range(N_KV_HEADS)]
        attn = jnp.zeros((seq, HIDDEN), f32)
        for hh in range(N_HEADS):
            g = hh // REP
            sc = (q[hh] @ k[g].T) * SCALE
            sc = jnp.where(mask, sc, -1e30)
            p = jax.nn.softmax(sc, axis=-1)
            attn = attn + (p @ v[g]) @ params["wo"][l, hh].astype(f32)
        s2 = attn + s1
        x2 = rms(s2, params["post_ln"][l, 0])
        gu = x2 @ params["wgu"][l].astype(f32)
        gate, up = gu[:, :INTERMEDIATE], gu[:, INTERMEDIATE:]
        mlp = (jax.nn.silu(gate) * up) @ params["wd"][l].astype(f32)
        h, res = mlp, s2
    hid = rms(h + res, params["final_ln"][0])
    return hid @ params["lm_head"].astype(f32)


# ------------------------------ param init -------------------------------------
def init_params(key):
    def nrm(k, shape, dtype, scale=0.02):
        return (jax.random.normal(k, shape, dtype=jnp.float32) * scale).astype(dtype)

    keys = jax.random.split(key, 7)
    return {
        "embed": nrm(keys[0], (VOCAB, HIDDEN), WDTYPE),
        "lm_head": nrm(keys[1], (HIDDEN, VOCAB), WDTYPE),                 # (in, out)
        "final_ln": jnp.ones((1, HIDDEN), jnp.float32),
        "input_ln": jnp.ones((N_LAYERS, 1, HIDDEN), jnp.float32),
        "post_ln": jnp.ones((N_LAYERS, 1, HIDDEN), jnp.float32),
        # per-head-blocked fused QKV:  slots [0:H)=q heads, [H:H+KV)=k, rest=v
        "wqkv": nrm(keys[2], (N_LAYERS, N_QKV, HIDDEN, HEAD_DIM), WDTYPE),
        "bqkv": nrm(keys[3], (N_LAYERS, N_QKV, 1, HEAD_DIM), jnp.float32),
        "wo": nrm(keys[4], (N_LAYERS, N_HEADS, HEAD_DIM, HIDDEN), WDTYPE),
        "wgu": nrm(keys[5], (N_LAYERS, HIDDEN, 2 * INTERMEDIATE), WDTYPE),
        "wd": nrm(keys[6], (N_LAYERS, INTERMEDIATE, HIDDEN), WDTYPE),
    }


# ----------------------------------- main ---------------------------------------
if __name__ == "__main__":
    key = jax.random.PRNGKey(0)
    pkey, tkey = jax.random.split(key)
    params = init_params(pkey)

    tokens = jax.random.randint(tkey, (SEQ,), 0, VOCAB, dtype=jnp.int32)
    positions = jnp.arange(SEQ, dtype=jnp.int32)
    query_start_loc = jnp.array([0, SEQ], dtype=jnp.int32)

    token_logits = qwen2_forward(params, tokens, positions)     # (S, VOCAB)
    logits = compute_logits(token_logits, query_start_loc)      # (B=1, VOCAB)
    jax.block_until_ready(logits)

    assert token_logits.shape == (SEQ, VOCAB)
    assert logits.shape == (1, VOCAB)
    assert bool(jnp.all(jnp.isfinite(token_logits)))
    assert bool(jnp.all(jnp.isfinite(logits)))

    # Correctness vs. a plain-JAX f32 reference (kernel uses bf16 MXU operands
    # and approx reciprocals, hence the tolerance).
    ref = reference_logits(params, tokens, positions)
    assert bool(jnp.allclose(token_logits, ref, rtol=5e-2, atol=2e-2)), (
        "max abs err = %g" % float(jnp.max(jnp.abs(token_logits - ref))))

    print("KERNEL_OK")
</pallas_src>

<mosaic_0001>
module attributes {stable_mosaic.version = 11 : i64} {
  func.func @_fused_model_kernel(%arg0: i32, %arg1: memref<8x64xf32, #tpu.memory_space<vmem>>, %arg2: memref<8x16xf32, #tpu.memory_space<vmem>>, %arg3: memref<8x16xf32, #tpu.memory_space<vmem>>, %arg4: memref<16x16xbf16, #tpu.memory_space<vmem>>, %arg5: memref<1x1x64xf32, #tpu.memory_space<vmem>>, %arg6: memref<1x1x64xf32, #tpu.memory_space<vmem>>, %arg7: memref<1x8x64x16xbf16, #tpu.memory_space<vmem>>, %arg8: memref<1x8x1x16xf32, #tpu.memory_space<vmem>>, %arg9: memref<1x4x16x64xbf16, #tpu.memory_space<vmem>>, %arg10: memref<1x64x256xbf16, #tpu.memory_space<vmem>>, %arg11: memref<1x128x64xbf16, #tpu.memory_space<vmem>>, %arg12: memref<1x64xf32, #tpu.memory_space<vmem>>, %arg13: memref<64x256xbf16, #tpu.memory_space<vmem>>, %arg14: memref<8x256xf32, #tpu.memory_space<vmem>>, %arg15: memref<8x64xf32, #tpu.memory_space<vmem>>, %arg16: memref<8x64xf32, #tpu.memory_space<vmem>>, %arg17: memref<8x8xf32, #tpu.memory_space<vmem>>, %arg18: memref<4x8x16xf32, #tpu.memory_space<vmem>>, %arg19: memref<4x8x16xf32, #tpu.memory_space<vmem>>, %arg20: memref<4x8x16xf32, #tpu.memory_space<vmem>>) attributes {dimension_semantics = [#tpu.dimension_semantics<arbitrary>], iteration_bounds = array<i64: 2>, scalar_prefetch = 0 : i64, scratch_operands = 6 : i64, tpu.core_type = #tpu.core_type<tc>, window_params = [{pipeline_mode = #tpu.pipeline_mode<synchronous>, transform_indices = @transform_0, window_bounds = array<i64: 8, 64>}, {pipeline_mode = #tpu.pipeline_mode<synchronous>, transform_indices = @transform_1, window_bounds = array<i64: 8, 16>}, {pipeline_mode = #tpu.pipeline_mode<synchronous>, transform_indices = @transform_2, window_bounds = array<i64: 8, 16>}, {pipeline_mode = #tpu.pipeline_mode<synchronous>, transform_indices = @transform_3, window_bounds = array<i64: 16, 16>}, {transform_indices = @transform_4, window_bounds = array<i64: 1, 1, 64>}, {transform_indices = @transform_5, window_bounds = array<i64: 1, 1, 64>}, {transform_indices = @transform_6, window_bounds = array<i64: 1, 8, 64, 16>}, {transform_indices = @transform_7, window_bounds = array<i64: 1, 8, 1, 16>}, {transform_indices = @transform_8, window_bounds = array<i64: 1, 4, 16, 64>}, {transform_indices = @transform_9, window_bounds = array<i64: 1, 64, 256>}, {transform_indices = @transform_10, window_bounds = array<i64: 1, 128, 64>}, {pipeline_mode = #tpu.pipeline_mode<synchronous>, transform_indices = @transform_11, window_bounds = array<i64: 1, 64>}, {pipeline_mode = #tpu.pipeline_mode<synchronous>, transform_indices = @transform_12, window_bounds = array<i64: 64, 256>}, {pipeline_mode = #tpu.pipeline_mode<synchronous>, transform_indices = @transform_13, window_bounds = array<i64: 8, 256>}]} {
    %c0_i32 = arith.constant 0 : i32
    %0 = arith.cmpi eq, %arg0, %c0_i32 : i32
    %1 = arith.extui %0 : i1 to i32
    %c0_i32_0 = arith.constant 0 : i32
    %2 = arith.cmpi ne, %1, %c0_i32_0 : i32
    scf.if %2 {
      %c0_182 = arith.constant 0 : index
      %c0_183 = arith.constant 0 : index
      %242 = vector.load %arg1[%c0_182, %c0_183] : memref<8x64xf32, #tpu.memory_space<vmem>>, vector<8x64xf32>
      %c0_184 = arith.constant 0 : index
      %c0_185 = arith.constant 0 : index
      %243 = vector.load %arg15[%c0_184, %c0_185] : memref<8x64xf32, #tpu.memory_space<vmem>>, vector<8x64xf32>
      tpu.vector_store %arg15[%c0_184, %c0_185], %242 {strides = array<i32>} : memref<8x64xf32, #tpu.memory_space<vmem>>, vector<8x64xf32>,
      %cst_186 = arith.constant 0.000000e+00 : f32
      %244 = vector.broadcast %cst_186 : f32 to vector<8x64xf32>
      %c0_187 = arith.constant 0 : index
      %c0_188 = arith.constant 0 : index
      %245 = vector.load %arg16[%c0_187, %c0_188] : memref<8x64xf32, #tpu.memory_space<vmem>>, vector<8x64xf32>
      tpu.vector_store %arg16[%c0_187, %c0_188], %244 {strides = array<i32>} : memref<8x64xf32, #tpu.memory_space<vmem>>, vector<8x64xf32>,
      %246 = tpu.iota {dimensions = array<i32: 0>} : vector<8x8xi32>
      %247 = tpu.iota {dimensions = array<i32: 1>} : vector<8x8xi32>
      %248 = arith.cmpi sle, %247, %246 : vector<8x8xi32>
      %cst_189 = arith.constant 0.000000e+00 : f32
      %cst_190 = arith.constant -1.000000e+30 : f32
      %249 = vector.broadcast %cst_189 : f32 to vector<8x8xf32>
      %250 = vector.broadcast %cst_190 : f32 to vector<8x8xf32>
      %251 = arith.select %248, %249, %250 : vector<8x8xi1>, vector<8x8xf32>
      %c0_191 = arith.constant 0 : index
      %c0_192 = arith.constant 0 : index
      %252 = vector.load %arg17[%c0_191, %c0_192] : memref<8x8xf32, #tpu.memory_space<vmem>>, vector<8x8xf32>
      tpu.vector_store %arg17[%c0_191, %c0_192], %251 {strides = array<i32>} : memref<8x8xf32, #tpu.memory_space<vmem>>, vector<8x8xf32>,
    } else {
    }
    %c0 = arith.constant 0 : index
    %c0_1 = arith.constant 0 : index
    %3 = vector.load %arg4[%c0, %c0_1] : memref<16x16xbf16, #tpu.memory_space<vmem>>, vector<16x16xbf16>
    %c0_2 = arith.constant 0 : index
    %c0_3 = arith.constant 0 : index
    %4 = vector.load %arg2[%c0_2, %c0_3] : memref<8x16xf32, #tpu.memory_space<vmem>>, vector<8x16xf32>
    %c0_4 = arith.constant 0 : index
    %c0_5 = arith.constant 0 : index
    %5 = vector.load %arg3[%c0_4, %c0_5] : memref<8x16xf32, #tpu.memory_space<vmem>>, vector<8x16xf32>
    %c0_6 = arith.constant 0 : index
    %c0_7 = arith.constant 0 : index
    %6 = vector.load %arg15[%c0_6, %c0_7] : memref<8x64xf32, #tpu.memory_space<vmem>>, vector<8x64xf32>
    %c0_8 = arith.constant 0 : index
    %c0_9 = arith.constant 0 : index
    %7 = vector.load %arg16[%c0_8, %c0_9] : memref<8x64xf32, #tpu.memory_space<vmem>>, vector<8x64xf32>
    %8 = arith.addf %6, %7 : vector<8x64xf32>
    %c0_10 = arith.constant 0 : index
    %c0_11 = arith.constant 0 : index
    %c0_12 = arith.constant 0 : index
    %9 = vector.load %arg5[%c0_10, %c0_11, %c0_12] : memref<1x1x64xf32, #tpu.memory_space<vmem>>, vector<1x1x64xf32>
    %10 = vector.shape_cast %9 : vector<1x1x64xf32> to vector<1x64xf32>
    %11 = arith.mulf %8, %8 : vector<8x64xf32>
    %cst = arith.constant dense<0.000000e+00> : vector<8xf32>
    %12 = vector.multi_reduction <add>, %11, %cst [1] : vector<8x64xf32> to vector<8xf32>
    %13 = vector.shape_cast %12 : vector<8xf32> to vector<8x1xf32>
    %cst_13 = arith.constant 6.400000e+01 : f32
    %14 = vector.broadcast %cst_13 : f32 to vector<8x1xf32>
    %15 = arith.divf %13, %14 : vector<8x1xf32>
    %cst_14 = arith.constant 9.99999997E-7 : f32
    %16 = vector.broadcast %cst_14 : f32 to vector<8x1xf32>
    %17 = arith.addf %15, %16 : vector<8x1xf32>
    %18 = math.rsqrt %17 : vector<8x1xf32>
    %19 = vector.broadcast %18 : vector<8x1xf32> to vector<8x64xf32>
    %20 = arith.mulf %8, %19 : vector<8x64xf32>
    %21 = vector.broadcast %10 : vector<1x64xf32> to vector<8x64xf32>
    %22 = arith.mulf %20, %21 : vector<8x64xf32>
    %23 = arith.truncf %22 : vector<8x64xf32> to vector<8x64xbf16>
    %c0_15 = arith.constant 0 : index
    %c0_16 = arith.constant 0 : index
    %c0_17 = arith.constant 0 : index
    %c0_18 = arith.constant 0 : index
    %24 = vector.load %arg7[%c0_15, %c0_16, %c0_17, %c0_18] : memref<1x8x64x16xbf16, #tpu.memory_space<vmem>>, vector<1x1x64x16xbf16>
    %25 = vector.shape_cast %24 : vector<1x1x64x16xbf16> to vector<64x16xbf16>
    %cst_19 = arith.constant dense<0.000000e+00> : vector<8x16xf32>
    %26 = tpu.matmul %23, %25, %cst_19 {dimension_numbers = #tpu.dot_dimension_numbers<[1], [0], [0], [1], [0, 0, 1, 1], [], []>} : vector<8x64xbf16>, vector<64x16xbf16>, vector<8x16xf32> -> vector<8x16xf32>
    %c0_20 = arith.constant 0 : index
    %c0_21 = arith.constant 0 : index
    %c0_22 = arith.constant 0 : index
    %c0_23 = arith.constant 0 : index
    %27 = vector.load %arg8[%c0_20, %c0_21, %c0_22, %c0_23] : memref<1x8x1x16xf32, #tpu.memory_space<vmem>>, vector<1x1x1x16xf32>
    %28 = vector.shape_cast %27 : vector<1x1x1x16xf32> to vector<1x16xf32>
    %29 = vector.broadcast %28 : vector<1x16xf32> to vector<8x16xf32>
    %30 = arith.addf %26, %29 : vector<8x16xf32>
    %31 = arith.mulf %30, %4 : vector<8x16xf32>
    %32 = arith.truncf %30 : vector<8x16xf32> to vector<8x16xbf16>
    %cst_24 = arith.constant dense<0.000000e+00> : vector<8x16xf32>
    %33 = tpu.matmul %32, %3, %cst_24 {dimension_numbers = #tpu.dot_dimension_numbers<[1], [0], [0], [1], [0, 0, 1, 1], [], []>} : vector<8x16xbf16>, vector<16x16xbf16>, vector<8x16xf32> -> vector<8x16xf32>
    %34 = arith.mulf %33, %5 : vector<8x16xf32>
    %35 = arith.addf %31, %34 : vector<8x16xf32>
    %cst_25 = arith.constant 2.500000e-01 : f32
    %36 = vector.broadcast %cst_25 : f32 to vector<8x16xf32>
    %37 = arith.mulf %35, %36 : vector<8x16xf32>
    %c0_26 = arith.constant 0 : index
    %c0_27 = arith.constant 0 : index
    %c0_28 = arith.constant 0 : index
    %38 = vector.load %arg18[%c0_26, %c0_27, %c0_28] : memref<4x8x16xf32, #tpu.memory_space<vmem>>, vector<1x8x16xf32>
    %39 = vector.shape_cast %38 : vector<1x8x16xf32> to vector<8x16xf32>
    %40 = vector.shape_cast %37 : vector<8x16xf32> to vector<1x8x16xf32>
    tpu.vector_store %arg18[%c0_26, %c0_27, %c0_28], %40 {strides = array<i32>} : memref<4x8x16xf32, #tpu.memory_space<vmem>>, vector<1x8x16xf32>,
    %c0_29 = arith.constant 0 : index
    %c1 = arith.constant 1 : index
    %c0_30 = arith.constant 0 : index
    %c0_31 = arith.constant 0 : index
    %41 = vector.load %arg7[%c0_29, %c1, %c0_30, %c0_31] : memref<1x8x64x16xbf16, #tpu.memory_space<vmem>>, vector<1x1x64x16xbf16>
    %42 = vector.shape_cast %41 : vector<1x1x64x16xbf16> to vector<64x16xbf16>
    %cst_32 = arith.constant dense<0.000000e+00> : vector<8x16xf32>
    %43 = tpu.matmul %23, %42, %cst_32 {dimension_numbers = #tpu.dot_dimension_numbers<[1], [0], [0], [1], [0, 0, 1, 1], [], []>} : vector<8x64xbf16>, vector<64x16xbf16>, vector<8x16xf32> -> vector<8x16xf32>
    %c0_33 = arith.constant 0 : index
    %c1_34 = arith.constant 1 : index
    %c0_35 = arith.constant 0 : index
    %c0_36 = arith.constant 0 : index
    %44 = vector.load %arg8[%c0_33, %c1_34, %c0_35, %c0_36] : memref<1x8x1x16xf32, #tpu.memory_space<vmem>>, vector<1x1x1x16xf32>
    %45 = vector.shape_cast %44 : vector<1x1x1x16xf32> to vector<1x16xf32>
    %46 = vector.broadcast %45 : vector<1x16xf32> to vector<8x16xf32>
    %47 = arith.addf %43, %46 : vector<8x16xf32>
    %48 = arith.mulf %47, %4 : vector<8x16xf32>
    %49 = arith.truncf %47 : vector<8x16xf32> to vector<8x16xbf16>
    %cst_37 = arith.constant dense<0.000000e+00> : vector<8x16xf32>
    %50 = tpu.matmul %49, %3, %cst_37 {dimension_numbers = #tpu.dot_dimension_numbers<[1], [0], [0], [1], [0, 0, 1, 1], [], []>} : vector<8x16xbf16>, vector<16x16xbf16>, vector<8x16xf32> -> vector<8x16xf32>
    %51 = arith.mulf %50, %5 : vector<8x16xf32>
    %52 = arith.addf %48, %51 : vector<8x16xf32>
    %cst_38 = arith.constant 2.500000e-01 : f32
    %53 = vector.broadcast %cst_38 : f32 to vector<8x16xf32>
    %54 = arith.mulf %52, %53 : vector<8x16xf32>
    %c1_39 = arith.constant 1 : index
    %c0_40 = arith.constant 0 : index
    %c0_41 = arith.constant 0 : index
    %55 = vector.load %arg18[%c1_39, %c0_40, %c0_41] : memref<4x8x16xf32, #tpu.memory_space<vmem>>, vector<1x8x16xf32>
    %56 = vector.shape_cast %55 : vector<1x8x16xf32> to vector<8x16xf32>
    %57 = vector.shape_cast %54 : vector<8x16xf32> to vector<1x8x16xf32>
    tpu.vector_store %arg18[%c1_39, %c0_40, %c0_41], %57 {strides = array<i32>} : memref<4x8x16xf32, #tpu.memory_space<vmem>>, vector<1x8x16xf32>,
    %c0_42 = arith.constant 0 : index
    %c2 = arith.constant 2 : index
    %c0_43 = arith.constant 0 : index
    %c0_44 = arith.constant 0 : index
    %58 = vector.load %arg7[%c0_42, %c2, %c0_43, %c0_44] : memref<1x8x64x16xbf16, #tpu.memory_space<vmem>>, vector<1x1x64x16xbf16>
    %59 = vector.shape_cast %58 : vector<1x1x64x16xbf16> to vector<64x16xbf16>
    %cst_45 = arith.constant dense<0.000000e+00> : vector<8x16xf32>
    %60 = tpu.matmul %23, %59, %cst_45 {dimension_numbers = #tpu.dot_dimension_numbers<[1], [0], [0], [1], [0, 0, 1, 1], [], []>} : vector<8x64xbf16>, vector<64x16xbf16>, vector<8x16xf32> -> vector<8x16xf32>
    %c0_46 = arith.constant 0 : index
    %c2_47 = arith.constant 2 : index
    %c0_48 = arith.constant 0 : index
    %c0_49 = arith.constant 0 : index
    %61 = vector.load %arg8[%c0_46, %c2_47, %c0_48, %c0_49] : memref<1x8x1x16xf32, #tpu.memory_space<vmem>>, vector<1x1x1x16xf32>
    %62 = vector.shape_cast %61 : vector<1x1x1x16xf32> to vector<1x16xf32>
    %63 = vector.broadcast %62 : vector<1x16xf32> to vector<8x16xf32>
    %64 = arith.addf %60, %63 : vector<8x16xf32>
    %65 = arith.mulf %64, %4 : vector<8x16xf32>
    %66 = arith.truncf %64 : vector<8x16xf32> to vector<8x16xbf16>
    %cst_50 = arith.constant dense<0.000000e+00> : vector<8x16xf32>
    %67 = tpu.matmul %66, %3, %cst_50 {dimension_numbers = #tpu.dot_dimension_numbers<[1], [0], [0], [1], [0, 0, 1, 1], [], []>} : vector<8x16xbf16>, vector<16x16xbf16>, vector<8x16xf32> -> vector<8x16xf32>
    %68 = arith.mulf %67, %5 : vector<8x16xf32>
    %69 = arith.addf %65, %68 : vector<8x16xf32>
    %cst_51 = arith.constant 2.500000e-01 : f32
    %70 = vector.broadcast %cst_51 : f32 to vector<8x16xf32>
    %71 = arith.mulf %69, %70 : vector<8x16xf32>
    %c2_52 = arith.constant 2 : index
    %c0_53 = arith.constant 0 : index
    %c0_54 = arith.constant 0 : index
    %72 = vector.load %arg18[%c2_52, %c0_53, %c0_54] : memref<4x8x16xf32, #tpu.memory_space<vmem>>, vector<1x8x16xf32>
    %73 = vector.shape_cast %72 : vector<1x8x16xf32> to vector<8x16xf32>
    %74 = vector.shape_cast %71 : vector<8x16xf32> to vector<1x8x16xf32>
    tpu.vector_store %arg18[%c2_52, %c0_53, %c0_54], %74 {strides = array<i32>} : memref<4x8x16xf32, #tpu.memory_space<vmem>>, vector<1x8x16xf32>,
    %c0_55 = arith.constant 0 : index
    %c3 = arith.constant 3 : index
    %c0_56 = arith.constant 0 : index
    %c0_57 = arith.constant 0 : index
    %75 = vector.load %arg7[%c0_55, %c3, %c0_56, %c0_57] : memref<1x8x64x16xbf16, #tpu.memory_space<vmem>>, vector<1x1x64x16xbf16>
    %76 = vector.shape_cast %75 : vector<1x1x64x16xbf16> to vector<64x16xbf16>
    %cst_58 = arith.constant dense<0.000000e+00> : vector<8x16xf32>
    %77 = tpu.matmul %23, %76, %cst_58 {dimension_numbers = #tpu.dot_dimension_numbers<[1], [0], [0], [1], [0, 0, 1, 1], [], []>} : vector<8x64xbf16>, vector<64x16xbf16>, vector<8x16xf32> -> vector<8x16xf32>
    %c0_59 = arith.constant 0 : index
    %c3_60 = arith.constant 3 : index
    %c0_61 = arith.constant 0 : index
    %c0_62 = arith.constant 0 : index
    %78 = vector.load %arg8[%c0_59, %c3_60, %c0_61, %c0_62] : memref<1x8x1x16xf32, #tpu.memory_space<vmem>>, vector<1x1x1x16xf32>
    %79 = vector.shape_cast %78 : vector<1x1x1x16xf32> to vector<1x16xf32>
    %80 = vector.broadcast %79 : vector<1x16xf32> to vector<8x16xf32>
    %81 = arith.addf %77, %80 : vector<8x16xf32>
    %82 = arith.mulf %81, %4 : vector<8x16xf32>
    %83 = arith.truncf %81 : vector<8x16xf32> to vector<8x16xbf16>
    %cst_63 = arith.constant dense<0.000000e+00> : vector<8x16xf32>
    %84 = tpu.matmul %83, %3, %cst_63 {dimension_numbers = #tpu.dot_dimension_numbers<[1], [0], [0], [1], [0, 0, 1, 1], [], []>} : vector<8x16xbf16>, vector<16x16xbf16>, vector<8x16xf32> -> vector<8x16xf32>
    %85 = arith.mulf %84, %5 : vector<8x16xf32>
    %86 = arith.addf %82, %85 : vector<8x16xf32>
    %cst_64 = arith.constant 2.500000e-01 : f32
    %87 = vector.broadcast %cst_64 : f32 to vector<8x16xf32>
    %88 = arith.mulf %86, %87 : vector<8x16xf32>
    %c3_65 = arith.constant 3 : index
    %c0_66 = arith.constant 0 : index
    %c0_67 = arith.constant 0 : index
    %89 = vector.load %arg18[%c3_65, %c0_66, %c0_67] : memref<4x8x16xf32, #tpu.memory_space<vmem>>, vector<1x8x16xf32>
    %90 = vector.shape_cast %89 : vector<1x8x16xf32> to vector<8x16xf32>
    %91 = vector.shape_cast %88 : vector<8x16xf32> to vector<1x8x16xf32>
    tpu.vector_store %arg18[%c3_65, %c0_66, %c0_67], %91 {strides = array<i32>} : memref<4x8x16xf32, #tpu.memory_space<vmem>>, vector<1x8x16xf32>,
    %c0_68 = arith.constant 0 : index
    %c4 = arith.constant 4 : index
    %c0_69 = arith.constant 0 : index
    %c0_70 = arith.constant 0 : index
    %92 = vector.load %arg7[%c0_68, %c4, %c0_69, %c0_70] : memref<1x8x64x16xbf16, #tpu.memory_space<vmem>>, vector<1x1x64x16xbf16>
    %93 = vector.shape_cast %92 : vector<1x1x64x16xbf16> to vector<64x16xbf16>
    %cst_71 = arith.constant dense<0.000000e+00> : vector<8x16xf32>
    %94 = tpu.matmul %23, %93, %cst_71 {dimension_numbers = #tpu.dot_dimension_numbers<[1], [0], [0], [1], [0, 0, 1, 1], [], []>} : vector<8x64xbf16>, vector<64x16xbf16>, vector<8x16xf32> -> vector<8x16xf32>
    %c0_72 = arith.constant 0 : index
    %c4_73 = arith.constant 4 : index
    %c0_74 = arith.constant 0 : index
    %c0_75 = arith.constant 0 : index
    %95 = vector.load %arg8[%c0_72, %c4_73, %c0_74, %c0_75] : memref<1x8x1x16xf32, #tpu.memory_space<vmem>>, vector<1x1x1x16xf32>
    %96 = vector.shape_cast %95 : vector<1x1x1x16xf32> to vector<1x16xf32>
    %97 = vector.broadcast %96 : vector<1x16xf32> to vector<8x16xf32>
    %98 = arith.addf %94, %97 : vector<8x16xf32>
    %c0_76 = arith.constant 0 : index
    %c6 = arith.constant 6 : index
    %c0_77 = arith.constant 0 : index
    %c0_78 = arith.constant 0 : index
    %99 = vector.load %arg7[%c0_76, %c6, %c0_77, %c0_78] : memref<1x8x64x16xbf16, #tpu.memory_space<vmem>>, vector<1x1x64x16xbf16>
    %100 = vector.shape_cast %99 : vector<1x1x64x16xbf16> to vector<64x16xbf16>
    %cst_79 = arith.constant dense<0.000000e+00> : vector<8x16xf32>
    %101 = tpu.matmul %23, %100, %cst_79 {dimension_numbers = #tpu.dot_dimension_numbers<[1], [0], [0], [1], [0, 0, 1, 1], [], []>} : vector<8x64xbf16>, vector<64x16xbf16>, vector<8x16xf32> -> vector<8x16xf32>
    %c0_80 = arith.constant 0 : index
    %c6_81 = arith.constant 6 : index
    %c0_82 = arith.constant 0 : index
    %c0_83 = arith.constant 0 : index
    %102 = vector.load %arg8[%c0_80, %c6_81, %c0_82, %c0_83] : memref<1x8x1x16xf32, #tpu.memory_space<vmem>>, vector<1x1x1x16xf32>
    %103 = vector.shape_cast %102 : vector<1x1x1x16xf32> to vector<1x16xf32>
    %104 = vector.broadcast %103 : vector<1x16xf32> to vector<8x16xf32>
    %105 = arith.addf %101, %104 : vector<8x16xf32>
    %106 = arith.mulf %98, %4 : vector<8x16xf32>
    %107 = arith.truncf %98 : vector<8x16xf32> to vector<8x16xbf16>
    %cst_84 = arith.constant dense<0.000000e+00> : vector<8x16xf32>
    %108 = tpu.matmul %107, %3, %cst_84 {dimension_numbers = #tpu.dot_dimension_numbers<[1], [0], [0], [1], [0, 0, 1, 1], [], []>} : vector<8x16xbf16>, vector<16x16xbf16>, vector<8x16xf32> -> vector<8x16xf32>
    %109 = arith.mulf %108, %5 : vector<8x16xf32>
    %110 = arith.addf %106, %109 : vector<8x16xf32>
    %c0_85 = arith.constant 0 : index
    %c0_86 = arith.constant 0 : index
    %c0_87 = arith.constant 0 : index
    %111 = vector.load %arg19[%c0_85, %c0_86, %c0_87] : memref<4x8x16xf32, #tpu.memory_space<vmem>>, vector<1x8x16xf32>
    %112 = vector.shape_cast %111 : vector<1x8x16xf32> to vector<8x16xf32>
    %113 = vector.shape_cast %110 : vector<8x16xf32> to vector<1x8x16xf32>
    tpu.vector_store %arg19[%c0_85, %c0_86, %c0_87], %113 {strides = array<i32>} : memref<4x8x16xf32, #tpu.memory_space<vmem>>, vector<1x8x16xf32>,
    %c0_88 = arith.constant 0 : index
    %c0_89 = arith.constant 0 : index
    %c0_90 = arith.constant 0 : index
    %114 = vector.load %arg20[%c0_88, %c0_89, %c0_90] : memref<4x8x16xf32, #tpu.memory_space<vmem>>, vector<1x8x16xf32>
    %115 = vector.shape_cast %114 : vector<1x8x16xf32> to vector<8x16xf32>
    %116 = vector.shape_cast %105 : vector<8x16xf32> to vector<1x8x16xf32>
    tpu.vector_store %arg20[%c0_88, %c0_89, %c0_90], %116 {strides = array<i32>} : memref<4x8x16xf32, #tpu.memory_space<vmem>>, vector<1x8x16xf32>,
    %c1_91 = arith.constant 1 : index
    %c0_92 = arith.constant 0 : index
    %c0_93 = arith.constant 0 : index
    %117 = vector.load %arg19[%c1_91, %c0_92, %c0_93] : memref<4x8x16xf32, #tpu.memory_space<vmem>>, vector<1x8x16xf32>
    %118 = vector.shape_cast %117 : vector<1x8x16xf32> to vector<8x16xf32>
    %119 = vector.shape_cast %110 : vector<8x16xf32> to vector<1x8x16xf32>
    tpu.vector_store %arg19[%c1_91, %c0_92, %c0_93], %119 {strides = array<i32>} : memref<4x8x16xf32, #tpu.memory_space<vmem>>, vector<1x8x16xf32>,
    %c1_94 = arith.constant 1 : index
    %c0_95 = arith.constant 0 : index
    %c0_96 = arith.constant 0 : index
    %120 = vector.load %arg20[%c1_94, %c0_95, %c0_96] : memref<4x8x16xf32, #tpu.memory_space<vmem>>, vector<1x8x16xf32>
    %121 = vector.shape_cast %120 : vector<1x8x16xf32> to vector<8x16xf32>
    %122 = vector.shape_cast %105 : vector<8x16xf32> to vector<1x8x16xf32>
    tpu.vector_store %arg20[%c1_94, %c0_95, %c0_96], %122 {strides = array<i32>} : memref<4x8x16xf32, #tpu.memory_space<vmem>>, vector<1x8x16xf32>,
    %c0_97 = arith.constant 0 : index
    %c5 = arith.constant 5 : index
    %c0_98 = arith.constant 0 : index
    %c0_99 = arith.constant 0 : index
    %123 = vector.load %arg7[%c0_97, %c5, %c0_98, %c0_99] : memref<1x8x64x16xbf16, #tpu.memory_space<vmem>>, vector<1x1x64x16xbf16>
    %124 = vector.shape_cast %123 : vector<1x1x64x16xbf16> to vector<64x16xbf16>
    %cst_100 = arith.constant dense<0.000000e+00> : vector<8x16xf32>
    %125 = tpu.matmul %23, %124, %cst_100 {dimension_numbers = #tpu.dot_dimension_numbers<[1], [0], [0], [1], [0, 0, 1, 1], [], []>} : vector<8x64xbf16>, vector<64x16xbf16>, vector<8x16xf32> -> vector<8x16xf32>
    %c0_101 = arith.constant 0 : index
    %c5_102 = arith.constant 5 : index
    %c0_103 = arith.constant 0 : index
    %c0_104 = arith.constant 0 : index
    %126 = vector.load %arg8[%c0_101, %c5_102, %c0_103, %c0_104] : memref<1x8x1x16xf32, #tpu.memory_space<vmem>>, vector<1x1x1x16xf32>
    %127 = vector.shape_cast %126 : vector<1x1x1x16xf32> to vector<1x16xf32>
    %128 = vector.broadcast %127 : vector<1x16xf32> to vector<8x16xf32>
    %129 = arith.addf %125, %128 : vector<8x16xf32>
    %c0_105 = arith.constant 0 : index
    %c7 = arith.constant 7 : index
    %c0_106 = arith.constant 0 : index
    %c0_107 = arith.constant 0 : index
    %130 = vector.load %arg7[%c0_105, %c7, %c0_106, %c0_107] : memref<1x8x64x16xbf16, #tpu.memory_space<vmem>>, vector<1x1x64x16xbf16>
    %131 = vector.shape_cast %130 : vector<1x1x64x16xbf16> to vector<64x16xbf16>
    %cst_108 = arith.constant dense<0.000000e+00> : vector<8x16xf32>
    %132 = tpu.matmul %23, %131, %cst_108 {dimension_numbers = #tpu.dot_dimension_numbers<[1], [0], [0], [1], [0, 0, 1, 1], [], []>} : vector<8x64xbf16>, vector<64x16xbf16>, vector<8x16xf32> -> vector<8x16xf32>
    %c0_109 = arith.constant 0 : index
    %c7_110 = arith.constant 7 : index
    %c0_111 = arith.constant 0 : index
    %c0_112 = arith.constant 0 : index
    %133 = vector.load %arg8[%c0_109, %c7_110, %c0_111, %c0_112] : memref<1x8x1x16xf32, #tpu.memory_space<vmem>>, vector<1x1x1x16xf32>
    %134 = vector.shape_cast %133 : vector<1x1x1x16xf32> to vector<1x16xf32>
    %135 = vector.broadcast %134 : vector<1x16xf32> to vector<8x16xf32>
    %136 = arith.addf %132, %135 : vector<8x16xf32>
    %137 = arith.mulf %129, %4 : vector<8x16xf32>
    %138 = arith.truncf %129 : vector<8x16xf32> to vector<8x16xbf16>
    %cst_113 = arith.constant dense<0.000000e+00> : vector<8x16xf32>
    %139 = tpu.matmul %138, %3, %cst_113 {dimension_numbers = #tpu.dot_dimension_numbers<[1], [0], [0], [1], [0, 0, 1, 1], [], []>} : vector<8x16xbf16>, vector<16x16xbf16>, vector<8x16xf32> -> vector<8x16xf32>
    %140 = arith.mulf %139, %5 : vector<8x16xf32>
    %141 = arith.addf %137, %140 : vector<8x16xf32>
    %c2_114 = arith.constant 2 : index
    %c0_115 = arith.constant 0 : index
    %c0_116 = arith.constant 0 : index
    %142 = vector.load %arg19[%c2_114, %c0_115, %c0_116] : memref<4x8x16xf32, #tpu.memory_space<vmem>>, vector<1x8x16xf32>
    %143 = vector.shape_cast %142 : vector<1x8x16xf32> to vector<8x16xf32>
    %144 = vector.shape_cast %141 : vector<8x16xf32> to vector<1x8x16xf32>
    tpu.vector_store %arg19[%c2_114, %c0_115, %c0_116], %144 {strides = array<i32>} : memref<4x8x16xf32, #tpu.memory_space<vmem>>, vector<1x8x16xf32>,
    %c2_117 = arith.constant 2 : index
    %c0_118 = arith.constant 0 : index
    %c0_119 = arith.constant 0 : index
    %145 = vector.load %arg20[%c2_117, %c0_118, %c0_119] : memref<4x8x16xf32, #tpu.memory_space<vmem>>, vector<1x8x16xf32>
    %146 = vector.shape_cast %145 : vector<1x8x16xf32> to vector<8x16xf32>
    %147 = vector.shape_cast %136 : vector<8x16xf32> to vector<1x8x16xf32>
    tpu.vector_store %arg20[%c2_117, %c0_118, %c0_119], %147 {strides = array<i32>} : memref<4x8x16xf32, #tpu.memory_space<vmem>>, vector<1x8x16xf32>,
    %c3_120 = arith.constant 3 : index
    %c0_121 = arith.constant 0 : index
    %c0_122 = arith.constant 0 : index
    %148 = vector.load %arg19[%c3_120, %c0_121, %c0_122] : memref<4x8x16xf32, #tpu.memory_space<vmem>>, vector<1x8x16xf32>
    %149 = vector.shape_cast %148 : vector<1x8x16xf32> to vector<8x16xf32>
    %150 = vector.shape_cast %141 : vector<8x16xf32> to vector<1x8x16xf32>
    tpu.vector_store %arg19[%c3_120, %c0_121, %c0_122], %150 {strides = array<i32>} : memref<4x8x16xf32, #tpu.memory_space<vmem>>, vector<1x8x16xf32>,
    %c3_123 = arith.constant 3 : index
    %c0_124 = arith.constant 0 : index
    %c0_125 = arith.constant 0 : index
    %151 = vector.load %arg20[%c3_123, %c0_124, %c0_125] : memref<4x8x16xf32, #tpu.memory_space<vmem>>, vector<1x8x16xf32>
    %152 = vector.shape_cast %151 : vector<1x8x16xf32> to vector<8x16xf32>
    %153 = vector.shape_cast %136 : vector<8x16xf32> to vector<1x8x16xf32>
    tpu.vector_store %arg20[%c3_123, %c0_124, %c0_125], %153 {strides = array<i32>} : memref<4x8x16xf32, #tpu.memory_space<vmem>>, vector<1x8x16xf32>,
    %c0_126 = arith.constant 0 : index
    %c0_127 = arith.constant 0 : index
    %c0_128 = arith.constant 0 : index
    %154 = vector.load %arg18[%c0_126, %c0_127, %c0_128] : memref<4x8x16xf32, #tpu.memory_space<vmem>>, vector<4x8x16xf32>
    %155 = arith.truncf %154 : vector<4x8x16xf32> to vector<4x8x16xbf16>
    %c0_129 = arith.constant 0 : index
    %c0_130 = arith.constant 0 : index
    %c0_131 = arith.constant 0 : index
    %156 = vector.load %arg19[%c0_129, %c0_130, %c0_131] : memref<4x8x16xf32, #tpu.memory_space<vmem>>, vector<4x8x16xf32>
    %157 = arith.truncf %156 : vector<4x8x16xf32> to vector<4x8x16xbf16>
    %c0_132 = arith.constant 0 : index
    %c0_133 = arith.constant 0 : index
    %c0_134 = arith.constant 0 : index
    %158 = vector.load %arg20[%c0_132, %c0_133, %c0_134] : memref<4x8x16xf32, #tpu.memory_space<vmem>>, vector<4x8x16xf32>
    %159 = arith.truncf %158 : vector<4x8x16xf32> to vector<4x8x16xbf16>
    "tpu.trace_start"() <{level = 10 : i32, message = "hqd,hkd->hqk"}> : () -> ()
    %cst_135 = arith.constant dense<0.000000e+00> : vector<4x8x8xf32>
    %160 = tpu.matmul %155, %157, %cst_135 {dimension_numbers = #tpu.dot_dimension_numbers<[2], [2], [1], [1], [0, 0, 0, 1, 1, 1], [0], [0]>} : vector<4x8x16xbf16>, vector<4x8x16xbf16>, vector<4x8x8xf32> -> vector<4x8x8xf32>
    "tpu.trace_stop"() : () -> ()
    %c0_136 = arith.constant 0 : index
    %c0_137 = arith.constant 0 : index
    %161 = vector.load %arg17[%c0_136, %c0_137] : memref<8x8xf32, #tpu.memory_space<vmem>>, vector<8x8xf32>
    %162 = vector.shape_cast %161 : vector<8x8xf32> to vector<1x8x8xf32>
    %163 = vector.broadcast %162 : vector<1x8x8xf32> to vector<4x8x8xf32>
    %164 = arith.addf %160, %163 : vector<4x8x8xf32>
    %cst_138 = arith.constant dense<0xFF800000> : vector<4x8xf32>
    %165 = vector.multi_reduction <maximumf>, %164, %cst_138 [2] : vector<4x8x8xf32> to vector<4x8xf32>
    %166 = vector.shape_cast %165 : vector<4x8xf32> to vector<4x8x1xf32>
    %167 = vector.broadcast %166 : vector<4x8x1xf32> to vector<4x8x8xf32>
    %168 = arith.subf %164, %167 : vector<4x8x8xf32>
    %169 = math.exp %168 : vector<4x8x8xf32>
    %cst_139 = arith.constant dense<0.000000e+00> : vector<4x8xf32>
    %170 = vector.multi_reduction <add>, %169, %cst_139 [2] : vector<4x8x8xf32> to vector<4x8xf32>
    %171 = vector.shape_cast %170 : vector<4x8xf32> to vector<4x8x1xf32>
    %172 = tpu.reciprocal %171 {approx = true} : vector<4x8x1xf32> -> vector<4x8x1xf32>
    %173 = vector.broadcast %172 : vector<4x8x1xf32> to vector<4x8x8xf32>
    %174 = arith.mulf %169, %173 : vector<4x8x8xf32>
    %175 = arith.truncf %174 : vector<4x8x8xf32> to vector<4x8x8xbf16>
    "tpu.trace_start"() <{level = 10 : i32, message = "hqk,hkd->hqd"}> : () -> ()
    %cst_140 = arith.constant dense<0.000000e+00> : vector<4x8x16xf32>
    %176 = tpu.matmul %175, %159, %cst_140 {dimension_numbers = #tpu.dot_dimension_numbers<[2], [1], [1], [2], [0, 0, 0, 1, 1, 2], [0], [0]>} : vector<4x8x8xbf16>, vector<4x8x16xbf16>, vector<4x8x16xf32> -> vector<4x8x16xf32>
    "tpu.trace_stop"() : () -> ()
    %177 = vector.extract_strided_slice %176 {offsets = [0, 0, 0], sizes = [1, 8, 16], strides = [1, 1, 1]} : vector<4x8x16xf32> to vector<1x8x16xf32>
    %178 = vector.shape_cast %177 : vector<1x8x16xf32> to vector<8x16xf32>
    %c0_141 = arith.constant 0 : index
    %c0_142 = arith.constant 0 : index
    %c0_143 = arith.constant 0 : index
    %c0_144 = arith.constant 0 : index
    %179 = vector.load %arg9[%c0_141, %c0_142, %c0_143, %c0_144] : memref<1x4x16x64xbf16, #tpu.memory_space<vmem>>, vector<1x1x16x64xbf16>
    %180 = vector.shape_cast %179 : vector<1x1x16x64xbf16> to vector<16x64xbf16>
    %181 = arith.truncf %178 : vector<8x16xf32> to vector<8x16xbf16>
    %cst_145 = arith.constant dense<0.000000e+00> : vector<8x64xf32>
    %182 = tpu.matmul %181, %180, %cst_145 {dimension_numbers = #tpu.dot_dimension_numbers<[1], [0], [0], [1], [0, 0, 1, 1], [], []>} : vector<8x16xbf16>, vector<16x64xbf16>, vector<8x64xf32> -> vector<8x64xf32>
    %183 = vector.extract_strided_slice %176 {offsets = [1, 0, 0], sizes = [1, 8, 16], strides = [1, 1, 1]} : vector<4x8x16xf32> to vector<1x8x16xf32>
    %184 = vector.shape_cast %183 : vector<1x8x16xf32> to vector<8x16xf32>
    %c0_146 = arith.constant 0 : index
    %c1_147 = arith.constant 1 : index
    %c0_148 = arith.constant 0 : index
    %c0_149 = arith.constant 0 : index
    %185 = vector.load %arg9[%c0_146, %c1_147, %c0_148, %c0_149] : memref<1x4x16x64xbf16, #tpu.memory_space<vmem>>, vector<1x1x16x64xbf16>
    %186 = vector.shape_cast %185 : vector<1x1x16x64xbf16> to vector<16x64xbf16>
    %187 = arith.truncf %184 : vector<8x16xf32> to vector<8x16xbf16>
    %cst_150 = arith.constant dense<0.000000e+00> : vector<8x64xf32>
    %188 = tpu.matmul %187, %186, %cst_150 {dimension_numbers = #tpu.dot_dimension_numbers<[1], [0], [0], [1], [0, 0, 1, 1], [], []>} : vector<8x16xbf16>, vector<16x64xbf16>, vector<8x64xf32> -> vector<8x64xf32>
    %189 = arith.addf %182, %188 : vector<8x64xf32>
    %190 = vector.extract_strided_slice %176 {offsets = [2, 0, 0], sizes = [1, 8, 16], strides = [1, 1, 1]} : vector<4x8x16xf32> to vector<1x8x16xf32>
    %191 = vector.shape_cast %190 : vector<1x8x16xf32> to vector<8x16xf32>
    %c0_151 = arith.constant 0 : index
    %c2_152 = arith.constant 2 : index
    %c0_153 = arith.constant 0 : index
    %c0_154 = arith.constant 0 : index
    %192 = vector.load %arg9[%c0_151, %c2_152, %c0_153, %c0_154] : memref<1x4x16x64xbf16, #tpu.memory_space<vmem>>, vector<1x1x16x64xbf16>
    %193 = vector.shape_cast %192 : vector<1x1x16x64xbf16> to vector<16x64xbf16>
    %194 = arith.truncf %191 : vector<8x16xf32> to vector<8x16xbf16>
    %cst_155 = arith.constant dense<0.000000e+00> : vector<8x64xf32>
    %195 = tpu.matmul %194, %193, %cst_155 {dimension_numbers = #tpu.dot_dimension_numbers<[1], [0], [0], [1], [0, 0, 1, 1], [], []>} : vector<8x16xbf16>, vector<16x64xbf16>, vector<8x64xf32> -> vector<8x64xf32>
    %196 = arith.addf %189, %195 : vector<8x64xf32>
    %197 = vector.extract_strided_slice %176 {offsets = [3, 0, 0], sizes = [1, 8, 16], strides = [1, 1, 1]} : vector<4x8x16xf32> to vector<1x8x16xf32>
    %198 = vector.shape_cast %197 : vector<1x8x16xf32> to vector<8x16xf32>
    %c0_156 = arith.constant 0 : index
    %c3_157 = arith.constant 3 : index
    %c0_158 = arith.constant 0 : index
    %c0_159 = arith.constant 0 : index
    %199 = vector.load %arg9[%c0_156, %c3_157, %c0_158, %c0_159] : memref<1x4x16x64xbf16, #tpu.memory_space<vmem>>, vector<1x1x16x64xbf16>
    %200 = vector.shape_cast %199 : vector<1x1x16x64xbf16> to vector<16x64xbf16>
    %201 = arith.truncf %198 : vector<8x16xf32> to vector<8x16xbf16>
    %cst_160 = arith.constant dense<0.000000e+00> : vector<8x64xf32>
    %202 = tpu.matmul %201, %200, %cst_160 {dimension_numbers = #tpu.dot_dimension_numbers<[1], [0], [0], [1], [0, 0, 1, 1], [], []>} : vector<8x16xbf16>, vector<16x64xbf16>, vector<8x64xf32> -> vector<8x64xf32>
    %203 = arith.addf %196, %202 : vector<8x64xf32>
    %204 = arith.addf %203, %8 : vector<8x64xf32>
    %c0_161 = arith.constant 0 : index
    %c0_162 = arith.constant 0 : index
    %c0_163 = arith.constant 0 : index
    %205 = vector.load %arg6[%c0_161, %c0_162, %c0_163] : memref<1x1x64xf32, #tpu.memory_space<vmem>>, vector<1x1x64xf32>
    %206 = vector.shape_cast %205 : vector<1x1x64xf32> to vector<1x64xf32>
    %207 = arith.mulf %204, %204 : vector<8x64xf32>
    %cst_164 = arith.constant dense<0.000000e+00> : vector<8xf32>
    %208 = vector.multi_reduction <add>, %207, %cst_164 [1] : vector<8x64xf32> to vector<8xf32>
    %209 = vector.shape_cast %208 : vector<8xf32> to vector<8x1xf32>
    %cst_165 = arith.constant 6.400000e+01 : f32
    %210 = vector.broadcast %cst_165 : f32 to vector<8x1xf32>
    %211 = arith.divf %209, %210 : vector<8x1xf32>
    %cst_166 = arith.constant 9.99999997E-7 : f32
    %212 = vector.broadcast %cst_166 : f32 to vector<8x1xf32>
    %213 = arith.addf %211, %212 : vector<8x1xf32>
    %214 = math.rsqrt %213 : vector<8x1xf32>
    %215 = vector.broadcast %214 : vector<8x1xf32> to vector<8x64xf32>
    %216 = arith.mulf %204, %215 : vector<8x64xf32>
    %217 = vector.broadcast %206 : vector<1x64xf32> to vector<8x64xf32>
    %218 = arith.mulf %216, %217 : vector<8x64xf32>
    %219 = arith.truncf %218 : vector<8x64xf32> to vector<8x64xbf16>
    %c0_167 = arith.constant 0 : index
    %c0_168 = arith.constant 0 : index
    %c0_169 = arith.constant 0 : index
    %220 = vector.load %arg10[%c0_167, %c0_168, %c0_169] : memref<1x64x256xbf16, #tpu.memory_space<vmem>>, vector<1x64x256xbf16>
    %221 = vector.shape_cast %220 : vector<1x64x256xbf16> to vector<64x256xbf16>
    %cst_170 = arith.constant dense<0.000000e+00> : vector<8x256xf32>
    %222 = tpu.matmul %219, %221, %cst_170 {dimension_numbers = #tpu.dot_dimension_numbers<[1], [0], [0], [1], [0, 0, 1, 1], [], []>} : vector<8x64xbf16>, vector<64x256xbf16>, vector<8x256xf32> -> vector<8x256xf32>
    %223 = vector.extract_strided_slice %222 {offsets = [0, 0], sizes = [8, 128], strides = [1, 1]} : vector<8x256xf32> to vector<8x128xf32>
    %224 = vector.extract_strided_slice %222 {offsets = [0, 128], sizes = [8, 128], strides = [1, 1]} : vector<8x256xf32> to vector<8x128xf32>
    %cst_171 = arith.constant 0.000000e+00 : f32
    %225 = vector.broadcast %cst_171 : f32 to vector<8x128xf32>
    %226 = arith.subf %225, %223 : vector<8x128xf32>
    %227 = math.exp %226 : vector<8x128xf32>
    %cst_172 = arith.constant 1.000000e+00 : f32
    %228 = vector.broadcast %cst_172 : f32 to vector<8x128xf32>
    %229 = arith.addf %228, %227 : vector<8x128xf32>
    %230 = tpu.reciprocal %229 {approx = true} : vector<8x128xf32> -> vector<8x128xf32>
    %231 = arith.mulf %223, %230 : vector<8x128xf32>
    %232 = arith.mulf %231, %224 : vector<8x128xf32>
    %c0_173 = arith.constant 0 : index
    %c0_174 = arith.constant 0 : index
    %c0_175 = arith.constant 0 : index
    %233 = vector.load %arg11[%c0_173, %c0_174, %c0_175] : memref<1x128x64xbf16, #tpu.memory_space<vmem>>, vector<1x128x64xbf16>
    %234 = vector.shape_cast %233 : vector<1x128x64xbf16> to vector<128x64xbf16>
    %235 = arith.truncf %232 : vector<8x128xf32> to vector<8x128xbf16>
    %cst_176 = arith.constant dense<0.000000e+00> : vector<8x64xf32>
    %236 = tpu.matmul %235, %234, %cst_176 {dimension_numbers = #tpu.dot_dimension_numbers<[1], [0], [0], [1], [0, 0, 1, 1], [], []>} : vector<8x128xbf16>, vector<128x64xbf16>, vector<8x64xf32> -> vector<8x64xf32>
    %c0_177 = arith.constant 0 : index
    %c0_178 = arith.constant 0 : index
    %237 = vector.load %arg15[%c0_177, %c0_178] : memref<8x64xf32, #tpu.memory_space<vmem>>, vector<8x64xf32>
    tpu.vector_store %arg15[%c0_177, %c0_178], %236 {strides = array<i32>} : memref<8x64xf32, #tpu.memory_space<vmem>>, vector<8x64xf32>,
    %c0_179 = arith.constant 0 : index
    %c0_180 = arith.constant 0 : index
    %238 = vector.load %arg16[%c0_179, %c0_180] : memref<8x64xf32, #tpu.memory_space<vmem>>, vector<8x64xf32>
    tpu.vector_store %arg16[%c0_179, %c0_180], %204 {strides = array<i32>} : memref<8x64xf32, #tpu.memory_space<vmem>>, vector<8x64xf32>,
    %c1_i32 = arith.constant 1 : i32
    %239 = arith.cmpi eq, %arg0, %c1_i32 : i32
    %240 = arith.extui %239 : i1 to i32
    %c0_i32_181 = arith.constant 0 : i32
    %241 = arith.cmpi ne, %240, %c0_i32_181 : i32
    scf.if %241 {
      %242 = arith.addf %236, %204 : vector<8x64xf32>
      %c0_182 = arith.constant 0 : index
      %c0_183 = arith.constant 0 : index
      %243 = vector.load %arg12[%c0_182, %c0_183] : memref<1x64xf32, #tpu.memory_space<vmem>>, vector<1x64xf32>
      %244 = arith.mulf %242, %242 : vector<8x64xf32>
      %cst_184 = arith.constant dense<0.000000e+00> : vector<8xf32>
      %245 = vector.multi_reduction <add>, %244, %cst_184 [1] : vector<8x64xf32> to vector<8xf32>
      %246 = vector.shape_cast %245 : vector<8xf32> to vector<8x1xf32>
      %cst_185 = arith.constant 6.400000e+01 : f32
      %247 = vector.broadcast %cst_185 : f32 to vector<8x1xf32>
      %248 = arith.divf %246, %247 : vector<8x1xf32>
      %cst_186 = arith.constant 9.99999997E-7 : f32
      %249 = vector.broadcast %cst_186 : f32 to vector<8x1xf32>
      %250 = arith.addf %248, %249 : vector<8x1xf32>
      %251 = math.rsqrt %250 : vector<8x1xf32>
      %252 = vector.broadcast %251 : vector<8x1xf32> to vector<8x64xf32>
      %253 = arith.mulf %242, %252 : vector<8x64xf32>
      %254 = vector.broadcast %243 : vector<1x64xf32> to vector<8x64xf32>
      %255 = arith.mulf %253, %254 : vector<8x64xf32>
      %c0_187 = arith.constant 0 : index
      %c0_188 = arith.constant 0 : index
      %256 = vector.load %arg13[%c0_187, %c0_188] : memref<64x256xbf16, #tpu.memory_space<vmem>>, vector<64x256xbf16>
      %257 = arith.truncf %255 : vector<8x64xf32> to vector<8x64xbf16>
      %cst_189 = arith.constant dense<0.000000e+00> : vector<8x256xf32>
      %258 = tpu.matmul %257, %256, %cst_189 {dimension_numbers = #tpu.dot_dimension_numbers<[1], [0], [0], [1], [0, 0, 1, 1], [], []>} : vector<8x64xbf16>, vector<64x256xbf16>, vector<8x256xf32> -> vector<8x256xf32>
      %c0_190 = arith.constant 0 : index
      %c0_191 = arith.constant 0 : index
      %259 = vector.load %arg14[%c0_190, %c0_191] : memref<8x256xf32, #tpu.memory_space<vmem>>, vector<8x256xf32>
      tpu.vector_store %arg14[%c0_190, %c0_191], %258 {strides = array<i32>} : memref<8x256xf32, #tpu.memory_space<vmem>>, vector<8x256xf32>,
    } else {
    }
    return
  }
  func.func @transform_0(%arg0: i32) -> (i32, i32) {
    %c0_i32 = arith.constant 0 : i32
    %c0_i32_0 = arith.constant 0 : i32
    %c0_i32_1 = arith.constant 0 : i32
    return %c0_i32, %c0_i32_0 : i32, i32
  }
  func.func @transform_1(%arg0: i32) -> (i32, i32) {
    %c0_i32 = arith.constant 0 : i32
    %c0_i32_0 = arith.constant 0 : i32
    %c0_i32_1 = arith.constant 0 : i32
    return %c0_i32, %c0_i32_0 : i32, i32
  }
  func.func @transform_2(%arg0: i32) -> (i32, i32) {
    %c0_i32 = arith.constant 0 : i32
    %c0_i32_0 = arith.constant 0 : i32
    %c0_i32_1 = arith.constant 0 : i32
    return %c0_i32, %c0_i32_0 : i32, i32
  }
  func.func @transform_3(%arg0: i32) -> (i32, i32) {
    %c0_i32 = arith.constant 0 : i32
    %c0_i32_0 = arith.constant 0 : i32
    %c0_i32_1 = arith.constant 0 : i32
    return %c0_i32, %c0_i32_0 : i32, i32
  }
  func.func @transform_4(%arg0: i32) -> (i32, i32, i32) {
    %c0_i32 = arith.constant 0 : i32
    %c0_i32_0 = arith.constant 0 : i32
    %c0_i32_1 = arith.constant 0 : i32
    return %arg0, %c0_i32, %c0_i32_0 : i32, i32, i32
  }
  func.func @transform_5(%arg0: i32) -> (i32, i32, i32) {
    %c0_i32 = arith.constant 0 : i32
    %c0_i32_0 = arith.constant 0 : i32
    %c0_i32_1 = arith.constant 0 : i32
    return %arg0, %c0_i32, %c0_i32_0 : i32, i32, i32
  }
  func.func @transform_6(%arg0: i32) -> (i32, i32, i32, i32) {
    %c0_i32 = arith.constant 0 : i32
    %c0_i32_0 = arith.constant 0 : i32
    %c0_i32_1 = arith.constant 0 : i32
    %c0_i32_2 = arith.constant 0 : i32
    return %arg0, %c0_i32, %c0_i32_0, %c0_i32_1 : i32, i32, i32, i32
  }
  func.func @transform_7(%arg0: i32) -> (i32, i32, i32, i32) {
    %c0_i32 = arith.constant 0 : i32
    %c0_i32_0 = arith.constant 0 : i32
    %c0_i32_1 = arith.constant 0 : i32
    %c0_i32_2 = arith.constant 0 : i32
    return %arg0, %c0_i32, %c0_i32_0, %c0_i32_1 : i32, i32, i32, i32
  }
  func.func @transform_8(%arg0: i32) -> (i32, i32, i32, i32) {
    %c0_i32 = arith.constant 0 : i32
    %c0_i32_0 = arith.constant 0 : i32
    %c0_i32_1 = arith.constant 0 : i32
    %c0_i32_2 = arith.constant 0 : i32
    return %arg0, %c0_i32, %c0_i32_0, %c0_i32_1 : i32, i32, i32, i32
  }
  func.func @transform_9(%arg0: i32) -> (i32, i32, i32) {
    %c0_i32 = arith.constant 0 : i32
    %c0_i32_0 = arith.constant 0 : i32
    %c0_i32_1 = arith.constant 0 : i32
    return %arg0, %c0_i32, %c0_i32_0 : i32, i32, i32
  }
  func.func @transform_10(%arg0: i32) -> (i32, i32, i32) {
    %c0_i32 = arith.constant 0 : i32
    %c0_i32_0 = arith.constant 0 : i32
    %c0_i32_1 = arith.constant 0 : i32
    return %arg0, %c0_i32, %c0_i32_0 : i32, i32, i32
  }
  func.func @transform_11(%arg0: i32) -> (i32, i32) {
    %c0_i32 = arith.constant 0 : i32
    %c0_i32_0 = arith.constant 0 : i32
    %c0_i32_1 = arith.constant 0 : i32
    return %c0_i32, %c0_i32_0 : i32, i32
  }
  func.func @transform_12(%arg0: i32) -> (i32, i32) {
    %c0_i32 = arith.constant 0 : i32
    %c0_i32_0 = arith.constant 0 : i32
    %c0_i32_1 = arith.constant 0 : i32
    return %c0_i32, %c0_i32_0 : i32, i32
  }
  func.func @transform_13(%arg0: i32) -> (i32, i32) {
    %c0_i32 = arith.constant 0 : i32
    %c0_i32_0 = arith.constant 0 : i32
    %c0_i32_1 = arith.constant 0 : i32
    return %c0_i32, %c0_i32_0 : i32, i32
  }
}

</mosaic_0001>

<llo_original>
// kernel: tpu_custom_call.1
$region0: #{tpu_custom_call.1}
  #allocation0 [shape = 'u32[]', space=smem, size = 0x4, offset = 0x4, fixed_abs, tag = 'smem constant byte address 0x4 - core index']
  #allocation1 [shape = 'u32[144,128]{1,0:T(1,128)}', space=vmem, size = 0x12000, scoped, tag = 'internal scratch']
  #allocation2 [shape = 'f32[8,64]{1,0:T(8,128)}', space=vmem, size = 0x1000, scoped, tag = 'scratch operand']
  #allocation3 [shape = 'f32[8,64]{1,0:T(8,128)}', space=vmem, size = 0x1000, scoped, tag = 'scratch operand']
  #allocation4 [shape = 'f32[8,8]{1,0:T(8,128)}', space=vmem, size = 0x1000, scoped, tag = 'scratch operand']
  #allocation5 [shape = 'f32[4,8,16]{2,1,0:T(8,128)}', space=vmem, size = 0x4000, scoped, tag = 'scratch operand']
  #allocation6 [shape = 'f32[4,8,16]{2,1,0:T(8,128)}', space=vmem, size = 0x4000, scoped, tag = 'scratch operand']
  #allocation7 [shape = 'f32[4,8,16]{2,1,0:T(8,128)}', space=vmem, size = 0x4000, scoped, tag = 'scratch operand']
  %s0 = inlined_call_operand.vmem [shape: f32[8,64], index: 0, kind: input, shape index: {}]
  %s1 = inlined_call_operand.vmem [shape: f32[8,16], index: 1, kind: input, shape index: {}]
  %s2 = inlined_call_operand.vmem [shape: f32[8,16], index: 2, kind: input, shape index: {}]
  %s3 = inlined_call_operand.vmem [shape: bf16[16,16], index: 3, kind: input, shape index: {}]
  %s4 = inlined_call_operand.vmem [shape: f32[2,1,64], index: 4, kind: input, shape index: {}]
  %s5 = inlined_call_operand.vmem [shape: f32[2,1,64], index: 5, kind: input, shape index: {}]
  %s6 = inlined_call_operand.vmem [shape: bf16[2,8,64,16], index: 6, kind: input, shape index: {}]
  %s7 = inlined_call_operand.vmem [shape: f32[2,8,1,16], index: 7, kind: input, shape index: {}]
  %s8 = inlined_call_operand.vmem [shape: bf16[2,4,16,64], index: 8, kind: input, shape index: {}]
  %s9 = inlined_call_operand.vmem [shape: bf16[2,64,256], index: 9, kind: input, shape index: {}]
  %s10 = inlined_call_operand.vmem [shape: bf16[2,128,64], index: 10, kind: input, shape index: {}]
  %s11 = inlined_call_operand.vmem [shape: f32[1,64], index: 11, kind: input, shape index: {}]
  %s12 = inlined_call_operand.vmem [shape: bf16[64,256], index: 12, kind: input, shape index: {}]
  %s13 = inlined_call_operand.hbm [shape: f32[8,256], index: 13, kind: output, shape index: {}]
  %s14 = sld [smem:[#allocation0]]
  $region93: #{tpu_custom_call.1} parent=0
    _
  %s16 = ssub.s32 1, %s14
  %s17 = scalar_select 0, %s16, %s14
  $region1: #{tpu_custom_call.1} parent=0
    #allocation8 [shape = 'u8[8192]{0}', space=vmem, size = 0x2000, scoped, tag = 'output window, operand 0, single buffered']
    #allocation9 [shape = 's32[2]{0}', space=sflag, size = 0x8, scoped, tag = 'scoped memory for tpu_custom_call.1']
    %18 = vsyncpa [#allocation9], 0
    loop: start=0, step=1, limit=4
    $region2: #{tpu_custom_call.1} parent=1 // loop_pre_header
      _
    $region3: #{tpu_custom_call.1} parent=1 // loop_header
      %s20 = sphi 0, %s24
      %p21 = scmp.ge.s32.totalorder %s20, 4
      %s28 = sphi 0, %s28
      %s30 = sphi 0, %s28
      %s31 = sphi 0, %s30
      %s45 = sphi 0, %s31
      %s49 = sphi 0, %s49
      %s51 = sphi 0, %s49
      %s52 = sphi 0, %s51
      %s66 = sphi 0, %s52
      %s70 = sphi 0, %s70
      %s72 = sphi 0, %s70
      %s73 = sphi 0, %s72
      %s87 = sphi 0, %s73
      %s91 = sphi 0, %s91
      %s93 = sphi 0, %s91
      %s94 = sphi 0, %s93
      %s108 = sphi 0, %s94
      %s114 = sphi 0, %s116
      %s117 = sphi 0, %s114
      %s118 = sphi 0, %s117
      %s134 = sphi 0, %s118
      %s140 = sphi 0, %s142
      %s143 = sphi 0, %s140
      %s144 = sphi 0, %s143
      %s160 = sphi 0, %s144
      %s166 = sphi 0, %s168
      %s169 = sphi 0, %s166
      %s170 = sphi 0, %s169
      %s186 = sphi 0, %s170
      %s192 = sphi 0, %s194
      %s195 = sphi 0, %s192
      %s196 = sphi 0, %s195
      %s212 = sphi 0, %s196
      %s218 = sphi 0, %s220
      %s221 = sphi 0, %s218
      %s222 = sphi 0, %s221
      %s238 = sphi 0, %s222
      %s244 = sphi 0, %s246
      %s247 = sphi 0, %s244
      %s248 = sphi 0, %s247
      %s264 = sphi 0, %s248
      %s270 = sphi 0, %s272
      %s273 = sphi 0, %s270
      %s274 = sphi 0, %s273
      %s290 = sphi 0, %s274
      %s294 = sphi 0, %s294
      %s296 = sphi 0, %s294
      %s297 = sphi 0, %s296
      %s311 = sphi 0, %s297
      %s315 = sphi 0, %s315
      %s317 = sphi 0, %s315
      %s318 = sphi 0, %s317
      %s332 = sphi 0, %s318
      %s336 = sphi 0, %s336
      %s338 = sphi 0, %s336
      %s339 = sphi 0, %s338
      %s353 = sphi 0, %s339
    $region4: #{tpu_custom_call.1} parent=1 // loop_header_branch
      %23 = sbr.rel (%p21) target = $region8
    $region5: #{tpu_custom_call.1} parent=1 // loop_body
      %s25 = ssub.s32 %s20, 1
      %s26 = ssub.s32 %s20, 2
      %s27 = sadd.s32 %s20, 1
      %s29 = sadd.s32 %s28, 1
      %p32 = scmp.eq.s32.totalorder %s20, 1
      %p33 = scmp.ne.s32.totalorder %s28, %s30
      %p34 = scmp.eq.s32.totalorder %s20, 0
      %p35 = por %p33, %p34
      %p36 = scmp.ne.s32.totalorder %s28, %s30
      %p37 = scmp.eq.s32.totalorder %s25, 1
      %p38 = por %p36, %p37
      %p39 = scmp.ne.s32.totalorder %s30, %s31
      %p40 = scmp.eq.s32.totalorder %s25, 0
      %p41 = por %p39, %p40
      %p42 = scmp.ne.s32.totalorder %s30, %s31
      %p43 = scmp.eq.s32.totalorder %s26, 1
      %p44 = por %p42, %p43
      %p46 = scmp.ne.s32.totalorder %s31, %s45
      %p47 = scmp.eq.s32.totalorder %s26, 0
      %p48 = por %p46, %p47
      %s50 = sadd.s32 %s49, 1
      %p53 = scmp.eq.s32.totalorder %s20, 1
      %p54 = scmp.ne.s32.totalorder %s49, %s51
      %p55 = scmp.eq.s32.totalorder %s20, 0
      %p56 = por %p54, %p55
      %p57 = scmp.ne.s32.totalorder %s49, %s51
      %p58 = scmp.eq.s32.totalorder %s25, 1
      %p59 = por %p57, %p58
      %p60 = scmp.ne.s32.totalorder %s51, %s52
      %p61 = scmp.eq.s32.totalorder %s25, 0
      %p62 = por %p60, %p61
      %p63 = scmp.ne.s32.totalorder %s51, %s52
      %p64 = scmp.eq.s32.totalorder %s26, 1
      %p65 = por %p63, %p64
      %p67 = scmp.ne.s32.totalorder %s52, %s66
      %p68 = scmp.eq.s32.totalorder %s26, 0
      %p69 = por %p67, %p68
      %s71 = sadd.s32 %s70, 1
      %p74 = scmp.eq.s32.totalorder %s20, 1
      %p75 = scmp.ne.s32.totalorder %s70, %s72
      %p76 = scmp.eq.s32.totalorder %s20, 0
      %p77 = por %p75, %p76
      %p78 = scmp.ne.s32.totalorder %s70, %s72
      %p79 = scmp.eq.s32.totalorder %s25, 1
      %p80 = por %p78, %p79
      %p81 = scmp.ne.s32.totalorder %s72, %s73
      %p82 = scmp.eq.s32.totalorder %s25, 0
      %p83 = por %p81, %p82
      %p84 = scmp.ne.s32.totalorder %s72, %s73
      %p85 = scmp.eq.s32.totalorder %s26, 1
      %p86 = por %p84, %p85
      %p88 = scmp.ne.s32.totalorder %s73, %s87
      %p89 = scmp.eq.s32.totalorder %s26, 0
      %p90 = por %p88, %p89
      %s92 = sadd.s32 %s91, 1
      %p95 = scmp.eq.s32.totalorder %s20, 1
      %p96 = scmp.ne.s32.totalorder %s91, %s93
      %p97 = scmp.eq.s32.totalorder %s20, 0
      %p98 = por %p96, %p97
      %p99 = scmp.ne.s32.totalorder %s91, %s93
      %p100 = scmp.eq.s32.totalorder %s25, 1
      %p101 = por %p99, %p100
      %p102 = scmp.ne.s32.totalorder %s93, %s94
      %p103 = scmp.eq.s32.totalorder %s25, 0
      %p104 = por %p102, %p103
      %p105 = scmp.ne.s32.totalorder %s93, %s94
      %p106 = scmp.eq.s32.totalorder %s26, 1
      %p107 = por %p105, %p106
      %p109 = scmp.ne.s32.totalorder %s94, %s108
      %p110 = scmp.eq.s32.totalorder %s26, 0
      %p111 = por %p109, %p110
      %s112 = ssub.s32 %s20, %s27
      %p113 = scmp.eq.s32.totalorder %s112, 0
      %s115 = sadd.s32 %s114, 1
      %s116 = scalar_select %p113, %s114, %s115
      %p119 = pneg %p113
      %p120 = scmp.eq.s32.totalorder %s20, 1
      %p121 = por %p119, %p120
      %p122 = scmp.ne.s32.totalorder %s114, %s117
      %p123 = scmp.eq.s32.totalorder %s20, 0
      %p124 = por %p122, %p123
      %p125 = scmp.ne.s32.totalorder %s114, %s117
      %p126 = scmp.eq.s32.totalorder %s25, 1
      %p127 = por %p125, %p126
      %p128 = scmp.ne.s32.totalorder %s117, %s118
      %p129 = scmp.eq.s32.totalorder %s25, 0
      %p130 = por %p128, %p129
      %p131 = scmp.ne.s32.totalorder %s117, %s118
      %p132 = scmp.eq.s32.totalorder %s26, 1
      %p133 = por %p131, %p132
      %p135 = scmp.ne.s32.totalorder %s118, %s134
      %p136 = scmp.eq.s32.totalorder %s26, 0
      %p137 = por %p135, %p136
      %s138 = ssub.s32 %s20, %s27
      %p139 = scmp.eq.s32.totalorder %s138, 0
      %s141 = sadd.s32 %s140, 1
      %s142 = scalar_select %p139, %s140, %s141
      %p145 = pneg %p139
      %p146 = scmp.eq.s32.totalorder %s20, 1
      %p147 = por %p145, %p146
      %p148 = scmp.ne.s32.totalorder %s140, %s143
      %p149 = scmp.eq.s32.totalorder %s20, 0
      %p150 = por %p148, %p149
      %p151 = scmp.ne.s32.totalorder %s140, %s143
      %p152 = scmp.eq.s32.totalorder %s25, 1
      %p153 = por %p151, %p152
      %p154 = scmp.ne.s32.totalorder %s143, %s144
      %p155 = scmp.eq.s32.totalorder %s25, 0
      %p156 = por %p154, %p155
      %p157 = scmp.ne.s32.totalorder %s143, %s144
      %p158 = scmp.eq.s32.totalorder %s26, 1
      %p159 = por %p157, %p158
      %p161 = scmp.ne.s32.totalorder %s144, %s160
      %p162 = scmp.eq.s32.totalorder %s26, 0
      %p163 = por %p161, %p162
      %s164 = ssub.s32 %s20, %s27
      %p165 = scmp.eq.s32.totalorder %s164, 0
      %s167 = sadd.s32 %s166, 1
      %s168 = scalar_select %p165, %s166, %s167
      %p171 = pneg %p165
      %p172 = scmp.eq.s32.totalorder %s20, 1
      %p173 = por %p171, %p172
      %p174 = scmp.ne.s32.totalorder %s166, %s169
      %p175 = scmp.eq.s32.totalorder %s20, 0
      %p176 = por %p174, %p175
      %p177 = scmp.ne.s32.totalorder %s166, %s169
      %p178 = scmp.eq.s32.totalorder %s25, 1
      %p179 = por %p177, %p178
      %p180 = scmp.ne.s32.totalorder %s169, %s170
      %p181 = scmp.eq.s32.totalorder %s25, 0
      %p182 = por %p180, %p181
      %p183 = scmp.ne.s32.totalorder %s169, %s170
      %p184 = scmp.eq.s32.totalorder %s26, 1
      %p185 = por %p183, %p184
      %p187 = scmp.ne.s32.totalorder %s170, %s186
      %p188 = scmp.eq.s32.totalorder %s26, 0
      %p189 = por %p187, %p188
      %s190 = ssub.s32 %s20, %s27
      %p191 = scmp.eq.s32.totalorder %s190, 0
      %s193 = sadd.s32 %s192, 1
      %s194 = scalar_select %p191, %s192, %s193
      %p197 = pneg %p191
      %p198 = scmp.eq.s32.totalorder %s20, 1
      %p199 = por %p197, %p198
      %p200 = scmp.ne.s32.totalorder %s192, %s195
      %p201 = scmp.eq.s32.totalorder %s20, 0
      %p202 = por %p200, %p201
      %p203 = scmp.ne.s32.totalorder %s192, %s195
      %p204 = scmp.eq.s32.totalorder %s25, 1
      %p205 = por %p203, %p204
      %p206 = scmp.ne.s32.totalorder %s195, %s196
      %p207 = scmp.eq.s32.totalorder %s25, 0
      %p208 = por %p206, %p207
      %p209 = scmp.ne.s32.totalorder %s195, %s196
      %p210 = scmp.eq.s32.totalorder %s26, 1
      %p211 = por %p209, %p210
      %p213 = scmp.ne.s32.totalorder %s196, %s212
      %p214 = scmp.eq.s32.totalorder %s26, 0
      %p215 = por %p213, %p214
      %s216 = ssub.s32 %s20, %s27
      %p217 = scmp.eq.s32.totalorder %s216, 0
      %s219 = sadd.s32 %s218, 1
      %s220 = scalar_select %p217, %s218, %s219
      %p223 = pneg %p217
      %p224 = scmp.eq.s32.totalorder %s20, 1
      %p225 = por %p223, %p224
      %p226 = scmp.ne.s32.totalorder %s218, %s221
      %p227 = scmp.eq.s32.totalorder %s20, 0
      %p228 = por %p226, %p227
      %p229 = scmp.ne.s32.totalorder %s218, %s221
      %p230 = scmp.eq.s32.totalorder %s25, 1
      %p231 = por %p229, %p230
      %p232 = scmp.ne.s32.totalorder %s221, %s222
      %p233 = scmp.eq.s32.totalorder %s25, 0
      %p234 = por %p232, %p233
      %p235 = scmp.ne.s32.totalorder %s221, %s222
      %p236 = scmp.eq.s32.totalorder %s26, 1
      %p237 = por %p235, %p236
      %p239 = scmp.ne.s32.totalorder %s222, %s238
      %p240 = scmp.eq.s32.totalorder %s26, 0
      %p241 = por %p239, %p240
      %s242 = ssub.s32 %s20, %s27
      %p243 = scmp.eq.s32.totalorder %s242, 0
      %s245 = sadd.s32 %s244, 1
      %s246 = scalar_select %p243, %s244, %s245
      %p249 = pneg %p243
      %p250 = scmp.eq.s32.totalorder %s20, 1
      %p251 = por %p249, %p250
      %p252 = scmp.ne.s32.totalorder %s244, %s247
      %p253 = scmp.eq.s32.totalorder %s20, 0
      %p254 = por %p252, %p253
      %p255 = scmp.ne.s32.totalorder %s244, %s247
      %p256 = scmp.eq.s32.totalorder %s25, 1
      %p257 = por %p255, %p256
      %p258 = scmp.ne.s32.totalorder %s247, %s248
      %p259 = scmp.eq.s32.totalorder %s25, 0
      %p260 = por %p258, %p259
      %p261 = scmp.ne.s32.totalorder %s247, %s248
      %p262 = scmp.eq.s32.totalorder %s26, 1
      %p263 = por %p261, %p262
      %p265 = scmp.ne.s32.totalorder %s248, %s264
      %p266 = scmp.eq.s32.totalorder %s26, 0
      %p267 = por %p265, %p266
      %s268 = ssub.s32 %s20, %s27
      %p269 = scmp.eq.s32.totalorder %s268, 0
      %s271 = sadd.s32 %s270, 1
      %s272 = scalar_select %p269, %s270, %s271
      %p275 = pneg %p269
      %p276 = scmp.eq.s32.totalorder %s20, 1
      %p277 = por %p275, %p276
      %p278 = scmp.ne.s32.totalorder %s270, %s273
      %p279 = scmp.eq.s32.totalorder %s20, 0
      %p280 = por %p278, %p279
      %p281 = scmp.ne.s32.totalorder %s270, %s273
      %p282 = scmp.eq.s32.totalorder %s25, 1
      %p283 = por %p281, %p282
      %p284 = scmp.ne.s32.totalorder %s273, %s274
      %p285 = scmp.eq.s32.totalorder %s25, 0
      %p286 = por %p284, %p285
      %p287 = scmp.ne.s32.totalorder %s273, %s274
      %p288 = scmp.eq.s32.totalorder %s26, 1
      %p289 = por %p287, %p288
      %p291 = scmp.ne.s32.totalorder %s274, %s290
      %p292 = scmp.eq.s32.totalorder %s26, 0
      %p293 = por %p291, %p292
      %s295 = sadd.s32 %s294, 1
      %p298 = scmp.eq.s32.totalorder %s20, 1
      %p299 = scmp.ne.s32.totalorder %s294, %s296
      %p300 = scmp.eq.s32.totalorder %s20, 0
      %p301 = por %p299, %p300
      %p302 = scmp.ne.s32.totalorder %s294, %s296
      %p303 = scmp.eq.s32.totalorder %s25, 1
      %p304 = por %p302, %p303
      %p305 = scmp.ne.s32.totalorder %s296, %s297
      %p306 = scmp.eq.s32.totalorder %s25, 0
      %p307 = por %p305, %p306
      %p308 = scmp.ne.s32.totalorder %s296, %s297
      %p309 = scmp.eq.s32.totalorder %s26, 1
      %p310 = por %p308, %p309
      %p312 = scmp.ne.s32.totalorder %s297, %s311
      %p313 = scmp.eq.s32.totalorder %s26, 0
      %p314 = por %p312, %p313
      %s316 = sadd.s32 %s315, 1
      %p319 = scmp.eq.s32.totalorder %s20, 1
      %p320 = scmp.ne.s32.totalorder %s315, %s317
      %p321 = scmp.eq.s32.totalorder %s20, 0
      %p322 = por %p320, %p321
      %p323 = scmp.ne.s32.totalorder %s315, %s317
      %p324 = scmp.eq.s32.totalorder %s25, 1
      %p325 = por %p323, %p324
      %p326 = scmp.ne.s32.totalorder %s317, %s318
      %p327 = scmp.eq.s32.totalorder %s25, 0
      %p328 = por %p326, %p327
      %p329 = scmp.ne.s32.totalorder %s317, %s318
      %p330 = scmp.eq.s32.totalorder %s26, 1
      %p331 = por %p329, %p330
      %p333 = scmp.ne.s32.totalorder %s318, %s332
      %p334 = scmp.eq.s32.totalorder %s26, 0
      %p335 = por %p333, %p334
      %s337 = sadd.s32 %s336, 1
      %p340 = scmp.eq.s32.totalorder %s20, 1
      %p341 = scmp.ne.s32.totalorder %s336, %s338
      %p342 = scmp.eq.s32.totalorder %s20, 0
      %p343 = por %p341, %p342
      %p344 = scmp.ne.s32.totalorder %s336, %s338
      %p345 = scmp.eq.s32.totalorder %s25, 1
      %p346 = por %p344, %p345
      %p347 = scmp.ne.s32.totalorder %s338, %s339
      %p348 = scmp.eq.s32.totalorder %s25, 0
      %p349 = por %p347, %p348
      %p350 = scmp.ne.s32.totalorder %s338, %s339
      %p351 = scmp.eq.s32.totalorder %s26, 1
      %p352 = por %p350, %p351
      %p354 = scmp.ne.s32.totalorder %s339, %s353
      %p355 = scmp.eq.s32.totalorder %s26, 0
      %p356 = por %p354, %p355
      %p357 = scmp.le.s32.totalorder 1, %s20
      %p358 = scmp.lt.s32.totalorder %s20, 3
      %p359 = pnand %p357, %p358
      %p360 = pneg %p359
      // Predicated region
      $region9: #{tpu_custom_call.1} parent=5 // pred_check
        _
      $region10: #{tpu_custom_call.1} parent=5 // pred_check_branch
        %362 = sbr.rel (%p359) target = $region12
      $region11: #{tpu_custom_call.1} parent=5 // pred_region
        %s363 = ssub.s32 %s20, 1
        // Predicated region
        $region13: #{tpu_custom_call.1} parent=11 // pred_check
          %p364 = pneg %p41
        $region14: #{tpu_custom_call.1} parent=11 // pred_check_branch
          %366 = sbr.rel (%p364) target = $region16
        $region15: #{tpu_custom_call.1} parent=11 // pred_region
          _
        $region16: #{tpu_custom_call.1} parent=11 // pred_fallthru
          _
        // Predicated region
        $region17: #{tpu_custom_call.1} parent=11 // pred_check
          %p367 = pneg %p62
        $region18: #{tpu_custom_call.1} parent=11 // pred_check_branch
          %369 = sbr.rel (%p367) target = $region20
        $region19: #{tpu_custom_call.1} parent=11 // pred_region
          _
        $region20: #{tpu_custom_call.1} parent=11 // pred_fallthru
          _
        // Predicated region
        $region21: #{tpu_custom_call.1} parent=11 // pred_check
          %p370 = pneg %p83
        $region22: #{tpu_custom_call.1} parent=11 // pred_check_branch
          %372 = sbr.rel (%p370) target = $region24
        $region23: #{tpu_custom_call.1} parent=11 // pred_region
          _
        $region24: #{tpu_custom_call.1} parent=11 // pred_fallthru
          _
        // Predicated region
        $region25: #{tpu_custom_call.1} parent=11 // pred_check
          %p373 = pneg %p104
        $region26: #{tpu_custom_call.1} parent=11 // pred_check_branch
          %375 = sbr.rel (%p373) target = $region28
        $region27: #{tpu_custom_call.1} parent=11 // pred_region
          _
        $region28: #{tpu_custom_call.1} parent=11 // pred_fallthru
          _
        // Predicated region
        $region29: #{tpu_custom_call.1} parent=11 // pred_check
          %p376 = pneg %p307
        $region30: #{tpu_custom_call.1} parent=11 // pred_check_branch
          %378 = sbr.rel (%p376) target = $region32
        $region31: #{tpu_custom_call.1} parent=11 // pred_region
          _
        $region32: #{tpu_custom_call.1} parent=11 // pred_fallthru
          _
        // Predicated region
        $region33: #{tpu_custom_call.1} parent=11 // pred_check
          %p379 = pneg %p328
        $region34: #{tpu_custom_call.1} parent=11 // pred_check_branch
          %381 = sbr.rel (%p379) target = $region36
        $region35: #{tpu_custom_call.1} parent=11 // pred_region
          _
        $region36: #{tpu_custom_call.1} parent=11 // pred_fallthru
          _
      $region12: #{tpu_custom_call.1} parent=5 // pred_fallthru
        _
      %p382 = scmp.lt.s32.totalorder %s20, 2
      // Predicated region
      $region37: #{tpu_custom_call.1} parent=5 // pred_check
        %p383 = pneg %p382
      $region38: #{tpu_custom_call.1} parent=5 // pred_check_branch
        %385 = sbr.rel (%p383) target = $region40
      $region39: #{tpu_custom_call.1} parent=5 // pred_region
        // Predicated region
        $region41: #{tpu_custom_call.1} parent=39 // pred_check
          %p386 = pneg %p124
        $region42: #{tpu_custom_call.1} parent=39 // pred_check_branch
          %388 = sbr.rel (%p386) target = $region44
        $region43: #{tpu_custom_call.1} parent=39 // pred_region
          %p389 = scmp.lt.s32.totalorder %s20, 1
          %s390 = scalar_select %p389, %s20, 1
          %s391 = scalar_lea.vmem %s4, %s390
        $region44: #{tpu_custom_call.1} parent=39 // pred_fallthru
          _
        // Predicated region
        $region45: #{tpu_custom_call.1} parent=39 // pred_check
          %p392 = pneg %p150
        $region46: #{tpu_custom_call.1} parent=39 // pred_check_branch
          %394 = sbr.rel (%p392) target = $region48
        $region47: #{tpu_custom_call.1} parent=39 // pred_region
          %p395 = scmp.lt.s32.totalorder %s20, 1
          %s396 = scalar_select %p395, %s20, 1
          %s397 = scalar_lea.vmem %s5, %s396
        $region48: #{tpu_custom_call.1} parent=39 // pred_fallthru
          _
        // Predicated region
        $region49: #{tpu_custom_call.1} parent=39 // pred_check
          %p398 = pneg %p176
        $region50: #{tpu_custom_call.1} parent=39 // pred_check_branch
          %400 = sbr.rel (%p398) target = $region52
        $region51: #{tpu_custom_call.1} parent=39 // pred_region
          %p401 = scmp.lt.s32.totalorder %s20, 1
          %s402 = scalar_select %p401, %s20, 1
          %s403 = smul.addr %s402, 64
          %s404 = smul.addr %s403, 4
          %s405 = scalar_lea.vmem %s6, %s404
        $region52: #{tpu_custom_call.1} parent=39 // pred_fallthru
          _
        // Predicated region
        $region53: #{tpu_custom_call.1} parent=39 // pred_check
          %p406 = pneg %p202
        $region54: #{tpu_custom_call.1} parent=39 // pred_check_branch
          %408 = sbr.rel (%p406) target = $region56
        $region55: #{tpu_custom_call.1} parent=39 // pred_region
          %p409 = scmp.lt.s32.totalorder %s20, 1
          %s410 = scalar_select %p409, %s20, 1
          %s411 = smul.addr %s410, 8
          %s412 = scalar_lea.vmem %s7, %s411
        $region56: #{tpu_custom_call.1} parent=39 // pred_fallthru
          _
        // Predicated region
        $region57: #{tpu_custom_call.1} parent=39 // pred_check
          %p413 = pneg %p228
        $region58: #{tpu_custom_call.1} parent=39 // pred_check_branch
          %415 = sbr.rel (%p413) target = $region60
        $region59: #{tpu_custom_call.1} parent=39 // pred_region
          %p416 = scmp.lt.s32.totalorder %s20, 1
          %s417 = scalar_select %p416, %s20, 1
          %s418 = smul.addr %s417, 8
          %s419 = smul.addr %s418, 4
          %s420 = scalar_lea.vmem %s8, %s419
        $region60: #{tpu_custom_call.1} parent=39 // pred_fallthru
          _
        // Predicated region
        $region61: #{tpu_custom_call.1} parent=39 // pred_check
          %p421 = pneg %p254
        $region62: #{tpu_custom_call.1} parent=39 // pred_check_branch
          %423 = sbr.rel (%p421) target = $region64
        $region63: #{tpu_custom_call.1} parent=39 // pred_region
          %p424 = scmp.lt.s32.totalorder %s20, 1
          %s425 = scalar_select %p424, %s20, 1
          %s426 = smul.addr %s425, 16
          %s427 = smul.addr %s426, 4
          %s428 = scalar_lea.vmem %s9, %s427
        $region64: #{tpu_custom_call.1} parent=39 // pred_fallthru
          _
        // Predicated region
        $region65: #{tpu_custom_call.1} parent=39 // pred_check
          %p429 = pneg %p280
        $region66: #{tpu_custom_call.1} parent=39 // pred_check_branch
          %431 = sbr.rel (%p429) target = $region68
        $region67: #{tpu_custom_call.1} parent=39 // pred_region
          %p432 = scmp.lt.s32.totalorder %s20, 1
          %s433 = scalar_select %p432, %s20, 1
          %s434 = smul.addr %s433, 16
          %s435 = smul.addr %s434, 4
          %s436 = scalar_lea.vmem %s10, %s435
        $region68: #{tpu_custom_call.1} parent=39 // pred_fallthru
          _
      $region40: #{tpu_custom_call.1} parent=5 // pred_fallthru
        _
      %p437 = scmp.le.s32.totalorder 1, %s20
      %p438 = scmp.lt.s32.totalorder %s20, 3
      %p439 = pnand %p437, %p438
      %p440 = pneg %p439
      // Predicated region
      $region69: #{tpu_custom_call.1} parent=5 // pred_check
        _
      $region70: #{tpu_custom_call.1} parent=5 // pred_check_branch
        %442 = sbr.rel (%p439) target = $region72
      $region71: #{tpu_custom_call.1} parent=5 // pred_region
        %s443 = ssub.s32 %s20, 1
        %p444 = pneg %p41
        %p445 = pneg %p38
        %p446 = pneg %p62
        %p447 = pneg %p59
        %p448 = pneg %p83
        %p449 = pneg %p80
        %p450 = pneg %p104
        %p451 = pneg %p101
        %p452 = scmp.lt.s32.totalorder %s25, 1
        %s453 = scalar_select %p452, %s25, 1
        %s454 = scalar_lea.vmem %s4, %s453
        %p455 = pneg %p130
        %p456 = pneg %p127
        %p457 = scmp.lt.s32.totalorder %s25, 1
        %s458 = scalar_select %p457, %s25, 1
        %s459 = scalar_lea.vmem %s5, %s458
        %p460 = pneg %p156
        %p461 = pneg %p153
        %p462 = scmp.lt.s32.totalorder %s25, 1
        %s463 = scalar_select %p462, %s25, 1
        %s464 = smul.addr %s463, 64
        %s465 = smul.addr %s464, 4
        %s466 = scalar_lea.vmem %s6, %s465
        %p467 = pneg %p182
        %p468 = pneg %p179
        %p469 = scmp.lt.s32.totalorder %s25, 1
        %s470 = scalar_select %p469, %s25, 1
        %s471 = smul.addr %s470, 8
        %s472 = scalar_lea.vmem %s7, %s471
        %p473 = pneg %p208
        %p474 = pneg %p205
        %p475 = scmp.lt.s32.totalorder %s25, 1
        %s476 = scalar_select %p475, %s25, 1
        %s477 = smul.addr %s476, 8
        %s478 = smul.addr %s477, 4
        %s479 = scalar_lea.vmem %s8, %s478
        %p480 = pneg %p234
        %p481 = pneg %p231
        %p482 = scmp.lt.s32.totalorder %s25, 1
        %s483 = scalar_select %p482, %s25, 1
        %s484 = smul.addr %s483, 16
        %s485 = smul.addr %s484, 4
        %s486 = scalar_lea.vmem %s9, %s485
        %p487 = pneg %p260
        %p488 = pneg %p257
        %p489 = scmp.lt.s32.totalorder %s25, 1
        %s490 = scalar_select %p489, %s25, 1
        %s491 = smul.addr %s490, 16
        %s492 = smul.addr %s491, 4
        %s493 = scalar_lea.vmem %s10, %s492
        %p494 = pneg %p286
        %p495 = pneg %p283
        %p496 = pneg %p307
        %p497 = pneg %p304
        %p498 = pneg %p328
        %p499 = pneg %p325
        %p500 = pneg %p349
        %p501 = pneg %p346
        %p502 = scmp.lt.s32.totalorder %s25, 1
        %s503 = scalar_select %p502, %s25, 1
        %s504 = scalar_lea.vmem %s4, %s503
        %p505 = scmp.lt.s32.totalorder %s25, 1
        %s506 = scalar_select %p505, %s25, 1
        %s507 = scalar_lea.vmem %s5, %s506
        %p508 = scmp.lt.s32.totalorder %s25, 1
        %s509 = scalar_select %p508, %s25, 1
        %s510 = smul.addr %s509, 64
        %s511 = smul.addr %s510, 4
        %s512 = scalar_lea.vmem %s6, %s511
        %p513 = scmp.lt.s32.totalorder %s25, 1
        %s514 = scalar_select %p513, %s25, 1
        %s515 = smul.addr %s514, 8
        %s516 = scalar_lea.vmem %s7, %s515
        %p517 = scmp.lt.s32.totalorder %s25, 1
        %s518 = scalar_select %p517, %s25, 1
        %s519 = smul.addr %s518, 8
        %s520 = smul.addr %s519, 4
        %s521 = scalar_lea.vmem %s8, %s520
        %p522 = scmp.lt.s32.totalorder %s25, 1
        %s523 = scalar_select %p522, %s25, 1
        %s524 = smul.addr %s523, 16
        %s525 = smul.addr %s524, 4
        %s526 = scalar_lea.vmem %s9, %s525
        %p527 = scmp.lt.s32.totalorder %s25, 1
        %s528 = scalar_select %p527, %s25, 1
        %s529 = smul.addr %s528, 16
        %s530 = smul.addr %s529, 4
        %s531 = scalar_lea.vmem %s10, %s530
        %p533 = scmp.eq.s32.totalorder %s25, 0
        // Predicated region
        $region73: #{tpu_custom_call.1} parent=71 // pred_check
          %p534 = pneg %p533
        $region74: #{tpu_custom_call.1} parent=71 // pred_check_branch
          %536 = sbr.rel (%p534) target = $region76
        $region75: #{tpu_custom_call.1} parent=71 // pred_region
          %v537 = vld [vmem:[%s0] sm:$0xff]
          %vm538 = vcmask 523264
          %539 = vst.msk [vmem:[#allocation2] sm:$0xff] %vm538, %v537
          %540 = vst.msk [vmem:[#allocation3] sm:$0xff] %vm538, 0.0
          %v541 = vlaneseq
          %v542 = vshrl.u32 %v541, 7
          %v543 = vlaneseq
          %v544 = vand.u32 %v543, 127
          %vm545 = vcmp.le.s32.totalorder %v544, %v542
          %v546 = vsel %vm545, 0.0, -1e+30
          %vm547 = vcmask 64512
          %548 = vst.msk [vmem:[#allocation4] sm:$0xff] %vm547, %v546
        $region76: #{tpu_custom_call.1} parent=71 // pred_fallthru
          _
        %v549 = vld [vmem:[%s3] sm:$0xf]
        %v550 = vld [vmem:[%s3 + $0x4] sm:$0xf]
        %v551 = vld [vmem:[%s1] sm:$0xff]
        %v552 = vld [vmem:[%s2] sm:$0xff]
        %v553 = vld [vmem:[#allocation2] sm:$0xff]
        %v554 = vld [vmem:[#allocation3] sm:$0xff]
        %v555 = vadd.f32 %v553, %v554
        %v556 = vld [vmem:[%s504] sm:$0x1]
        %v557 = vmul.f32 %v555, %v555
        %vm558 = vcmask 523264
        %v559 = vsel %vm558, %v557, 0.0
        %560 = vadd.xlane.f32.xlu0 %v559
        %v561 = vpop.xlane.xlu0 %560
        %v562 = vrcp.pop 64.0
        %v563 = vmul.f32 %v561, %v562
        %v564 = vadd.f32 %v563, 1e-06
        %v565 = vrsqrt.pop %v564
        %v566 = vmul.f32 %v555, %v565
        %v568 = vlaneseq
        %v569 = vshrl.u32 %v568, 7
        %v570 = vsub.s32 0, %v569
        %v571 = vrot.slane %v556, %v570
        %v573 = vmul.f32 %v566, %v571
        %v574 = vpack.c.bf16 %v573, %v573
        %v575 = vld [vmem:[%s512] sm:$0xf]
        %v576 = vld [vmem:[%s512 + $0x4] sm:$0xf]
        %v577 = vld [vmem:[%s512 + $0x8] sm:$0xf]
        %v578 = vld [vmem:[%s512 + $0xc] sm:$0xf]
        %v579 = vld [vmem:[%s512 + $0x10] sm:$0xf]
        %v580 = vld [vmem:[%s512 + $0x14] sm:$0xf]
        %v581 = vld [vmem:[%s512 + $0x18] sm:$0xf]
        %v582 = vld [vmem:[%s512 + $0x1c] sm:$0xf]
        %v583 = vld [vmem:[%s516] sm:$0x1]
        %v585 = vlaneseq
        %v586 = vshrl.u32 %v585, 7
        %v587 = vsub.s32 0, %v586
        %v588 = vrot.slane %v583, %v587
        %v598 = vunpack.c.l.b16 %v575
        %v599 = vunpack.c.l.b16 %v576
        %v600 = vunpack.c.l.b16 %v577
        %v601 = vunpack.c.l.b16 %v578
        %v602 = vunpack.c.l.b16 %v579
        %v603 = vunpack.c.l.b16 %v580
        %v604 = vunpack.c.l.b16 %v581
        %v605 = vunpack.c.l.b16 %v582
        %v606 = vpack.c.b16 %v599, %v598
        %v607 = vpack.c.b16 %v601, %v600
        %v608 = vpack.c.b16 %v603, %v602
        %v609 = vpack.c.b16 %v605, %v604
        %v615 = vsel %vm558, %v574, 0
        %617 = vmatprep.subr.bf16.mxu0 0
        %618 = vmatpush1.bf16.msra.mxu0 %v606
        %619 = vmatprep.subr.bf16.mxu0 0
        %620 = vmatpush1.bf16.msra.mxu0 %v607
        %621 = vmatprep.subr.bf16.mxu0 0
        %622 = vmatpush1.bf16.msra.mxu0 %v608
        %623 = vmatprep.subr.bf16.mxu0 0
        %624 = vmatpush1.bf16.msra.mxu0 %v609
        %625 = vmatprep.subr.bf16.mxu0 0
        %626 = vmatpush1.bf16.msra.mxu0 0
        %627 = vmatprep.subr.bf16.mxu0 0
        %628 = vmatpush1.bf16.msra.mxu0 0
        %629 = vmatprep.subr.bf16.mxu0 0
        %630 = vmatpush1.bf16.msra.mxu0 0
        %631 = vmatprep.subr.bf16.mxu0 0
        %632 = vmatpush1.bf16.msra.mxu0 0
        %633 = vmatprep.subr.bf16.mxu0 0
        %634 = vmatpush1.bf16.msra.mxu0 0
        %635 = vmatprep.subr.bf16.mxu0 0
        %636 = vmatpush1.bf16.msra.mxu0 0
        %637 = vmatprep.subr.bf16.mxu0 0
        %638 = vmatpush1.bf16.msra.mxu0 0
        %639 = vmatprep.subr.bf16.mxu0 0
        %640 = vmatpush1.bf16.msra.mxu0 0
        %641 = vmatprep.subr.bf16.mxu0 0
        %642 = vmatpush1.bf16.msra.mxu0 0
        %643 = vmatprep.subr.bf16.mxu0 0
        %644 = vmatpush1.bf16.msra.mxu0 0
        %645 = vmatprep.subr.bf16.mxu0 0
        %646 = vmatpush1.bf16.msra.mxu0 0
        %647 = vmatprep.subr.bf16.mxu0 0
        %648 = vmatpush1.bf16.msra.mxu0 0
        %649 = vmatprep.mubr.bf16.mxu0 0
        %650 = vmatmul.mubr.bf16.gmra.mrb[0].mxu0 %v615
        %v651 = vpop.f32.mrb[0].mxu0
        %v652 = vadd.f32 %v588, %v651
        %v653 = vpop.f32.mrb[0].mxu0
        %v654 = vpop.f32.mrb[0].mxu0
        %v655 = vpop.f32.mrb[0].mxu0
        %656 = vdwg.mxu0
        %v657 = vmul.f32 %v652, %v551
        %v658 = vpack.c.bf16 %v652, %v652
        %v661 = vunpack.c.l.b16 %v549
        %v662 = vunpack.c.l.b16 %v550
        %v663 = vpack.c.b16 %v662, %v661
        %vm665 = vcmask 130048
        %v667 = vsel %vm665, %v658, 0
        %669 = vmatprep.subr.bf16.mxu0 0
        %670 = vmatpush1.bf16.msra.mxu0 %v663
        %671 = vmatprep.subr.bf16.mxu0 0
        %672 = vmatpush1.bf16.msra.mxu0 0
        %673 = vmatprep.subr.bf16.mxu0 0
        %674 = vmatpush1.bf16.msra.mxu0 0
        %675 = vmatprep.subr.bf16.mxu0 0
        %676 = vmatpush1.bf16.msra.mxu0 0
        %677 = vmatprep.subr.bf16.mxu0 0
        %678 = vmatpush1.bf16.msra.mxu0 0
        %679 = vmatprep.subr.bf16.mxu0 0
        %680 = vmatpush1.bf16.msra.mxu0 0
        %681 = vmatprep.subr.bf16.mxu0 0
        %682 = vmatpush1.bf16.msra.mxu0 0
        %683 = vmatprep.subr.bf16.mxu0 0
        %684 = vmatpush1.bf16.msra.mxu0 0
        %685 = vmatprep.subr.bf16.mxu0 0
        %686 = vmatpush1.bf16.msra.mxu0 0
        %687 = vmatprep.subr.bf16.mxu0 0
        %688 = vmatpush1.bf16.msra.mxu0 0
        %689 = vmatprep.subr.bf16.mxu0 0
        %690 = vmatpush1.bf16.msra.mxu0 0
        %691 = vmatprep.subr.bf16.mxu0 0
        %692 = vmatpush1.bf16.msra.mxu0 0
        %693 = vmatprep.subr.bf16.mxu0 0
        %694 = vmatpush1.bf16.msra.mxu0 0
        %695 = vmatprep.subr.bf16.mxu0 0
        %696 = vmatpush1.bf16.msra.mxu0 0
        %697 = vmatprep.subr.bf16.mxu0 0
        %698 = vmatpush1.bf16.msra.mxu0 0
        %699 = vmatprep.subr.bf16.mxu0 0
        %700 = vmatpush1.bf16.msra.mxu0 0
        %701 = vmatprep.mubr.bf16.mxu0 0
        %702 = vmatmul.mubr.bf16.gmra.mrb[0].mxu0 %v667
        %v703 = vpop.f32.mrb[0].mxu0
        %v704 = vadd.f32 0.0, %v703
        %v705 = vpop.f32.mrb[0].mxu0
        %v706 = vpop.f32.mrb[0].mxu0
        %v707 = vpop.f32.mrb[0].mxu0
        %708 = vdwg.mxu0
        %v709 = vmul.f32 %v704, %v552
        %v710 = vadd.f32 %v657, %v709
        %v711 = vmul.f32 %v710, 0.25
        %712 = vst.msk [vmem:[#allocation5] sm:$0xff] %vm665, %v711
        %s713 = scalar_lea.vmem %s512, 32
        %v714 = vld [vmem:[%s713] sm:$0xf]
        %v715 = vld [vmem:[%s713 + $0x4] sm:$0xf]
        %v716 = vld [vmem:[%s713 + $0x8] sm:$0xf]
        %v717 = vld [vmem:[%s713 + $0xc] sm:$0xf]
        %v718 = vld [vmem:[%s713 + $0x10] sm:$0xf]
        %v719 = vld [vmem:[%s713 + $0x14] sm:$0xf]
        %v720 = vld [vmem:[%s713 + $0x18] sm:$0xf]
        %v721 = vld [vmem:[%s713 + $0x1c] sm:$0xf]
        %s722 = scalar_lea.vmem %s516, 1
        %v723 = vld [vmem:[%s722] sm:$0x1]
        %v725 = vlaneseq
        %v726 = vshrl.u32 %v725, 7
        %v727 = vsub.s32 0, %v726
        %v728 = vrot.slane %v723, %v727
        %v738 = vunpack.c.l.b16 %v714
        %v739 = vunpack.c.l.b16 %v715
        %v740 = vunpack.c.l.b16 %v716
        %v741 = vunpack.c.l.b16 %v717
        %v742 = vunpack.c.l.b16 %v718
        %v743 = vunpack.c.l.b16 %v719
        %v744 = vunpack.c.l.b16 %v720
        %v745 = vunpack.c.l.b16 %v721
        %v746 = vpack.c.b16 %v739, %v738
        %v747 = vpack.c.b16 %v741, %v740
        %v748 = vpack.c.b16 %v743, %v742
        %v749 = vpack.c.b16 %v745, %v744
        %754 = vmatprep.subr.bf16.mxu0 0
        %755 = vmatpush1.bf16.msra.mxu0 %v746
        %756 = vmatprep.subr.bf16.mxu0 0
        %757 = vmatpush1.bf16.msra.mxu0 %v747
        %758 = vmatprep.subr.bf16.mxu0 0
        %759 = vmatpush1.bf16.msra.mxu0 %v748
        %760 = vmatprep.subr.bf16.mxu0 0
        %761 = vmatpush1.bf16.msra.mxu0 %v749
        %762 = vmatprep.subr.bf16.mxu0 0
        %763 = vmatpush1.bf16.msra.mxu0 0
        %764 = vmatprep.subr.bf16.mxu0 0
        %765 = vmatpush1.bf16.msra.mxu0 0
        %766 = vmatprep.subr.bf16.mxu0 0
        %767 = vmatpush1.bf16.msra.mxu0 0
        %768 = vmatprep.subr.bf16.mxu0 0
        %769 = vmatpush1.bf16.msra.mxu0 0
        %770 = vmatprep.subr.bf16.mxu0 0
        %771 = vmatpush1.bf16.msra.mxu0 0
        %772 = vmatprep.subr.bf16.mxu0 0
        %773 = vmatpush1.bf16.msra.mxu0 0
        %774 = vmatprep.subr.bf16.mxu0 0
        %775 = vmatpush1.bf16.msra.mxu0 0
        %776 = vmatprep.subr.bf16.mxu0 0
        %777 = vmatpush1.bf16.msra.mxu0 0
        %778 = vmatprep.subr.bf16.mxu0 0
        %779 = vmatpush1.bf16.msra.mxu0 0
        %780 = vmatprep.subr.bf16.mxu0 0
        %781 = vmatpush1.bf16.msra.mxu0 0
        %782 = vmatprep.subr.bf16.mxu0 0
        %783 = vmatpush1.bf16.msra.mxu0 0
        %784 = vmatprep.subr.bf16.mxu0 0
        %785 = vmatpush1.bf16.msra.mxu0 0
        %786 = vmatprep.mubr.bf16.mxu0 0
        %787 = vmatmul.mubr.bf16.gmra.mrb[0].mxu0 %v615
        %v788 = vpop.f32.mrb[0].mxu0
        %v789 = vadd.f32 %v728, %v788
        %v790 = vpop.f32.mrb[0].mxu0
        %v791 = vpop.f32.mrb[0].mxu0
        %v792 = vpop.f32.mrb[0].mxu0
        %793 = vdwg.mxu0
        %v794 = vmul.f32 %v789, %v551
        %v795 = vpack.c.bf16 %v789, %v789
        %v797 = vsel %vm665, %v795, 0
        %799 = vmatprep.subr.bf16.mxu0 0
        %800 = vmatpush1.bf16.msra.mxu0 %v663
        %801 = vmatprep.subr.bf16.mxu0 0
        %802 = vmatpush1.bf16.msra.mxu0 0
        %803 = vmatprep.subr.bf16.mxu0 0
        %804 = vmatpush1.bf16.msra.mxu0 0
        %805 = vmatprep.subr.bf16.mxu0 0
        %806 = vmatpush1.bf16.msra.mxu0 0
        %807 = vmatprep.subr.bf16.mxu0 0
        %808 = vmatpush1.bf16.msra.mxu0 0
        %809 = vmatprep.subr.bf16.mxu0 0
        %810 = vmatpush1.bf16.msra.mxu0 0
        %811 = vmatprep.subr.bf16.mxu0 0
        %812 = vmatpush1.bf16.msra.mxu0 0
        %813 = vmatprep.subr.bf16.mxu0 0
        %814 = vmatpush1.bf16.msra.mxu0 0
        %815 = vmatprep.subr.bf16.mxu0 0
        %816 = vmatpush1.bf16.msra.mxu0 0
        %817 = vmatprep.subr.bf16.mxu0 0
        %818 = vmatpush1.bf16.msra.mxu0 0
        %819 = vmatprep.subr.bf16.mxu0 0
        %820 = vmatpush1.bf16.msra.mxu0 0
        %821 = vmatprep.subr.bf16.mxu0 0
        %822 = vmatpush1.bf16.msra.mxu0 0
        %823 = vmatprep.subr.bf16.mxu0 0
        %824 = vmatpush1.bf16.msra.mxu0 0
        %825 = vmatprep.subr.bf16.mxu0 0
        %826 = vmatpush1.bf16.msra.mxu0 0
        %827 = vmatprep.subr.bf16.mxu0 0
        %828 = vmatpush1.bf16.msra.mxu0 0
        %829 = vmatprep.subr.bf16.mxu0 0
        %830 = vmatpush1.bf16.msra.mxu0 0
        %831 = vmatprep.mubr.bf16.mxu0 0
        %832 = vmatmul.mubr.bf16.gmra.mrb[0].mxu0 %v797
        %v833 = vpop.f32.mrb[0].mxu0
        %v834 = vadd.f32 0.0, %v833
        %v835 = vpop.f32.mrb[0].mxu0
        %v836 = vpop.f32.mrb[0].mxu0
        %v837 = vpop.f32.mrb[0].mxu0
        %838 = vdwg.mxu0
        %v839 = vmul.f32 %v834, %v552
        %v840 = vadd.f32 %v794, %v839
        %v841 = vmul.f32 %v840, 0.25
        %s842 = scalar_lea.vmem [#allocation5], 8
        %843 = vst.msk [vmem:[%s842] sm:$0xff] %vm665, %v841
        %s844 = scalar_lea.vmem %s512, 64
        %v845 = vld [vmem:[%s844] sm:$0xf]
        %v846 = vld [vmem:[%s844 + $0x4] sm:$0xf]
        %v847 = vld [vmem:[%s844 + $0x8] sm:$0xf]
        %v848 = vld [vmem:[%s844 + $0xc] sm:$0xf]
        %v849 = vld [vmem:[%s844 + $0x10] sm:$0xf]
        %v850 = vld [vmem:[%s844 + $0x14] sm:$0xf]
        %v851 = vld [vmem:[%s844 + $0x18] sm:$0xf]
        %v852 = vld [vmem:[%s844 + $0x1c] sm:$0xf]
        %s853 = scalar_lea.vmem %s516, 2
        %v854 = vld [vmem:[%s853] sm:$0x1]
        %v856 = vlaneseq
        %v857 = vshrl.u32 %v856, 7
        %v858 = vsub.s32 0, %v857
        %v859 = vrot.slane %v854, %v858
        %v869 = vunpack.c.l.b16 %v845
        %v870 = vunpack.c.l.b16 %v846
        %v871 = vunpack.c.l.b16 %v847
        %v872 = vunpack.c.l.b16 %v848
        %v873 = vunpack.c.l.b16 %v849
        %v874 = vunpack.c.l.b16 %v850
        %v875 = vunpack.c.l.b16 %v851
        %v876 = vunpack.c.l.b16 %v852
        %v877 = vpack.c.b16 %v870, %v869
        %v878 = vpack.c.b16 %v872, %v871
        %v879 = vpack.c.b16 %v874, %v873
        %v880 = vpack.c.b16 %v876, %v875
        %885 = vmatprep.subr.bf16.mxu0 0
        %886 = vmatpush1.bf16.msra.mxu0 %v877
        %887 = vmatprep.subr.bf16.mxu0 0
        %888 = vmatpush1.bf16.msra.mxu0 %v878
        %889 = vmatprep.subr.bf16.mxu0 0
        %890 = vmatpush1.bf16.msra.mxu0 %v879
        %891 = vmatprep.subr.bf16.mxu0 0
        %892 = vmatpush1.bf16.msra.mxu0 %v880
        %893 = vmatprep.subr.bf16.mxu0 0
        %894 = vmatpush1.bf16.msra.mxu0 0
        %895 = vmatprep.subr.bf16.mxu0 0
        %896 = vmatpush1.bf16.msra.mxu0 0
        %897 = vmatprep.subr.bf16.mxu0 0
        %898 = vmatpush1.bf16.msra.mxu0 0
        %899 = vmatprep.subr.bf16.mxu0 0
        %900 = vmatpush1.bf16.msra.mxu0 0
        %901 = vmatprep.subr.bf16.mxu0 0
        %902 = vmatpush1.bf16.msra.mxu0 0
        %903 = vmatprep.subr.bf16.mxu0 0
        %904 = vmatpush1.bf16.msra.mxu0 0
        %905 = vmatprep.subr.bf16.mxu0 0
        %906 = vmatpush1.bf16.msra.mxu0 0
        %907 = vmatprep.subr.bf16.mxu0 0
        %908 = vmatpush1.bf16.msra.mxu0 0
        %909 = vmatprep.subr.bf16.mxu0 0
        %910 = vmatpush1.bf16.msra.mxu0 0
        %911 = vmatprep.subr.bf16.mxu0 0
        %912 = vmatpush1.bf16.msra.mxu0 0
        %913 = vmatprep.subr.bf16.mxu0 0
        %914 = vmatpush1.bf16.msra.mxu0 0
        %915 = vmatprep.subr.bf16.mxu0 0
        %916 = vmatpush1.bf16.msra.mxu0 0
        %917 = vmatprep.mubr.bf16.mxu0 0
        %918 = vmatmul.mubr.bf16.gmra.mrb[0].mxu0 %v615
        %v919 = vpop.f32.mrb[0].mxu0
        %v920 = vadd.f32 %v859, %v919
        %v921 = vpop.f32.mrb[0].mxu0
        %v922 = vpop.f32.mrb[0].mxu0
        %v923 = vpop.f32.mrb[0].mxu0
        %924 = vdwg.mxu0
        %v925 = vmul.f32 %v920, %v551
        %v926 = vpack.c.bf16 %v920, %v920
        %v928 = vsel %vm665, %v926, 0
        %930 = vmatprep.subr.bf16.mxu0 0
        %931 = vmatpush1.bf16.msra.mxu0 %v663
        %932 = vmatprep.subr.bf16.mxu0 0
        %933 = vmatpush1.bf16.msra.mxu0 0
        %934 = vmatprep.subr.bf16.mxu0 0
        %935 = vmatpush1.bf16.msra.mxu0 0
        %936 = vmatprep.subr.bf16.mxu0 0
        %937 = vmatpush1.bf16.msra.mxu0 0
        %938 = vmatprep.subr.bf16.mxu0 0
        %939 = vmatpush1.bf16.msra.mxu0 0
        %940 = vmatprep.subr.bf16.mxu0 0
        %941 = vmatpush1.bf16.msra.mxu0 0
        %942 = vmatprep.subr.bf16.mxu0 0
        %943 = vmatpush1.bf16.msra.mxu0 0
        %944 = vmatprep.subr.bf16.mxu0 0
        %945 = vmatpush1.bf16.msra.mxu0 0
        %946 = vmatprep.subr.bf16.mxu0 0
        %947 = vmatpush1.bf16.msra.mxu0 0
        %948 = vmatprep.subr.bf16.mxu0 0
        %949 = vmatpush1.bf16.msra.mxu0 0
        %950 = vmatprep.subr.bf16.mxu0 0
        %951 = vmatpush1.bf16.msra.mxu0 0
        %952 = vmatprep.subr.bf16.mxu0 0
        %953 = vmatpush1.bf16.msra.mxu0 0
        %954 = vmatprep.subr.bf16.mxu0 0
        %955 = vmatpush1.bf16.msra.mxu0 0
        %956 = vmatprep.subr.bf16.mxu0 0
        %957 = vmatpush1.bf16.msra.mxu0 0
        %958 = vmatprep.subr.bf16.mxu0 0
        %959 = vmatpush1.bf16.msra.mxu0 0
        %960 = vmatprep.subr.bf16.mxu0 0
        %961 = vmatpush1.bf16.msra.mxu0 0
        %962 = vmatprep.mubr.bf16.mxu0 0
        %963 = vmatmul.mubr.bf16.gmra.mrb[0].mxu0 %v928
        %v964 = vpop.f32.mrb[0].mxu0
        %v965 = vadd.f32 0.0, %v964
        %v966 = vpop.f32.mrb[0].mxu0
        %v967 = vpop.f32.mrb[0].mxu0
        %v968 = vpop.f32.mrb[0].mxu0
        %969 = vdwg.mxu0
        %v970 = vmul.f32 %v965, %v552
        %v971 = vadd.f32 %v925, %v970
        %v972 = vmul.f32 %v971, 0.25
        %s973 = scalar_lea.vmem [#allocation5], 16
        %974 = vst.msk [vmem:[%s973] sm:$0xff] %vm665, %v972
        %s975 = scalar_lea.vmem %s512, 96
        %v976 = vld [vmem:[%s975] sm:$0xf]
        %v977 = vld [vmem:[%s975 + $0x4] sm:$0xf]
        %v978 = vld [vmem:[%s975 + $0x8] sm:$0xf]
        %v979 = vld [vmem:[%s975 + $0xc] sm:$0xf]
        %v980 = vld [vmem:[%s975 + $0x10] sm:$0xf]
        %v981 = vld [vmem:[%s975 + $0x14] sm:$0xf]
        %v982 = vld [vmem:[%s975 + $0x18] sm:$0xf]
        %v983 = vld [vmem:[%s975 + $0x1c] sm:$0xf]
        %s984 = scalar_lea.vmem %s516, 3
        %v985 = vld [vmem:[%s984] sm:$0x1]
        %v987 = vlaneseq
        %v988 = vshrl.u32 %v987, 7
        %v989 = vsub.s32 0, %v988
        %v990 = vrot.slane %v985, %v989
        %v1000 = vunpack.c.l.b16 %v976
        %v1001 = vunpack.c.l.b16 %v977
        %v1002 = vunpack.c.l.b16 %v978
        %v1003 = vunpack.c.l.b16 %v979
        %v1004 = vunpack.c.l.b16 %v980
        %v1005 = vunpack.c.l.b16 %v981
        %v1006 = vunpack.c.l.b16 %v982
        %v1007 = vunpack.c.l.b16 %v983
        %v1008 = vpack.c.b16 %v1001, %v1000
        %v1009 = vpack.c.b16 %v1003, %v1002
        %v1010 = vpack.c.b16 %v1005, %v1004
        %v1011 = vpack.c.b16 %v1007, %v1006
        %1016 = vmatprep.subr.bf16.mxu0 0
        %1017 = vmatpush1.bf16.msra.mxu0 %v1008
        %1018 = vmatprep.subr.bf16.mxu0 0
        %1019 = vmatpush1.bf16.msra.mxu0 %v1009
        %1020 = vmatprep.subr.bf16.mxu0 0
        %1021 = vmatpush1.bf16.msra.mxu0 %v1010
        %1022 = vmatprep.subr.bf16.mxu0 0
        %1023 = vmatpush1.bf16.msra.mxu0 %v1011
        %1024 = vmatprep.subr.bf16.mxu0 0
        %1025 = vmatpush1.bf16.msra.mxu0 0
        %1026 = vmatprep.subr.bf16.mxu0 0
        %1027 = vmatpush1.bf16.msra.mxu0 0
        %1028 = vmatprep.subr.bf16.mxu0 0
        %1029 = vmatpush1.bf16.msra.mxu0 0
        %1030 = vmatprep.subr.bf16.mxu0 0
        %1031 = vmatpush1.bf16.msra.mxu0 0
        %1032 = vmatprep.subr.bf16.mxu0 0
        %1033 = vmatpush1.bf16.msra.mxu0 0
        %1034 = vmatprep.subr.bf16.mxu0 0
        %1035 = vmatpush1.bf16.msra.mxu0 0
        %1036 = vmatprep.subr.bf16.mxu0 0
        %1037 = vmatpush1.bf16.msra.mxu0 0
        %1038 = vmatprep.subr.bf16.mxu0 0
        %1039 = vmatpush1.bf16.msra.mxu0 0
        %1040 = vmatprep.subr.bf16.mxu0 0
        %1041 = vmatpush1.bf16.msra.mxu0 0
        %1042 = vmatprep.subr.bf16.mxu0 0
        %1043 = vmatpush1.bf16.msra.mxu0 0
        %1044 = vmatprep.subr.bf16.mxu0 0
        %1045 = vmatpush1.bf16.msra.mxu0 0
        %1046 = vmatprep.subr.bf16.mxu0 0
        %1047 = vmatpush1.bf16.msra.mxu0 0
        %1048 = vmatprep.mubr.bf16.mxu0 0
        %1049 = vmatmul.mubr.bf16.gmra.mrb[0].mxu0 %v615
        %v1050 = vpop.f32.mrb[0].mxu0
        %v1051 = vadd.f32 %v990, %v1050
        %v1052 = vpop.f32.mrb[0].mxu0
        %v1053 = vpop.f32.mrb[0].mxu0
        %v1054 = vpop.f32.mrb[0].mxu0
        %1055 = vdwg.mxu0
        %v1056 = vmul.f32 %v1051, %v551
        %v1057 = vpack.c.bf16 %v1051, %v1051
        %v1059 = vsel %vm665, %v1057, 0
        %1061 = vmatprep.subr.bf16.mxu0 0
        %1062 = vmatpush1.bf16.msra.mxu0 %v663
        %1063 = vmatprep.subr.bf16.mxu0 0
        %1064 = vmatpush1.bf16.msra.mxu0 0
        %1065 = vmatprep.subr.bf16.mxu0 0
        %1066 = vmatpush1.bf16.msra.mxu0 0
        %1067 = vmatprep.subr.bf16.mxu0 0
        %1068 = vmatpush1.bf16.msra.mxu0 0
        %1069 = vmatprep.subr.bf16.mxu0 0
        %1070 = vmatpush1.bf16.msra.mxu0 0
        %1071 = vmatprep.subr.bf16.mxu0 0
        %1072 = vmatpush1.bf16.msra.mxu0 0
        %1073 = vmatprep.subr.bf16.mxu0 0
        %1074 = vmatpush1.bf16.msra.mxu0 0
        %1075 = vmatprep.subr.bf16.mxu0 0
        %1076 = vmatpush1.bf16.msra.mxu0 0
        %1077 = vmatprep.subr.bf16.mxu0 0
        %1078 = vmatpush1.bf16.msra.mxu0 0
        %1079 = vmatprep.subr.bf16.mxu0 0
        %1080 = vmatpush1.bf16.msra.mxu0 0
        %1081 = vmatprep.subr.bf16.mxu0 0
        %1082 = vmatpush1.bf16.msra.mxu0 0
        %1083 = vmatprep.subr.bf16.mxu0 0
        %1084 = vmatpush1.bf16.msra.mxu0 0
        %1085 = vmatprep.subr.bf16.mxu0 0
        %1086 = vmatpush1.bf16.msra.mxu0 0
        %1087 = vmatprep.subr.bf16.mxu0 0
        %1088 = vmatpush1.bf16.msra.mxu0 0
        %1089 = vmatprep.subr.bf16.mxu0 0
        %1090 = vmatpush1.bf16.msra.mxu0 0
        %1091 = vmatprep.subr.bf16.mxu0 0
        %1092 = vmatpush1.bf16.msra.mxu0 0
        %1093 = vmatprep.mubr.bf16.mxu0 0
        %1094 = vmatmul.mubr.bf16.gmra.mrb[0].mxu0 %v1059
        %v1095 = vpop.f32.mrb[0].mxu0
        %v1096 = vadd.f32 0.0, %v1095
        %v1097 = vpop.f32.mrb[0].mxu0
        %v1098 = vpop.f32.mrb[0].mxu0
        %v1099 = vpop.f32.mrb[0].mxu0
        %1100 = vdwg.mxu0
        %v1101 = vmul.f32 %v1096, %v552
        %v1102 = vadd.f32 %v1056, %v1101
        %v1103 = vmul.f32 %v1102, 0.25
        %s1104 = scalar_lea.vmem [#allocation5], 24
        %1105 = vst.msk [vmem:[%s1104] sm:$0xff] %vm665, %v1103
        %s1106 = scalar_lea.vmem %s512, 128
        %v1107 = vld [vmem:[%s1106] sm:$0xf]
        %v1108 = vld [vmem:[%s1106 + $0x4] sm:$0xf]
        %v1109 = vld [vmem:[%s1106 + $0x8] sm:$0xf]
        %v1110 = vld [vmem:[%s1106 + $0xc] sm:$0xf]
        %v1111 = vld [vmem:[%s1106 + $0x10] sm:$0xf]
        %v1112 = vld [vmem:[%s1106 + $0x14] sm:$0xf]
        %v1113 = vld [vmem:[%s1106 + $0x18] sm:$0xf]
        %v1114 = vld [vmem:[%s1106 + $0x1c] sm:$0xf]
        %s1115 = scalar_lea.vmem %s516, 4
        %v1116 = vld [vmem:[%s1115] sm:$0x1]
        %v1118 = vlaneseq
        %v1119 = vshrl.u32 %v1118, 7
        %v1120 = vsub.s32 0, %v1119
        %v1121 = vrot.slane %v1116, %v1120
        %v1131 = vunpack.c.l.b16 %v1107
        %v1132 = vunpack.c.l.b16 %v1108
        %v1133 = vunpack.c.l.b16 %v1109
        %v1134 = vunpack.c.l.b16 %v1110
        %v1135 = vunpack.c.l.b16 %v1111
        %v1136 = vunpack.c.l.b16 %v1112
        %v1137 = vunpack.c.l.b16 %v1113
        %v1138 = vunpack.c.l.b16 %v1114
        %v1139 = vpack.c.b16 %v1132, %v1131
        %v1140 = vpack.c.b16 %v1134, %v1133
        %v1141 = vpack.c.b16 %v1136, %v1135
        %v1142 = vpack.c.b16 %v1138, %v1137
        %1147 = vmatprep.subr.bf16.mxu0 0
        %1148 = vmatpush1.bf16.msra.mxu0 %v1139
        %1149 = vmatprep.subr.bf16.mxu0 0
        %1150 = vmatpush1.bf16.msra.mxu0 %v1140
        %1151 = vmatprep.subr.bf16.mxu0 0
        %1152 = vmatpush1.bf16.msra.mxu0 %v1141
        %1153 = vmatprep.subr.bf16.mxu0 0
        %1154 = vmatpush1.bf16.msra.mxu0 %v1142
        %1155 = vmatprep.subr.bf16.mxu0 0
        %1156 = vmatpush1.bf16.msra.mxu0 0
        %1157 = vmatprep.subr.bf16.mxu0 0
        %1158 = vmatpush1.bf16.msra.mxu0 0
        %1159 = vmatprep.subr.bf16.mxu0 0
        %1160 = vmatpush1.bf16.msra.mxu0 0
        %1161 = vmatprep.subr.bf16.mxu0 0
        %1162 = vmatpush1.bf16.msra.mxu0 0
        %1163 = vmatprep.subr.bf16.mxu0 0
        %1164 = vmatpush1.bf16.msra.mxu0 0
        %1165 = vmatprep.subr.bf16.mxu0 0
        %1166 = vmatpush1.bf16.msra.mxu0 0
        %1167 = vmatprep.subr.bf16.mxu0 0
        %1168 = vmatpush1.bf16.msra.mxu0 0
        %1169 = vmatprep.subr.bf16.mxu0 0
        %1170 = vmatpush1.bf16.msra.mxu0 0
        %1171 = vmatprep.subr.bf16.mxu0 0
        %1172 = vmatpush1.bf16.msra.mxu0 0
        %1173 = vmatprep.subr.bf16.mxu0 0
        %1174 = vmatpush1.bf16.msra.mxu0 0
        %1175 = vmatprep.subr.bf16.mxu0 0
        %1176 = vmatpush1.bf16.msra.mxu0 0
        %1177 = vmatprep.subr.bf16.mxu0 0
        %1178 = vmatpush1.bf16.msra.mxu0 0
        %1179 = vmatprep.mubr.bf16.mxu0 0
        %1180 = vmatmul.mubr.bf16.gmra.mrb[0].mxu0 %v615
        %v1181 = vpop.f32.mrb[0].mxu0
        %v1182 = vadd.f32 %v1121, %v1181
        %v1183 = vpop.f32.mrb[0].mxu0
        %v1184 = vpop.f32.mrb[0].mxu0
        %v1185 = vpop.f32.mrb[0].mxu0
        %1186 = vdwg.mxu0
        %s1187 = scalar_lea.vmem %s512, 192
        %v1188 = vld [vmem:[%s1187] sm:$0xf]
        %v1189 = vld [vmem:[%s1187 + $0x4] sm:$0xf]
        %v1190 = vld [vmem:[%s1187 + $0x8] sm:$0xf]
        %v1191 = vld [vmem:[%s1187 + $0xc] sm:$0xf]
        %v1192 = vld [vmem:[%s1187 + $0x10] sm:$0xf]
        %v1193 = vld [vmem:[%s1187 + $0x14] sm:$0xf]
        %v1194 = vld [vmem:[%s1187 + $0x18] sm:$0xf]
        %v1195 = vld [vmem:[%s1187 + $0x1c] sm:$0xf]
        %s1196 = scalar_lea.vmem %s516, 6
        %v1197 = vld [vmem:[%s1196] sm:$0x1]
        %v1199 = vlaneseq
        %v1200 = vshrl.u32 %v1199, 7
        %v1201 = vsub.s32 0, %v1200
        %v1202 = vrot.slane %v1197, %v1201
        %v1212 = vunpack.c.l.b16 %v1188
        %v1213 = vunpack.c.l.b16 %v1189
        %v1214 = vunpack.c.l.b16 %v1190
        %v1215 = vunpack.c.l.b16 %v1191
        %v1216 = vunpack.c.l.b16 %v1192
        %v1217 = vunpack.c.l.b16 %v1193
        %v1218 = vunpack.c.l.b16 %v1194
        %v1219 = vunpack.c.l.b16 %v1195
        %v1220 = vpack.c.b16 %v1213, %v1212
        %v1221 = vpack.c.b16 %v1215, %v1214
        %v1222 = vpack.c.b16 %v1217, %v1216
        %v1223 = vpack.c.b16 %v1219, %v1218
        %1228 = vmatprep.subr.bf16.mxu0 0
        %1229 = vmatpush1.bf16.msra.mxu0 %v1220
        %1230 = vmatprep.subr.bf16.mxu0 0
        %1231 = vmatpush1.bf16.msra.mxu0 %v1221
        %1232 = vmatprep.subr.bf16.mxu0 0
        %1233 = vmatpush1.bf16.msra.mxu0 %v1222
        %1234 = vmatprep.subr.bf16.mxu0 0
        %1235 = vmatpush1.bf16.msra.mxu0 %v1223
        %1236 = vmatprep.subr.bf16.mxu0 0
        %1237 = vmatpush1.bf16.msra.mxu0 0
        %1238 = vmatprep.subr.bf16.mxu0 0
        %1239 = vmatpush1.bf16.msra.mxu0 0
        %1240 = vmatprep.subr.bf16.mxu0 0
        %1241 = vmatpush1.bf16.msra.mxu0 0
        %1242 = vmatprep.subr.bf16.mxu0 0
        %1243 = vmatpush1.bf16.msra.mxu0 0
        %1244 = vmatprep.subr.bf16.mxu0 0
        %1245 = vmatpush1.bf16.msra.mxu0 0
        %1246 = vmatprep.subr.bf16.mxu0 0
        %1247 = vmatpush1.bf16.msra.mxu0 0
        %1248 = vmatprep.subr.bf16.mxu0 0
        %1249 = vmatpush1.bf16.msra.mxu0 0
        %1250 = vmatprep.subr.bf16.mxu0 0
        %1251 = vmatpush1.bf16.msra.mxu0 0
        %1252 = vmatprep.subr.bf16.mxu0 0
        %1253 = vmatpush1.bf16.msra.mxu0 0
        %1254 = vmatprep.subr.bf16.mxu0 0
        %1255 = vmatpush1.bf16.msra.mxu0 0
        %1256 = vmatprep.subr.bf16.mxu0 0
        %1257 = vmatpush1.bf16.msra.mxu0 0
        %1258 = vmatprep.subr.bf16.mxu0 0
        %1259 = vmatpush1.bf16.msra.mxu0 0
        %1260 = vmatprep.mubr.bf16.mxu0 0
        %1261 = vmatmul.mubr.bf16.gmra.mrb[0].mxu0 %v615
        %v1262 = vpop.f32.mrb[0].mxu0
        %v1263 = vadd.f32 %v1202, %v1262
        %v1264 = vpop.f32.mrb[0].mxu0
        %v1265 = vpop.f32.mrb[0].mxu0
        %v1266 = vpop.f32.mrb[0].mxu0
        %1267 = vdwg.mxu0
        %v1268 = vmul.f32 %v1182, %v551
        %v1269 = vpack.c.bf16 %v1182, %v1182
        %v1271 = vsel %vm665, %v1269, 0
        %1273 = vmatprep.subr.bf16.mxu0 0
        %1274 = vmatpush1.bf16.msra.mxu0 %v663
        %1275 = vmatprep.subr.bf16.mxu0 0
        %1276 = vmatpush1.bf16.msra.mxu0 0
        %1277 = vmatprep.subr.bf16.mxu0 0
        %1278 = vmatpush1.bf16.msra.mxu0 0
        %1279 = vmatprep.subr.bf16.mxu0 0
        %1280 = vmatpush1.bf16.msra.mxu0 0
        %1281 = vmatprep.subr.bf16.mxu0 0
        %1282 = vmatpush1.bf16.msra.mxu0 0
        %1283 = vmatprep.subr.bf16.mxu0 0
        %1284 = vmatpush1.bf16.msra.mxu0 0
        %1285 = vmatprep.subr.bf16.mxu0 0
        %1286 = vmatpush1.bf16.msra.mxu0 0
        %1287 = vmatprep.subr.bf16.mxu0 0
        %1288 = vmatpush1.bf16.msra.mxu0 0
        %1289 = vmatprep.subr.bf16.mxu0 0
        %1290 = vmatpush1.bf16.msra.mxu0 0
        %1291 = vmatprep.subr.bf16.mxu0 0
        %1292 = vmatpush1.bf16.msra.mxu0 0
        %1293 = vmatprep.subr.bf16.mxu0 0
        %1294 = vmatpush1.bf16.msra.mxu0 0
        %1295 = vmatprep.subr.bf16.mxu0 0
        %1296 = vmatpush1.bf16.msra.mxu0 0
        %1297 = vmatprep.subr.bf16.mxu0 0
        %1298 = vmatpush1.bf16.msra.mxu0 0
        %1299 = vmatprep.subr.bf16.mxu0 0
        %1300 = vmatpush1.bf16.msra.mxu0 0
        %1301 = vmatprep.subr.bf16.mxu0 0
        %1302 = vmatpush1.bf16.msra.mxu0 0
        %1303 = vmatprep.subr.bf16.mxu0 0
        %1304 = vmatpush1.bf16.msra.mxu0 0
        %1305 = vmatprep.mubr.bf16.mxu0 0
        %1306 = vmatmul.mubr.bf16.gmra.mrb[0].mxu0 %v1271
        %v1307 = vpop.f32.mrb[0].mxu0
        %v1308 = vadd.f32 0.0, %v1307
        %v1309 = vpop.f32.mrb[0].mxu0
        %v1310 = vpop.f32.mrb[0].mxu0
        %v1311 = vpop.f32.mrb[0].mxu0
        %1312 = vdwg.mxu0
        %v1313 = vmul.f32 %v1308, %v552
        %v1314 = vadd.f32 %v1268, %v1313
        %1315 = vst.msk [vmem:[#allocation6] sm:$0xff] %vm665, %v1314
        %1316 = vst.msk [vmem:[#allocation7] sm:$0xff] %vm665, %v1263
        %s1317 = scalar_lea.vmem [#allocation6], 8
        %1318 = vst.msk [vmem:[%s1317] sm:$0xff] %vm665, %v1314
        %s1319 = scalar_lea.vmem [#allocation7], 8
        %1320 = vst.msk [vmem:[%s1319] sm:$0xff] %vm665, %v1263
        %s1321 = scalar_lea.vmem %s512, 160
        %v1322 = vld [vmem:[%s1321] sm:$0xf]
        %v1323 = vld [vmem:[%s1321 + $0x4] sm:$0xf]
        %v1324 = vld [vmem:[%s1321 + $0x8] sm:$0xf]
        %v1325 = vld [vmem:[%s1321 + $0xc] sm:$0xf]
        %v1326 = vld [vmem:[%s1321 + $0x10] sm:$0xf]
        %v1327 = vld [vmem:[%s1321 + $0x14] sm:$0xf]
        %v1328 = vld [vmem:[%s1321 + $0x18] sm:$0xf]
        %v1329 = vld [vmem:[%s1321 + $0x1c] sm:$0xf]
        %s1330 = scalar_lea.vmem %s516, 5
        %v1331 = vld [vmem:[%s1330] sm:$0x1]
        %v1333 = vlaneseq
        %v1334 = vshrl.u32 %v1333, 7
        %v1335 = vsub.s32 0, %v1334
        %v1336 = vrot.slane %v1331, %v1335
        %v1346 = vunpack.c.l.b16 %v1322
        %v1347 = vunpack.c.l.b16 %v1323
        %v1348 = vunpack.c.l.b16 %v1324
        %v1349 = vunpack.c.l.b16 %v1325
        %v1350 = vunpack.c.l.b16 %v1326
        %v1351 = vunpack.c.l.b16 %v1327
        %v1352 = vunpack.c.l.b16 %v1328
        %v1353 = vunpack.c.l.b16 %v1329
        %v1354 = vpack.c.b16 %v1347, %v1346
        %v1355 = vpack.c.b16 %v1349, %v1348
        %v1356 = vpack.c.b16 %v1351, %v1350
        %v1357 = vpack.c.b16 %v1353, %v1352
        %1362 = vmatprep.subr.bf16.mxu0 0
        %1363 = vmatpush1.bf16.msra.mxu0 %v1354
        %1364 = vmatprep.subr.bf16.mxu0 0
        %1365 = vmatpush1.bf16.msra.mxu0 %v1355
        %1366 = vmatprep.subr.bf16.mxu0 0
        %1367 = vmatpush1.bf16.msra.mxu0 %v1356
        %1368 = vmatprep.subr.bf16.mxu0 0
        %1369 = vmatpush1.bf16.msra.mxu0 %v1357
        %1370 = vmatprep.subr.bf16.mxu0 0
        %1371 = vmatpush1.bf16.msra.mxu0 0
        %1372 = vmatprep.subr.bf16.mxu0 0
        %1373 = vmatpush1.bf16.msra.mxu0 0
        %1374 = vmatprep.subr.bf16.mxu0 0
        %1375 = vmatpush1.bf16.msra.mxu0 0
        %1376 = vmatprep.subr.bf16.mxu0 0
        %1377 = vmatpush1.bf16.msra.mxu0 0
        %1378 = vmatprep.subr.bf16.mxu0 0
        %1379 = vmatpush1.bf16.msra.mxu0 0
        %1380 = vmatprep.subr.bf16.mxu0 0
        %1381 = vmatpush1.bf16.msra.mxu0 0
        %1382 = vmatprep.subr.bf16.mxu0 0
        %1383 = vmatpush1.bf16.msra.mxu0 0
        %1384 = vmatprep.subr.bf16.mxu0 0
        %1385 = vmatpush1.bf16.msra.mxu0 0
        %1386 = vmatprep.subr.bf16.mxu0 0
        %1387 = vmatpush1.bf16.msra.mxu0 0
        %1388 = vmatprep.subr.bf16.mxu0 0
        %1389 = vmatpush1.bf16.msra.mxu0 0
        %1390 = vmatprep.subr.bf16.mxu0 0
        %1391 = vmatpush1.bf16.msra.mxu0 0
        %1392 = vmatprep.subr.bf16.mxu0 0
        %1393 = vmatpush1.bf16.msra.mxu0 0
        %1394 = vmatprep.mubr.bf16.mxu0 0
        %1395 = vmatmul.mubr.bf16.gmra.mrb[0].mxu0 %v615
        %v1396 = vpop.f32.mrb[0].mxu0
        %v1397 = vadd.f32 %v1336, %v1396
        %v1398 = vpop.f32.mrb[0].mxu0
        %v1399 = vpop.f32.mrb[0].mxu0
        %v1400 = vpop.f32.mrb[0].mxu0
        %1401 = vdwg.mxu0
        %s1402 = scalar_lea.vmem %s512, 224
        %v1403 = vld [vmem:[%s1402] sm:$0xf]
        %v1404 = vld [vmem:[%s1402 + $0x4] sm:$0xf]
        %v1405 = vld [vmem:[%s1402 + $0x8] sm:$0xf]
        %v1406 = vld [vmem:[%s1402 + $0xc] sm:$0xf]
        %v1407 = vld [vmem:[%s1402 + $0x10] sm:$0xf]
        %v1408 = vld [vmem:[%s1402 + $0x14] sm:$0xf]
        %v1409 = vld [vmem:[%s1402 + $0x18] sm:$0xf]
        %v1410 = vld [vmem:[%s1402 + $0x1c] sm:$0xf]
        %s1411 = scalar_lea.vmem %s516, 7
        %v1412 = vld [vmem:[%s1411] sm:$0x1]
        %v1414 = vlaneseq
        %v1415 = vshrl.u32 %v1414, 7
        %v1416 = vsub.s32 0, %v1415
        %v1417 = vrot.slane %v1412, %v1416
        %v1427 = vunpack.c.l.b16 %v1403
        %v1428 = vunpack.c.l.b16 %v1404
        %v1429 = vunpack.c.l.b16 %v1405
        %v1430 = vunpack.c.l.b16 %v1406
        %v1431 = vunpack.c.l.b16 %v1407
        %v1432 = vunpack.c.l.b16 %v1408
        %v1433 = vunpack.c.l.b16 %v1409
        %v1434 = vunpack.c.l.b16 %v1410
        %v1435 = vpack.c.b16 %v1428, %v1427
        %v1436 = vpack.c.b16 %v1430, %v1429
        %v1437 = vpack.c.b16 %v1432, %v1431
        %v1438 = vpack.c.b16 %v1434, %v1433
        %1443 = vmatprep.subr.bf16.mxu0 0
        %1444 = vmatpush1.bf16.msra.mxu0 %v1435
        %1445 = vmatprep.subr.bf16.mxu0 0
        %1446 = vmatpush1.bf16.msra.mxu0 %v1436
        %1447 = vmatprep.subr.bf16.mxu0 0
        %1448 = vmatpush1.bf16.msra.mxu0 %v1437
        %1449 = vmatprep.subr.bf16.mxu0 0
        %1450 = vmatpush1.bf16.msra.mxu0 %v1438
        %1451 = vmatprep.subr.bf16.mxu0 0
        %1452 = vmatpush1.bf16.msra.mxu0 0
        %1453 = vmatprep.subr.bf16.mxu0 0
        %1454 = vmatpush1.bf16.msra.mxu0 0
        %1455 = vmatprep.subr.bf16.mxu0 0
        %1456 = vmatpush1.bf16.msra.mxu0 0
        %1457 = vmatprep.subr.bf16.mxu0 0
        %1458 = vmatpush1.bf16.msra.mxu0 0
        %1459 = vmatprep.subr.bf16.mxu0 0
        %1460 = vmatpush1.bf16.msra.mxu0 0
        %1461 = vmatprep.subr.bf16.mxu0 0
        %1462 = vmatpush1.bf16.msra.mxu0 0
        %1463 = vmatprep.subr.bf16.mxu0 0
        %1464 = vmatpush1.bf16.msra.mxu0 0
        %1465 = vmatprep.subr.bf16.mxu0 0
        %1466 = vmatpush1.bf16.msra.mxu0 0
        %1467 = vmatprep.subr.bf16.mxu0 0
        %1468 = vmatpush1.bf16.msra.mxu0 0
        %1469 = vmatprep.subr.bf16.mxu0 0
        %1470 = vmatpush1.bf16.msra.mxu0 0
        %1471 = vmatprep.subr.bf16.mxu0 0
        %1472 = vmatpush1.bf16.msra.mxu0 0
        %1473 = vmatprep.subr.bf16.mxu0 0
        %1474 = vmatpush1.bf16.msra.mxu0 0
        %1475 = vmatprep.mubr.bf16.mxu0 0
        %1476 = vmatmul.mubr.bf16.gmra.mrb[0].mxu0 %v615
        %v1477 = vpop.f32.mrb[0].mxu0
        %v1478 = vadd.f32 %v1417, %v1477
        %v1479 = vpop.f32.mrb[0].mxu0
        %v1480 = vpop.f32.mrb[0].mxu0
        %v1481 = vpop.f32.mrb[0].mxu0
        %1482 = vdwg.mxu0
        %v1483 = vmul.f32 %v1397, %v551
        %v1484 = vpack.c.bf16 %v1397, %v1397
        %v1486 = vsel %vm665, %v1484, 0
        %1488 = vmatprep.subr.bf16.mxu0 0
        %1489 = vmatpush1.bf16.msra.mxu0 %v663
        %1490 = vmatprep.subr.bf16.mxu0 0
        %1491 = vmatpush1.bf16.msra.mxu0 0
        %1492 = vmatprep.subr.bf16.mxu0 0
        %1493 = vmatpush1.bf16.msra.mxu0 0
        %1494 = vmatprep.subr.bf16.mxu0 0
        %1495 = vmatpush1.bf16.msra.mxu0 0
        %1496 = vmatprep.subr.bf16.mxu0 0
        %1497 = vmatpush1.bf16.msra.mxu0 0
        %1498 = vmatprep.subr.bf16.mxu0 0
        %1499 = vmatpush1.bf16.msra.mxu0 0
        %1500 = vmatprep.subr.bf16.mxu0 0
        %1501 = vmatpush1.bf16.msra.mxu0 0
        %1502 = vmatprep.subr.bf16.mxu0 0
        %1503 = vmatpush1.bf16.msra.mxu0 0
        %1504 = vmatprep.subr.bf16.mxu0 0
        %1505 = vmatpush1.bf16.msra.mxu0 0
        %1506 = vmatprep.subr.bf16.mxu0 0
        %1507 = vmatpush1.bf16.msra.mxu0 0
        %1508 = vmatprep.subr.bf16.mxu0 0
        %1509 = vmatpush1.bf16.msra.mxu0 0
        %1510 = vmatprep.subr.bf16.mxu0 0
        %1511 = vmatpush1.bf16.msra.mxu0 0
        %1512 = vmatprep.subr.bf16.mxu0 0
        %1513 = vmatpush1.bf16.msra.mxu0 0
        %1514 = vmatprep.subr.bf16.mxu0 0
        %1515 = vmatpush1.bf16.msra.mxu0 0
        %1516 = vmatprep.subr.bf16.mxu0 0
        %1517 = vmatpush1.bf16.msra.mxu0 0
        %1518 = vmatprep.subr.bf16.mxu0 0
        %1519 = vmatpush1.bf16.msra.mxu0 0
        %1520 = vmatprep.mubr.bf16.mxu0 0
        %1521 = vmatmul.mubr.bf16.gmra.mrb[0].mxu0 %v1486
        %v1522 = vpop.f32.mrb[0].mxu0
        %v1523 = vadd.f32 0.0, %v1522
        %v1524 = vpop.f32.mrb[0].mxu0
        %v1525 = vpop.f32.mrb[0].mxu0
        %v1526 = vpop.f32.mrb[0].mxu0
        %1527 = vdwg.mxu0
        %v1528 = vmul.f32 %v1523, %v552
        %v1529 = vadd.f32 %v1483, %v1528
        %s1530 = scalar_lea.vmem [#allocation6], 16
        %1531 = vst.msk [vmem:[%s1530] sm:$0xff] %vm665, %v1529
        %s1532 = scalar_lea.vmem [#allocation7], 16
        %1533 = vst.msk [vmem:[%s1532] sm:$0xff] %vm665, %v1478
        %s1534 = scalar_lea.vmem [#allocation6], 24
        %1535 = vst.msk [vmem:[%s1534] sm:$0xff] %vm665, %v1529
        %s1536 = scalar_lea.vmem [#allocation7], 24
        %1537 = vst.msk [vmem:[%s1536] sm:$0xff] %vm665, %v1478
        %v1538 = vld [vmem:[#allocation5] sm:$0xff]
        %v1539 = vld [vmem:[#allocation5 + $0x8] sm:$0xff]
        %v1540 = vld [vmem:[#allocation5 + $0x10] sm:$0xff]
        %v1541 = vld [vmem:[#allocation5 + $0x18] sm:$0xff]
        %v1542 = vpack.c.bf16 %v1538, %v1538
        %v1543 = vpack.c.bf16 %v1539, %v1539
        %v1544 = vpack.c.bf16 %v1540, %v1540
        %v1545 = vpack.c.bf16 %v1541, %v1541
        %v1546 = vld [vmem:[#allocation6] sm:$0xff]
        %v1547 = vld [vmem:[#allocation6 + $0x8] sm:$0xff]
        %v1548 = vld [vmem:[#allocation6 + $0x10] sm:$0xff]
        %v1549 = vld [vmem:[#allocation6 + $0x18] sm:$0xff]
        %v1550 = vpack.c.bf16 %v1546, %v1546
        %v1551 = vpack.c.bf16 %v1547, %v1547
        %v1552 = vpack.c.bf16 %v1548, %v1548
        %v1553 = vpack.c.bf16 %v1549, %v1549
        %v1554 = vld [vmem:[#allocation7] sm:$0xff]
        %v1555 = vld [vmem:[#allocation7 + $0x8] sm:$0xff]
        %v1556 = vld [vmem:[#allocation7 + $0x10] sm:$0xff]
        %v1557 = vld [vmem:[#allocation7 + $0x18] sm:$0xff]
        %v1558 = vpack.c.bf16 %v1554, %v1554
        %v1559 = vpack.c.bf16 %v1555, %v1555
        %v1560 = vpack.c.bf16 %v1556, %v1556
        %v1561 = vpack.c.bf16 %v1557, %v1557
        %v1562 = vld [vmem:[#allocation4] sm:$0xff]
        %v1564 = vsel %vm665, %v1542, 0
        %v1567 = vsel %vm665, %v1550, 0
        %1569 = vmatprep.subr.bf16.mxu0 0
        %1570 = vmatpush1.bf16.xpose.msra.mxu0 %v1567
        %1571 = vmatprep.subr.bf16.mxu0 0
        %1572 = vmatpush1.bf16.xpose.msra.mxu0 0
        %1573 = vmatprep.subr.bf16.mxu0 0
        %1574 = vmatpush1.bf16.xpose.msra.mxu0 0
        %1575 = vmatprep.subr.bf16.mxu0 0
        %1576 = vmatpush1.bf16.xpose.msra.mxu0 0
        %1577 = vmatprep.subr.bf16.mxu0 0
        %1578 = vmatpush1.bf16.xpose.msra.mxu0 0
        %1579 = vmatprep.subr.bf16.mxu0 0
        %1580 = vmatpush1.bf16.xpose.msra.mxu0 0
        %1581 = vmatprep.subr.bf16.mxu0 0
        %1582 = vmatpush1.bf16.xpose.msra.mxu0 0
        %1583 = vmatprep.subr.bf16.mxu0 0
        %1584 = vmatpush1.bf16.xpose.msra.mxu0 0
        %1585 = vmatprep.subr.bf16.mxu0 0
        %1586 = vmatpush1.bf16.xpose.msra.mxu0 0
        %1587 = vmatprep.subr.bf16.mxu0 0
        %1588 = vmatpush1.bf16.xpose.msra.mxu0 0
        %1589 = vmatprep.subr.bf16.mxu0 0
        %1590 = vmatpush1.bf16.xpose.msra.mxu0 0
        %1591 = vmatprep.subr.bf16.mxu0 0
        %1592 = vmatpush1.bf16.xpose.msra.mxu0 0
        %1593 = vmatprep.subr.bf16.mxu0 0
        %1594 = vmatpush1.bf16.xpose.msra.mxu0 0
        %1595 = vmatprep.subr.bf16.mxu0 0
        %1596 = vmatpush1.bf16.xpose.msra.mxu0 0
        %1597 = vmatprep.subr.bf16.mxu0 0
        %1598 = vmatpush1.bf16.xpose.msra.mxu0 0
        %1599 = vmatprep.subr.bf16.mxu0 0
        %1600 = vmatpush1.bf16.xpose.msra.mxu0 0
        %1601 = vmatprep.mubr.bf16.mxu0 0
        %1602 = vmatmul.mubr.bf16.gmra.mrb[0].mxu0 %v1564
        %v1603 = vpop.f32.mrb[0].mxu0
        %v1604 = vadd.f32 %v1562, %v1603
        %v1605 = vpop.f32.mrb[0].mxu0
        %v1606 = vpop.f32.mrb[0].mxu0
        %v1607 = vpop.f32.mrb[0].mxu0
        %1608 = vdwg.mxu0
        %v1610 = vsel %vm665, %v1543, 0
        %v1613 = vsel %vm665, %v1551, 0
        %1615 = vmatprep.subr.bf16.mxu0 0
        %1616 = vmatpush1.bf16.xpose.msra.mxu0 %v1613
        %1617 = vmatprep.subr.bf16.mxu0 0
        %1618 = vmatpush1.bf16.xpose.msra.mxu0 0
        %1619 = vmatprep.subr.bf16.mxu0 0
        %1620 = vmatpush1.bf16.xpose.msra.mxu0 0
        %1621 = vmatprep.subr.bf16.mxu0 0
        %1622 = vmatpush1.bf16.xpose.msra.mxu0 0
        %1623 = vmatprep.subr.bf16.mxu0 0
        %1624 = vmatpush1.bf16.xpose.msra.mxu0 0
        %1625 = vmatprep.subr.bf16.mxu0 0
        %1626 = vmatpush1.bf16.xpose.msra.mxu0 0
        %1627 = vmatprep.subr.bf16.mxu0 0
        %1628 = vmatpush1.bf16.xpose.msra.mxu0 0
        %1629 = vmatprep.subr.bf16.mxu0 0
        %1630 = vmatpush1.bf16.xpose.msra.mxu0 0
        %1631 = vmatprep.subr.bf16.mxu0 0
        %1632 = vmatpush1.bf16.xpose.msra.mxu0 0
        %1633 = vmatprep.subr.bf16.mxu0 0
        %1634 = vmatpush1.bf16.xpose.msra.mxu0 0
        %1635 = vmatprep.subr.bf16.mxu0 0
        %1636 = vmatpush1.bf16.xpose.msra.mxu0 0
        %1637 = vmatprep.subr.bf16.mxu0 0
        %1638 = vmatpush1.bf16.xpose.msra.mxu0 0
        %1639 = vmatprep.subr.bf16.mxu0 0
        %1640 = vmatpush1.bf16.xpose.msra.mxu0 0
        %1641 = vmatprep.subr.bf16.mxu0 0
        %1642 = vmatpush1.bf16.xpose.msra.mxu0 0
        %1643 = vmatprep.subr.bf16.mxu0 0
        %1644 = vmatpush1.bf16.xpose.msra.mxu0 0
        %1645 = vmatprep.subr.bf16.mxu0 0
        %1646 = vmatpush1.bf16.xpose.msra.mxu0 0
        %1647 = vmatprep.mubr.bf16.mxu0 0
        %1648 = vmatmul.mubr.bf16.gmra.mrb[0].mxu0 %v1610
        %v1649 = vpop.f32.mrb[0].mxu0
        %v1650 = vadd.f32 %v1562, %v1649
        %v1651 = vpop.f32.mrb[0].mxu0
        %v1652 = vpop.f32.mrb[0].mxu0
        %v1653 = vpop.f32.mrb[0].mxu0
        %1654 = vdwg.mxu0
        %v1656 = vsel %vm665, %v1544, 0
        %v1659 = vsel %vm665, %v1552, 0
        %1661 = vmatprep.subr.bf16.mxu0 0
        %1662 = vmatpush1.bf16.xpose.msra.mxu0 %v1659
        %1663 = vmatprep.subr.bf16.mxu0 0
        %1664 = vmatpush1.bf16.xpose.msra.mxu0 0
        %1665 = vmatprep.subr.bf16.mxu0 0
        %1666 = vmatpush1.bf16.xpose.msra.mxu0 0
        %1667 = vmatprep.subr.bf16.mxu0 0
        %1668 = vmatpush1.bf16.xpose.msra.mxu0 0
        %1669 = vmatprep.subr.bf16.mxu0 0
        %1670 = vmatpush1.bf16.xpose.msra.mxu0 0
        %1671 = vmatprep.subr.bf16.mxu0 0
        %1672 = vmatpush1.bf16.xpose.msra.mxu0 0
        %1673 = vmatprep.subr.bf16.mxu0 0
        %1674 = vmatpush1.bf16.xpose.msra.mxu0 0
        %1675 = vmatprep.subr.bf16.mxu0 0
        %1676 = vmatpush1.bf16.xpose.msra.mxu0 0
        %1677 = vmatprep.subr.bf16.mxu0 0
        %1678 = vmatpush1.bf16.xpose.msra.mxu0 0
        %1679 = vmatprep.subr.bf16.mxu0 0
        %1680 = vmatpush1.bf16.xpose.msra.mxu0 0
        %1681 = vmatprep.subr.bf16.mxu0 0
        %1682 = vmatpush1.bf16.xpose.msra.mxu0 0
        %1683 = vmatprep.subr.bf16.mxu0 0
        %1684 = vmatpush1.bf16.xpose.msra.mxu0 0
        %1685 = vmatprep.subr.bf16.mxu0 0
        %1686 = vmatpush1.bf16.xpose.msra.mxu0 0
        %1687 = vmatprep.subr.bf16.mxu0 0
        %1688 = vmatpush1.bf16.xpose.msra.mxu0 0
        %1689 = vmatprep.subr.bf16.mxu0 0
        %1690 = vmatpush1.bf16.xpose.msra.mxu0 0
        %1691 = vmatprep.subr.bf16.mxu0 0
        %1692 = vmatpush1.bf16.xpose.msra.mxu0 0
        %1693 = vmatprep.mubr.bf16.mxu0 0
        %1694 = vmatmul.mubr.bf16.gmra.mrb[0].mxu0 %v1656
        %v1695 = vpop.f32.mrb[0].mxu0
        %v1696 = vadd.f32 %v1562, %v1695
        %v1697 = vpop.f32.mrb[0].mxu0
        %v1698 = vpop.f32.mrb[0].mxu0
        %v1699 = vpop.f32.mrb[0].mxu0
        %1700 = vdwg.mxu0
        %v1702 = vsel %vm665, %v1545, 0
        %v1705 = vsel %vm665, %v1553, 0
        %1707 = vmatprep.subr.bf16.mxu0 0
        %1708 = vmatpush1.bf16.xpose.msra.mxu0 %v1705
        %1709 = vmatprep.subr.bf16.mxu0 0
        %1710 = vmatpush1.bf16.xpose.msra.mxu0 0
        %1711 = vmatprep.subr.bf16.mxu0 0
        %1712 = vmatpush1.bf16.xpose.msra.mxu0 0
        %1713 = vmatprep.subr.bf16.mxu0 0
        %1714 = vmatpush1.bf16.xpose.msra.mxu0 0
        %1715 = vmatprep.subr.bf16.mxu0 0
        %1716 = vmatpush1.bf16.xpose.msra.mxu0 0
        %1717 = vmatprep.subr.bf16.mxu0 0
        %1718 = vmatpush1.bf16.xpose.msra.mxu0 0
        %1719 = vmatprep.subr.bf16.mxu0 0
        %1720 = vmatpush1.bf16.xpose.msra.mxu0 0
        %1721 = vmatprep.subr.bf16.mxu0 0
        %1722 = vmatpush1.bf16.xpose.msra.mxu0 0
        %1723 = vmatprep.subr.bf16.mxu0 0
        %1724 = vmatpush1.bf16.xpose.msra.mxu0 0
        %1725 = vmatprep.subr.bf16.mxu0 0
        %1726 = vmatpush1.bf16.xpose.msra.mxu0 0
        %1727 = vmatprep.subr.bf16.mxu0 0
        %1728 = vmatpush1.bf16.xpose.msra.mxu0 0
        %1729 = vmatprep.subr.bf16.mxu0 0
        %1730 = vmatpush1.bf16.xpose.msra.mxu0 0
        %1731 = vmatprep.subr.bf16.mxu0 0
        %1732 = vmatpush1.bf16.xpose.msra.mxu0 0
        %1733 = vmatprep.subr.bf16.mxu0 0
        %1734 = vmatpush1.bf16.xpose.msra.mxu0 0
        %1735 = vmatprep.subr.bf16.mxu0 0
        %1736 = vmatpush1.bf16.xpose.msra.mxu0 0
        %1737 = vmatprep.subr.bf16.mxu0 0
        %1738 = vmatpush1.bf16.xpose.msra.mxu0 0
        %1739 = vmatprep.mubr.bf16.mxu0 0
        %1740 = vmatmul.mubr.bf16.gmra.mrb[0].mxu0 %v1702
        %v1741 = vpop.f32.mrb[0].mxu0
        %v1742 = vadd.f32 %v1562, %v1741
        %v1743 = vpop.f32.mrb[0].mxu0
        %v1744 = vpop.f32.mrb[0].mxu0
        %v1745 = vpop.f32.mrb[0].mxu0
        %1746 = vdwg.mxu0
        %vm1747 = vcmask 64512
        %v1748 = vsel %vm1747, %v1604, -inf
        %1749 = vmax.xlane.f32.xlu0 %v1748
        %v1750 = vpop.xlane.xlu0 %1749
        %v1751 = vsel %vm1747, %v1650, -inf
        %1752 = vmax.xlane.f32.xlu0 %v1751
        %v1753 = vpop.xlane.xlu0 %1752
        %v1754 = vsel %vm1747, %v1696, -inf
        %1755 = vmax.xlane.f32.xlu0 %v1754
        %v1756 = vpop.xlane.xlu0 %1755
        %v1757 = vsel %vm1747, %v1742, -inf
        %1758 = vmax.xlane.f32.xlu0 %v1757
        %v1759 = vpop.xlane.xlu0 %1758
        %v1760 = vsub.f32 %v1604, %v1750
        %v1761 = vsub.f32 %v1650, %v1753
        %v1762 = vsub.f32 %v1696, %v1756
        %v1763 = vsub.f32 %v1742, %v1759
        %v1764 = vmul.f32 %v1760, 1.442695
        %v1765 = vpow.pop %v1764
        %v1766 = vmul.f32 %v1761, 1.442695
        %v1767 = vpow.pop %v1766
        %v1768 = vmul.f32 %v1762, 1.442695
        %v1769 = vpow.pop %v1768
        %v1770 = vmul.f32 %v1763, 1.442695
        %v1771 = vpow.pop %v1770
        %v1772 = vsel %vm1747, %v1765, 0.0
        %1773 = vadd.xlane.f32.xlu0 %v1772
        %v1774 = vpop.xlane.xlu0 %1773
        %v1775 = vsel %vm1747, %v1767, 0.0
        %1776 = vadd.xlane.f32.xlu0 %v1775
        %v1777 = vpop.xlane.xlu0 %1776
        %v1778 = vsel %vm1747, %v1769, 0.0
        %1779 = vadd.xlane.f32.xlu0 %v1778
        %v1780 = vpop.xlane.xlu0 %1779
        %v1781 = vsel %vm1747, %v1771, 0.0
        %1782 = vadd.xlane.f32.xlu0 %v1781
        %v1783 = vpop.xlane.xlu0 %1782
        %v1784 = vrcp.pop %v1774
        %v1785 = vrcp.pop %v1777
        %v1786 = vrcp.pop %v1780
        %v1787 = vrcp.pop %v1783
        %v1788 = vmul.f32 %v1765, %v1784
        %v1789 = vmul.f32 %v1767, %v1785
        %v1790 = vmul.f32 %v1769, %v1786
        %v1791 = vmul.f32 %v1771, %v1787
        %v1792 = vpack.c.bf16 %v1788, %v1788
        %v1793 = vpack.c.bf16 %v1789, %v1789
        %v1794 = vpack.c.bf16 %v1790, %v1790
        %v1795 = vpack.c.bf16 %v1791, %v1791
        %v1797 = vsel %vm1747, %v1792, 0
        %vm1799 = vcmask 1043456
        %v1801 = vsel %vm1799, %v1558, 0
        %1803 = vmatprep.subr.bf16.mxu0 0
        %1804 = vmatpush1.bf16.msra.mxu0 %v1801
        %1805 = vmatprep.subr.bf16.mxu0 0
        %1806 = vmatpush1.bf16.msra.mxu0 0
        %1807 = vmatprep.subr.bf16.mxu0 0
        %1808 = vmatpush1.bf16.msra.mxu0 0
        %1809 = vmatprep.subr.bf16.mxu0 0
        %1810 = vmatpush1.bf16.msra.mxu0 0
        %1811 = vmatprep.subr.bf16.mxu0 0
        %1812 = vmatpush1.bf16.msra.mxu0 0
        %1813 = vmatprep.subr.bf16.mxu0 0
        %1814 = vmatpush1.bf16.msra.mxu0 0
        %1815 = vmatprep.subr.bf16.mxu0 0
        %1816 = vmatpush1.bf16.msra.mxu0 0
        %1817 = vmatprep.subr.bf16.mxu0 0
        %1818 = vmatpush1.bf16.msra.mxu0 0
        %1819 = vmatprep.subr.bf16.mxu0 0
        %1820 = vmatpush1.bf16.msra.mxu0 0
        %1821 = vmatprep.subr.bf16.mxu0 0
        %1822 = vmatpush1.bf16.msra.mxu0 0
        %1823 = vmatprep.subr.bf16.mxu0 0
        %1824 = vmatpush1.bf16.msra.mxu0 0
        %1825 = vmatprep.subr.bf16.mxu0 0
        %1826 = vmatpush1.bf16.msra.mxu0 0
        %1827 = vmatprep.subr.bf16.mxu0 0
        %1828 = vmatpush1.bf16.msra.mxu0 0
        %1829 = vmatprep.subr.bf16.mxu0 0
        %1830 = vmatpush1.bf16.msra.mxu0 0
        %1831 = vmatprep.subr.bf16.mxu0 0
        %1832 = vmatpush1.bf16.msra.mxu0 0
        %1833 = vmatprep.subr.bf16.mxu0 0
        %1834 = vmatpush1.bf16.msra.mxu0 0
        %1835 = vmatprep.mubr.bf16.mxu0 0
        %1836 = vmatmul.mubr.bf16.gmra.mrb[0].mxu0 %v1797
        %v1837 = vpop.f32.mrb[0].mxu0
        %v1838 = vadd.f32 0.0, %v1837
        %v1839 = vpop.f32.mrb[0].mxu0
        %v1840 = vpop.f32.mrb[0].mxu0
        %v1841 = vpop.f32.mrb[0].mxu0
        %1842 = vdwg.mxu0
        %v1844 = vsel %vm1747, %v1793, 0
        %v1847 = vsel %vm1799, %v1559, 0
        %1849 = vmatprep.subr.bf16.mxu0 0
        %1850 = vmatpush1.bf16.msra.mxu0 %v1847
        %1851 = vmatprep.subr.bf16.mxu0 0
        %1852 = vmatpush1.bf16.msra.mxu0 0
        %1853 = vmatprep.subr.bf16.mxu0 0
        %1854 = vmatpush1.bf16.msra.mxu0 0
        %1855 = vmatprep.subr.bf16.mxu0 0
        %1856 = vmatpush1.bf16.msra.mxu0 0
        %1857 = vmatprep.subr.bf16.mxu0 0
        %1858 = vmatpush1.bf16.msra.mxu0 0
        %1859 = vmatprep.subr.bf16.mxu0 0
        %1860 = vmatpush1.bf16.msra.mxu0 0
        %1861 = vmatprep.subr.bf16.mxu0 0
        %1862 = vmatpush1.bf16.msra.mxu0 0
        %1863 = vmatprep.subr.bf16.mxu0 0
        %1864 = vmatpush1.bf16.msra.mxu0 0
        %1865 = vmatprep.subr.bf16.mxu0 0
        %1866 = vmatpush1.bf16.msra.mxu0 0
        %1867 = vmatprep.subr.bf16.mxu0 0
        %1868 = vmatpush1.bf16.msra.mxu0 0
        %1869 = vmatprep.subr.bf16.mxu0 0
        %1870 = vmatpush1.bf16.msra.mxu0 0
        %1871 = vmatprep.subr.bf16.mxu0 0
        %1872 = vmatpush1.bf16.msra.mxu0 0
        %1873 = vmatprep.subr.bf16.mxu0 0
        %1874 = vmatpush1.bf16.msra.mxu0 0
        %1875 = vmatprep.subr.bf16.mxu0 0
        %1876 = vmatpush1.bf16.msra.mxu0 0
        %1877 = vmatprep.subr.bf16.mxu0 0
        %1878 = vmatpush1.bf16.msra.mxu0 0
        %1879 = vmatprep.subr.bf16.mxu0 0
        %1880 = vmatpush1.bf16.msra.mxu0 0
        %1881 = vmatprep.mubr.bf16.mxu0 0
        %1882 = vmatmul.mubr.bf16.gmra.mrb[0].mxu0 %v1844
        %v1883 = vpop.f32.mrb[0].mxu0
        %v1884 = vadd.f32 0.0, %v1883
        %v1885 = vpop.f32.mrb[0].mxu0
        %v1886 = vpop.f32.mrb[0].mxu0
        %v1887 = vpop.f32.mrb[0].mxu0
        %1888 = vdwg.mxu0
        %v1890 = vsel %vm1747, %v1794, 0
        %v1893 = vsel %vm1799, %v1560, 0
        %1895 = vmatprep.subr.bf16.mxu0 0
        %1896 = vmatpush1.bf16.msra.mxu0 %v1893
        %1897 = vmatprep.subr.bf16.mxu0 0
        %1898 = vmatpush1.bf16.msra.mxu0 0
        %1899 = vmatprep.subr.bf16.mxu0 0
        %1900 = vmatpush1.bf16.msra.mxu0 0
        %1901 = vmatprep.subr.bf16.mxu0 0
        %1902 = vmatpush1.bf16.msra.mxu0 0
        %1903 = vmatprep.subr.bf16.mxu0 0
        %1904 = vmatpush1.bf16.msra.mxu0 0
        %1905 = vmatprep.subr.bf16.mxu0 0
        %1906 = vmatpush1.bf16.msra.mxu0 0
        %1907 = vmatprep.subr.bf16.mxu0 0
        %1908 = vmatpush1.bf16.msra.mxu0 0
        %1909 = vmatprep.subr.bf16.mxu0 0
        %1910 = vmatpush1.bf16.msra.mxu0 0
        %1911 = vmatprep.subr.bf16.mxu0 0
        %1912 = vmatpush1.bf16.msra.mxu0 0
        %1913 = vmatprep.subr.bf16.mxu0 0
        %1914 = vmatpush1.bf16.msra.mxu0 0
        %1915 = vmatprep.subr.bf16.mxu0 0
        %1916 = vmatpush1.bf16.msra.mxu0 0
        %1917 = vmatprep.subr.bf16.mxu0 0
        %1918 = vmatpush1.bf16.msra.mxu0 0
        %1919 = vmatprep.subr.bf16.mxu0 0
        %1920 = vmatpush1.bf16.msra.mxu0 0
        %1921 = vmatprep.subr.bf16.mxu0 0
        %1922 = vmatpush1.bf16.msra.mxu0 0
        %1923 = vmatprep.subr.bf16.mxu0 0
        %1924 = vmatpush1.bf16.msra.mxu0 0
        %1925 = vmatprep.subr.bf16.mxu0 0
        %1926 = vmatpush1.bf16.msra.mxu0 0
        %1927 = vmatprep.mubr.bf16.mxu0 0
        %1928 = vmatmul.mubr.bf16.gmra.mrb[0].mxu0 %v1890
        %v1929 = vpop.f32.mrb[0].mxu0
        %v1930 = vadd.f32 0.0, %v1929
        %v1931 = vpop.f32.mrb[0].mxu0
        %v1932 = vpop.f32.mrb[0].mxu0
        %v1933 = vpop.f32.mrb[0].mxu0
        %1934 = vdwg.mxu0
        %v1936 = vsel %vm1747, %v1795, 0
        %v1939 = vsel %vm1799, %v1561, 0
        %1941 = vmatprep.subr.bf16.mxu0 0
        %1942 = vmatpush1.bf16.msra.mxu0 %v1939
        %1943 = vmatprep.subr.bf16.mxu0 0
        %1944 = vmatpush1.bf16.msra.mxu0 0
        %1945 = vmatprep.subr.bf16.mxu0 0
        %1946 = vmatpush1.bf16.msra.mxu0 0
        %1947 = vmatprep.subr.bf16.mxu0 0
        %1948 = vmatpush1.bf16.msra.mxu0 0
        %1949 = vmatprep.subr.bf16.mxu0 0
        %1950 = vmatpush1.bf16.msra.mxu0 0
        %1951 = vmatprep.subr.bf16.mxu0 0
        %1952 = vmatpush1.bf16.msra.mxu0 0
        %1953 = vmatprep.subr.bf16.mxu0 0
        %1954 = vmatpush1.bf16.msra.mxu0 0
        %1955 = vmatprep.subr.bf16.mxu0 0
        %1956 = vmatpush1.bf16.msra.mxu0 0
        %1957 = vmatprep.subr.bf16.mxu0 0
        %1958 = vmatpush1.bf16.msra.mxu0 0
        %1959 = vmatprep.subr.bf16.mxu0 0
        %1960 = vmatpush1.bf16.msra.mxu0 0
        %1961 = vmatprep.subr.bf16.mxu0 0
        %1962 = vmatpush1.bf16.msra.mxu0 0
        %1963 = vmatprep.subr.bf16.mxu0 0
        %1964 = vmatpush1.bf16.msra.mxu0 0
        %1965 = vmatprep.subr.bf16.mxu0 0
        %1966 = vmatpush1.bf16.msra.mxu0 0
        %1967 = vmatprep.subr.bf16.mxu0 0
        %1968 = vmatpush1.bf16.msra.mxu0 0
        %1969 = vmatprep.subr.bf16.mxu0 0
        %1970 = vmatpush1.bf16.msra.mxu0 0
        %1971 = vmatprep.subr.bf16.mxu0 0
        %1972 = vmatpush1.bf16.msra.mxu0 0
        %1973 = vmatprep.mubr.bf16.mxu0 0
        %1974 = vmatmul.mubr.bf16.gmra.mrb[0].mxu0 %v1936
        %v1975 = vpop.f32.mrb[0].mxu0
        %v1976 = vadd.f32 0.0, %v1975
        %v1977 = vpop.f32.mrb[0].mxu0
        %v1978 = vpop.f32.mrb[0].mxu0
        %v1979 = vpop.f32.mrb[0].mxu0
        %1980 = vdwg.mxu0
        %v1981 = vld [vmem:[%s521] sm:$0xf]
        %v1982 = vld [vmem:[%s521 + $0x4] sm:$0xf]
        %v1983 = vpack.c.bf16 %v1838, %v1838
        %s1984 = scalar_lea.vmem %s521, 8
        %v1985 = vld [vmem:[%s1984] sm:$0xf]
        %v1986 = vld [vmem:[%s1984 + $0x4] sm:$0xf]
        %v1987 = vpack.c.bf16 %v1884, %v1884
        %v1990 = vunpack.c.l.b16 %v1985
        %v1991 = vunpack.c.l.b16 %v1986
        %v1992 = vpack.c.b16 %v1991, %v1990
        %v1995 = vsel %vm665, %v1987, 0
        %1997 = vmatprep.subr.bf16.mxu0 0
        %1998 = vmatpush1.bf16.msra.mxu0 %v1992
        %1999 = vmatprep.subr.bf16.mxu0 0
        %2000 = vmatpush1.bf16.msra.mxu0 0
        %2001 = vmatprep.subr.bf16.mxu0 0
        %2002 = vmatpush1.bf16.msra.mxu0 0
        %2003 = vmatprep.subr.bf16.mxu0 0
        %2004 = vmatpush1.bf16.msra.mxu0 0
        %2005 = vmatprep.subr.bf16.mxu0 0
        %2006 = vmatpush1.bf16.msra.mxu0 0
        %2007 = vmatprep.subr.bf16.mxu0 0
        %2008 = vmatpush1.bf16.msra.mxu0 0
        %2009 = vmatprep.subr.bf16.mxu0 0
        %2010 = vmatpush1.bf16.msra.mxu0 0
        %2011 = vmatprep.subr.bf16.mxu0 0
        %2012 = vmatpush1.bf16.msra.mxu0 0
        %2013 = vmatprep.subr.bf16.mxu0 0
        %2014 = vmatpush1.bf16.msra.mxu0 0
        %2015 = vmatprep.subr.bf16.mxu0 0
        %2016 = vmatpush1.bf16.msra.mxu0 0
        %2017 = vmatprep.subr.bf16.mxu0 0
        %2018 = vmatpush1.bf16.msra.mxu0 0
        %2019 = vmatprep.subr.bf16.mxu0 0
        %2020 = vmatpush1.bf16.msra.mxu0 0
        %2021 = vmatprep.subr.bf16.mxu0 0
        %2022 = vmatpush1.bf16.msra.mxu0 0
        %2023 = vmatprep.subr.bf16.mxu0 0
        %2024 = vmatpush1.bf16.msra.mxu0 0
        %2025 = vmatprep.subr.bf16.mxu0 0
        %2026 = vmatpush1.bf16.msra.mxu0 0
        %2027 = vmatprep.subr.bf16.mxu0 0
        %2028 = vmatpush1.bf16.msra.mxu0 0
        %2029 = vmatprep.mubr.bf16.mxu0 0
        %2030 = vmatmul.mubr.bf16.gmra.mrb[0].mxu0 %v1995
        %v2031 = vpop.f32.mrb[0].mxu0
        %v2032 = vadd.f32 0.0, %v2031
        %v2033 = vpop.f32.mrb[0].mxu0
        %v2034 = vpop.f32.mrb[0].mxu0
        %v2035 = vpop.f32.mrb[0].mxu0
        %2036 = vdwg.mxu0
        %v2039 = vunpack.c.l.b16 %v1981
        %v2040 = vunpack.c.l.b16 %v1982
        %v2041 = vpack.c.b16 %v2040, %v2039
        %v2044 = vsel %vm665, %v1983, 0
        %2046 = vmatprep.subr.bf16.mxu0 0
        %2047 = vmatpush1.bf16.msra.mxu0 %v2041
        %2048 = vmatprep.subr.bf16.mxu0 0
        %2049 = vmatpush1.bf16.msra.mxu0 0
        %2050 = vmatprep.subr.bf16.mxu0 0
        %2051 = vmatpush1.bf16.msra.mxu0 0
        %2052 = vmatprep.subr.bf16.mxu0 0
        %2053 = vmatpush1.bf16.msra.mxu0 0
        %2054 = vmatprep.subr.bf16.mxu0 0
        %2055 = vmatpush1.bf16.msra.mxu0 0
        %2056 = vmatprep.subr.bf16.mxu0 0
        %2057 = vmatpush1.bf16.msra.mxu0 0
        %2058 = vmatprep.subr.bf16.mxu0 0
        %2059 = vmatpush1.bf16.msra.mxu0 0
        %2060 = vmatprep.subr.bf16.mxu0 0
        %2061 = vmatpush1.bf16.msra.mxu0 0
        %2062 = vmatprep.subr.bf16.mxu0 0
        %2063 = vmatpush1.bf16.msra.mxu0 0
        %2064 = vmatprep.subr.bf16.mxu0 0
        %2065 = vmatpush1.bf16.msra.mxu0 0
        %2066 = vmatprep.subr.bf16.mxu0 0
        %2067 = vmatpush1.bf16.msra.mxu0 0
        %2068 = vmatprep.subr.bf16.mxu0 0
        %2069 = vmatpush1.bf16.msra.mxu0 0
        %2070 = vmatprep.subr.bf16.mxu0 0
        %2071 = vmatpush1.bf16.msra.mxu0 0
        %2072 = vmatprep.subr.bf16.mxu0 0
        %2073 = vmatpush1.bf16.msra.mxu0 0
        %2074 = vmatprep.subr.bf16.mxu0 0
        %2075 = vmatpush1.bf16.msra.mxu0 0
        %2076 = vmatprep.subr.bf16.mxu0 0
        %2077 = vmatpush1.bf16.msra.mxu0 0
        %2078 = vmatprep.mubr.bf16.mxu0 0
        %2079 = vmatmul.mubr.bf16.gmra.mrb[0].mxu0 %v2044
        %v2080 = vpop.f32.mrb[0].mxu0
        %v2081 = vadd.f32 %v2032, %v2080
        %v2082 = vpop.f32.mrb[0].mxu0
        %v2083 = vpop.f32.mrb[0].mxu0
        %v2084 = vpop.f32.mrb[0].mxu0
        %2085 = vdwg.mxu0
        %s2086 = scalar_lea.vmem %s521, 16
        %v2087 = vld [vmem:[%s2086] sm:$0xf]
        %v2088 = vld [vmem:[%s2086 + $0x4] sm:$0xf]
        %v2089 = vpack.c.bf16 %v1930, %v1930
        %v2092 = vunpack.c.l.b16 %v2087
        %v2093 = vunpack.c.l.b16 %v2088
        %v2094 = vpack.c.b16 %v2093, %v2092
        %v2097 = vsel %vm665, %v2089, 0
        %2099 = vmatprep.subr.bf16.mxu0 0
        %2100 = vmatpush1.bf16.msra.mxu0 %v2094
        %2101 = vmatprep.subr.bf16.mxu0 0
        %2102 = vmatpush1.bf16.msra.mxu0 0
        %2103 = vmatprep.subr.bf16.mxu0 0
        %2104 = vmatpush1.bf16.msra.mxu0 0
        %2105 = vmatprep.subr.bf16.mxu0 0
        %2106 = vmatpush1.bf16.msra.mxu0 0
        %2107 = vmatprep.subr.bf16.mxu0 0
        %2108 = vmatpush1.bf16.msra.mxu0 0
        %2109 = vmatprep.subr.bf16.mxu0 0
        %2110 = vmatpush1.bf16.msra.mxu0 0
        %2111 = vmatprep.subr.bf16.mxu0 0
        %2112 = vmatpush1.bf16.msra.mxu0 0
        %2113 = vmatprep.subr.bf16.mxu0 0
        %2114 = vmatpush1.bf16.msra.mxu0 0
        %2115 = vmatprep.subr.bf16.mxu0 0
        %2116 = vmatpush1.bf16.msra.mxu0 0
        %2117 = vmatprep.subr.bf16.mxu0 0
        %2118 = vmatpush1.bf16.msra.mxu0 0
        %2119 = vmatprep.subr.bf16.mxu0 0
        %2120 = vmatpush1.bf16.msra.mxu0 0
        %2121 = vmatprep.subr.bf16.mxu0 0
        %2122 = vmatpush1.bf16.msra.mxu0 0
        %2123 = vmatprep.subr.bf16.mxu0 0
        %2124 = vmatpush1.bf16.msra.mxu0 0
        %2125 = vmatprep.subr.bf16.mxu0 0
        %2126 = vmatpush1.bf16.msra.mxu0 0
        %2127 = vmatprep.subr.bf16.mxu0 0
        %2128 = vmatpush1.bf16.msra.mxu0 0
        %2129 = vmatprep.subr.bf16.mxu0 0
        %2130 = vmatpush1.bf16.msra.mxu0 0
        %2131 = vmatprep.mubr.bf16.mxu0 0
        %2132 = vmatmul.mubr.bf16.gmra.mrb[0].mxu0 %v2097
        %v2133 = vpop.f32.mrb[0].mxu0
        %v2134 = vadd.f32 0.0, %v2133
        %v2135 = vpop.f32.mrb[0].mxu0
        %v2136 = vpop.f32.mrb[0].mxu0
        %v2137 = vpop.f32.mrb[0].mxu0
        %2138 = vdwg.mxu0
        %v2139 = vadd.f32 %v2081, %v2134
        %s2140 = scalar_lea.vmem %s521, 24
        %v2141 = vld [vmem:[%s2140] sm:$0xf]
        %v2142 = vld [vmem:[%s2140 + $0x4] sm:$0xf]
        %v2143 = vpack.c.bf16 %v1976, %v1976
        %v2146 = vunpack.c.l.b16 %v2141
        %v2147 = vunpack.c.l.b16 %v2142
        %v2148 = vpack.c.b16 %v2147, %v2146
        %v2151 = vsel %vm665, %v2143, 0
        %2153 = vmatprep.subr.bf16.mxu0 0
        %2154 = vmatpush1.bf16.msra.mxu0 %v2148
        %2155 = vmatprep.subr.bf16.mxu0 0
        %2156 = vmatpush1.bf16.msra.mxu0 0
        %2157 = vmatprep.subr.bf16.mxu0 0
        %2158 = vmatpush1.bf16.msra.mxu0 0
        %2159 = vmatprep.subr.bf16.mxu0 0
        %2160 = vmatpush1.bf16.msra.mxu0 0
        %2161 = vmatprep.subr.bf16.mxu0 0
        %2162 = vmatpush1.bf16.msra.mxu0 0
        %2163 = vmatprep.subr.bf16.mxu0 0
        %2164 = vmatpush1.bf16.msra.mxu0 0
        %2165 = vmatprep.subr.bf16.mxu0 0
        %2166 = vmatpush1.bf16.msra.mxu0 0
        %2167 = vmatprep.subr.bf16.mxu0 0
        %2168 = vmatpush1.bf16.msra.mxu0 0
        %2169 = vmatprep.subr.bf16.mxu0 0
        %2170 = vmatpush1.bf16.msra.mxu0 0
        %2171 = vmatprep.subr.bf16.mxu0 0
        %2172 = vmatpush1.bf16.msra.mxu0 0
        %2173 = vmatprep.subr.bf16.mxu0 0
        %2174 = vmatpush1.bf16.msra.mxu0 0
        %2175 = vmatprep.subr.bf16.mxu0 0
        %2176 = vmatpush1.bf16.msra.mxu0 0
        %2177 = vmatprep.subr.bf16.mxu0 0
        %2178 = vmatpush1.bf16.msra.mxu0 0
        %2179 = vmatprep.subr.bf16.mxu0 0
        %2180 = vmatpush1.bf16.msra.mxu0 0
        %2181 = vmatprep.subr.bf16.mxu0 0
        %2182 = vmatpush1.bf16.msra.mxu0 0
        %2183 = vmatprep.subr.bf16.mxu0 0
        %2184 = vmatpush1.bf16.msra.mxu0 0
        %2185 = vmatprep.mubr.bf16.mxu0 0
        %2186 = vmatmul.mubr.bf16.gmra.mrb[0].mxu0 %v2151
        %v2187 = vpop.f32.mrb[0].mxu0
        %v2188 = vadd.f32 0.0, %v2187
        %v2189 = vpop.f32.mrb[0].mxu0
        %v2190 = vpop.f32.mrb[0].mxu0
        %v2191 = vpop.f32.mrb[0].mxu0
        %2192 = vdwg.mxu0
        %v2193 = vadd.f32 %v2139, %v2188
        %v2194 = vadd.f32 %v2193, %v555
        %v2195 = vld [vmem:[%s507] sm:$0x1]
        %v2196 = vmul.f32 %v2194, %v2194
        %v2197 = vsel %vm558, %v2196, 0.0
        %2198 = vadd.xlane.f32.xlu0 %v2197
        %v2199 = vpop.xlane.xlu0 %2198
        %v2200 = vmul.f32 %v2199, %v562
        %v2201 = vadd.f32 %v2200, 1e-06
        %v2202 = vrsqrt.pop %v2201
        %v2203 = vmul.f32 %v2194, %v2202
        %v2205 = vlaneseq
        %v2206 = vshrl.u32 %v2205, 7
        %v2207 = vsub.s32 0, %v2206
        %v2208 = vrot.slane %v2195, %v2207
        %v2210 = vmul.f32 %v2203, %v2208
        %v2211 = vpack.c.bf16 %v2210, %v2210
        %v2212 = vld [vmem:[%s526] sm:$0xff]
        %v2213 = vld [vmem:[%s526 + $0x8] sm:$0xff]
        %v2214 = vld [vmem:[%s526 + $0x10] sm:$0xff]
        %v2215 = vld [vmem:[%s526 + $0x18] sm:$0xff]
        %v2216 = vld [vmem:[%s526 + $0x20] sm:$0xff]
        %v2217 = vld [vmem:[%s526 + $0x28] sm:$0xff]
        %v2218 = vld [vmem:[%s526 + $0x30] sm:$0xff]
        %v2219 = vld [vmem:[%s526 + $0x38] sm:$0xff]
        %v2228 = vunpack.c.l.b16 %v2212
        %v2229 = vunpack.c.h.b16 %v2212
        %v2230 = vunpack.c.l.b16 %v2213
        %v2231 = vunpack.c.h.b16 %v2213
        %v2232 = vunpack.c.l.b16 %v2214
        %v2233 = vunpack.c.h.b16 %v2214
        %v2234 = vunpack.c.l.b16 %v2215
        %v2235 = vunpack.c.h.b16 %v2215
        %v2236 = vunpack.c.l.b16 %v2216
        %v2237 = vunpack.c.h.b16 %v2216
        %v2238 = vunpack.c.l.b16 %v2217
        %v2239 = vunpack.c.h.b16 %v2217
        %v2240 = vunpack.c.l.b16 %v2218
        %v2241 = vunpack.c.h.b16 %v2218
        %v2242 = vunpack.c.l.b16 %v2219
        %v2243 = vunpack.c.h.b16 %v2219
        %v2244 = vpack.c.b16 %v2230, %v2228
        %v2245 = vpack.c.b16 %v2231, %v2229
        %v2246 = vpack.c.b16 %v2234, %v2232
        %v2247 = vpack.c.b16 %v2235, %v2233
        %v2248 = vpack.c.b16 %v2238, %v2236
        %v2249 = vpack.c.b16 %v2239, %v2237
        %v2250 = vpack.c.b16 %v2242, %v2240
        %v2251 = vpack.c.b16 %v2243, %v2241
        %v2261 = vsel %vm558, %v2211, 0
        %2263 = vmatprep.subr.bf16.mxu0 %v2245
        %2264 = vmatpush1.bf16.msra.mxu0 %v2244
        %2265 = vmatprep.subr.bf16.mxu0 %v2247
        %2266 = vmatpush1.bf16.msra.mxu0 %v2246
        %2267 = vmatprep.subr.bf16.mxu0 %v2249
        %2268 = vmatpush1.bf16.msra.mxu0 %v2248
        %2269 = vmatprep.subr.bf16.mxu0 %v2251
        %2270 = vmatpush1.bf16.msra.mxu0 %v2250
        %2271 = vmatprep.subr.bf16.mxu0 0
        %2272 = vmatpush1.bf16.msra.mxu0 0
        %2273 = vmatprep.subr.bf16.mxu0 0
        %2274 = vmatpush1.bf16.msra.mxu0 0
        %2275 = vmatprep.subr.bf16.mxu0 0
        %2276 = vmatpush1.bf16.msra.mxu0 0
        %2277 = vmatprep.subr.bf16.mxu0 0
        %2278 = vmatpush1.bf16.msra.mxu0 0
        %2279 = vmatprep.subr.bf16.mxu0 0
        %2280 = vmatpush1.bf16.msra.mxu0 0
        %2281 = vmatprep.subr.bf16.mxu0 0
        %2282 = vmatpush1.bf16.msra.mxu0 0
        %2283 = vmatprep.subr.bf16.mxu0 0
        %2284 = vmatpush1.bf16.msra.mxu0 0
        %2285 = vmatprep.subr.bf16.mxu0 0
        %2286 = vmatpush1.bf16.msra.mxu0 0
        %2287 = vmatprep.subr.bf16.mxu0 0
        %2288 = vmatpush1.bf16.msra.mxu0 0
        %2289 = vmatprep.subr.bf16.mxu0 0
        %2290 = vmatpush1.bf16.msra.mxu0 0
        %2291 = vmatprep.subr.bf16.mxu0 0
        %2292 = vmatpush1.bf16.msra.mxu0 0
        %2293 = vmatprep.subr.bf16.mxu0 0
        %2294 = vmatpush1.bf16.msra.mxu0 0
        %2295 = vmatprep.mubr.bf16.mxu0 0
        %2296 = vmatmul.mubr.bf16.gmra.mrb[0].mxu0 %v2261
        %v2297 = vpop.f32.mrb[0].mxu0
        %v2298 = vadd.f32 0.0, %v2297
        %v2299 = vpop.f32.mrb[0].mxu0
        %v2300 = vadd.f32 0.0, %v2299
        %v2301 = vpop.f32.mrb[0].mxu0
        %v2302 = vpop.f32.mrb[0].mxu0
        %2303 = vdwg.mxu0
        %v2304 = vsub.f32 0.0, %v2298
        %v2305 = vmul.f32 %v2304, 1.442695
        %v2306 = vpow.pop %v2305
        %v2307 = vadd.f32 %v2306, 1.0
        %v2308 = vrcp.pop %v2307
        %v2309 = vmul.f32 %v2298, %v2308
        %v2310 = vmul.f32 %v2309, %v2300
        %v2311 = vld [vmem:[%s531] sm:$0xf]
        %v2312 = vld [vmem:[%s531 + $0x4] sm:$0xf]
        %v2313 = vld [vmem:[%s531 + $0x8] sm:$0xf]
        %v2314 = vld [vmem:[%s531 + $0xc] sm:$0xf]
        %v2315 = vld [vmem:[%s531 + $0x10] sm:$0xf]
        %v2316 = vld [vmem:[%s531 + $0x14] sm:$0xf]
        %v2317 = vld [vmem:[%s531 + $0x18] sm:$0xf]
        %v2318 = vld [vmem:[%s531 + $0x1c] sm:$0xf]
        %v2319 = vld [vmem:[%s531 + $0x20] sm:$0xf]
        %v2320 = vld [vmem:[%s531 + $0x24] sm:$0xf]
        %v2321 = vld [vmem:[%s531 + $0x28] sm:$0xf]
        %v2322 = vld [vmem:[%s531 + $0x2c] sm:$0xf]
        %v2323 = vld [vmem:[%s531 + $0x30] sm:$0xf]
        %v2324 = vld [vmem:[%s531 + $0x34] sm:$0xf]
        %v2325 = vld [vmem:[%s531 + $0x38] sm:$0xf]
        %v2326 = vld [vmem:[%s531 + $0x3c] sm:$0xf]
        %v2327 = vpack.c.bf16 %v2310, %v2310
        %v2344 = vunpack.c.l.b16 %v2311
        %v2345 = vunpack.c.l.b16 %v2312
        %v2346 = vunpack.c.l.b16 %v2313
        %v2347 = vunpack.c.l.b16 %v2314
        %v2348 = vunpack.c.l.b16 %v2315
        %v2349 = vunpack.c.l.b16 %v2316
        %v2350 = vunpack.c.l.b16 %v2317
        %v2351 = vunpack.c.l.b16 %v2318
        %v2352 = vunpack.c.l.b16 %v2319
        %v2353 = vunpack.c.l.b16 %v2320
        %v2354 = vunpack.c.l.b16 %v2321
        %v2355 = vunpack.c.l.b16 %v2322
        %v2356 = vunpack.c.l.b16 %v2323
        %v2357 = vunpack.c.l.b16 %v2324
        %v2358 = vunpack.c.l.b16 %v2325
        %v2359 = vunpack.c.l.b16 %v2326
        %v2360 = vpack.c.b16 %v2345, %v2344
        %v2361 = vpack.c.b16 %v2347, %v2346
        %v2362 = vpack.c.b16 %v2349, %v2348
        %v2363 = vpack.c.b16 %v2351, %v2350
        %v2364 = vpack.c.b16 %v2353, %v2352
        %v2365 = vpack.c.b16 %v2355, %v2354
        %v2366 = vpack.c.b16 %v2357, %v2356
        %v2367 = vpack.c.b16 %v2359, %v2358
        %2376 = vmatprep.subr.bf16.mxu0 0
        %2377 = vmatpush1.bf16.msra.mxu0 %v2360
        %2378 = vmatprep.subr.bf16.mxu0 0
        %2379 = vmatpush1.bf16.msra.mxu0 %v2361
        %2380 = vmatprep.subr.bf16.mxu0 0
        %2381 = vmatpush1.bf16.msra.mxu0 %v2362
        %2382 = vmatprep.subr.bf16.mxu0 0
        %2383 = vmatpush1.bf16.msra.mxu0 %v2363
        %2384 = vmatprep.subr.bf16.mxu0 0
        %2385 = vmatpush1.bf16.msra.mxu0 %v2364
        %2386 = vmatprep.subr.bf16.mxu0 0
        %2387 = vmatpush1.bf16.msra.mxu0 %v2365
        %2388 = vmatprep.subr.bf16.mxu0 0
        %2389 = vmatpush1.bf16.msra.mxu0 %v2366
        %2390 = vmatprep.subr.bf16.mxu0 0
        %2391 = vmatpush1.bf16.msra.mxu0 %v2367
        %2392 = vmatprep.subr.bf16.mxu0 0
        %2393 = vmatpush1.bf16.msra.mxu0 0
        %2394 = vmatprep.subr.bf16.mxu0 0
        %2395 = vmatpush1.bf16.msra.mxu0 0
        %2396 = vmatprep.subr.bf16.mxu0 0
        %2397 = vmatpush1.bf16.msra.mxu0 0
        %2398 = vmatprep.subr.bf16.mxu0 0
        %2399 = vmatpush1.bf16.msra.mxu0 0
        %2400 = vmatprep.subr.bf16.mxu0 0
        %2401 = vmatpush1.bf16.msra.mxu0 0
        %2402 = vmatprep.subr.bf16.mxu0 0
        %2403 = vmatpush1.bf16.msra.mxu0 0
        %2404 = vmatprep.subr.bf16.mxu0 0
        %2405 = vmatpush1.bf16.msra.mxu0 0
        %2406 = vmatprep.subr.bf16.mxu0 0
        %2407 = vmatpush1.bf16.msra.mxu0 0
        %2408 = vmatprep.mubr.bf16.mxu0 0
        %2409 = vmatmul.mubr.bf16.gmra.mrb[0].mxu0 %v2327
        %v2410 = vpop.f32.mrb[0].mxu0
        %v2411 = vadd.f32 0.0, %v2410
        %v2412 = vpop.f32.mrb[0].mxu0
        %v2413 = vpop.f32.mrb[0].mxu0
        %v2414 = vpop.f32.mrb[0].mxu0
        %2415 = vdwg.mxu0
        %2416 = vst.msk [vmem:[#allocation2] sm:$0xff] %vm558, %v2411
        %2417 = vst.msk [vmem:[#allocation3] sm:$0xff] %vm558, %v2194
        %p2418 = scmp.eq.s32.totalorder %s25, 1
        // Predicated region
        $region77: #{tpu_custom_call.1} parent=71 // pred_check
          %p2419 = pneg %p2418
        $region78: #{tpu_custom_call.1} parent=71 // pred_check_branch
          %2421 = sbr.rel (%p2419) target = $region80
        $region79: #{tpu_custom_call.1} parent=71 // pred_region
          %v2422 = vadd.f32 %v2411, %v2194
          %v2423 = vld [vmem:[%s11] sm:$0x1]
          %v2424 = vmul.f32 %v2422, %v2422
          %v2425 = vsel %vm558, %v2424, 0.0
          %2426 = vadd.xlane.f32.xlu0 %v2425
          %v2427 = vpop.xlane.xlu0 %2426
          %v2428 = vmul.f32 %v2427, %v562
          %v2429 = vadd.f32 %v2428, 1e-06
          %v2430 = vrsqrt.pop %v2429
          %v2431 = vmul.f32 %v2422, %v2430
          %v2433 = vlaneseq
          %v2434 = vshrl.u32 %v2433, 7
          %v2435 = vsub.s32 0, %v2434
          %v2436 = vrot.slane %v2423, %v2435
          %v2438 = vmul.f32 %v2431, %v2436
          %v2439 = vld [vmem:[%s12] sm:$0xff]
          %v2440 = vld [vmem:[%s12 + $0x8] sm:$0xff]
          %v2441 = vld [vmem:[%s12 + $0x10] sm:$0xff]
          %v2442 = vld [vmem:[%s12 + $0x18] sm:$0xff]
          %v2443 = vld [vmem:[%s12 + $0x20] sm:$0xff]
          %v2444 = vld [vmem:[%s12 + $0x28] sm:$0xff]
          %v2445 = vld [vmem:[%s12 + $0x30] sm:$0xff]
          %v2446 = vld [vmem:[%s12 + $0x38] sm:$0xff]
          %v2447 = vpack.c.bf16 %v2438, %v2438
          %v2456 = vunpack.c.l.b16 %v2439
          %v2457 = vunpack.c.h.b16 %v2439
          %v2458 = vunpack.c.l.b16 %v2440
          %v2459 = vunpack.c.h.b16 %v2440
          %v2460 = vunpack.c.l.b16 %v2441
          %v2461 = vunpack.c.h.b16 %v2441
          %v2462 = vunpack.c.l.b16 %v2442
          %v2463 = vunpack.c.h.b16 %v2442
          %v2464 = vunpack.c.l.b16 %v2443
          %v2465 = vunpack.c.h.b16 %v2443
          %v2466 = vunpack.c.l.b16 %v2444
          %v2467 = vunpack.c.h.b16 %v2444
          %v2468 = vunpack.c.l.b16 %v2445
          %v2469 = vunpack.c.h.b16 %v2445
          %v2470 = vunpack.c.l.b16 %v2446
          %v2471 = vunpack.c.h.b16 %v2446
          %v2472 = vpack.c.b16 %v2458, %v2456
          %v2473 = vpack.c.b16 %v2459, %v2457
          %v2474 = vpack.c.b16 %v2462, %v2460
          %v2475 = vpack.c.b16 %v2463, %v2461
          %v2476 = vpack.c.b16 %v2466, %v2464
          %v2477 = vpack.c.b16 %v2467, %v2465
          %v2478 = vpack.c.b16 %v2470, %v2468
          %v2479 = vpack.c.b16 %v2471, %v2469
          %v2489 = vsel %vm558, %v2447, 0
          %2491 = vmatprep.subr.bf16.mxu0 %v2473
          %2492 = vmatpush1.bf16.msra.mxu0 %v2472
          %2493 = vmatprep.subr.bf16.mxu0 %v2475
          %2494 = vmatpush1.bf16.msra.mxu0 %v2474
          %2495 = vmatprep.subr.bf16.mxu0 %v2477
          %2496 = vmatpush1.bf16.msra.mxu0 %v2476
          %2497 = vmatprep.subr.bf16.mxu0 %v2479
          %2498 = vmatpush1.bf16.msra.mxu0 %v2478
          %2499 = vmatprep.subr.bf16.mxu0 0
          %2500 = vmatpush1.bf16.msra.mxu0 0
          %2501 = vmatprep.subr.bf16.mxu0 0
          %2502 = vmatpush1.bf16.msra.mxu0 0
          %2503 = vmatprep.subr.bf16.mxu0 0
          %2504 = vmatpush1.bf16.msra.mxu0 0
          %2505 = vmatprep.subr.bf16.mxu0 0
          %2506 = vmatpush1.bf16.msra.mxu0 0
          %2507 = vmatprep.subr.bf16.mxu0 0
          %2508 = vmatpush1.bf16.msra.mxu0 0
          %2509 = vmatprep.subr.bf16.mxu0 0
          %2510 = vmatpush1.bf16.msra.mxu0 0
          %2511 = vmatprep.subr.bf16.mxu0 0
          %2512 = vmatpush1.bf16.msra.mxu0 0
          %2513 = vmatprep.subr.bf16.mxu0 0
          %2514 = vmatpush1.bf16.msra.mxu0 0
          %2515 = vmatprep.subr.bf16.mxu0 0
          %2516 = vmatpush1.bf16.msra.mxu0 0
          %2517 = vmatprep.subr.bf16.mxu0 0
          %2518 = vmatpush1.bf16.msra.mxu0 0
          %2519 = vmatprep.subr.bf16.mxu0 0
          %2520 = vmatpush1.bf16.msra.mxu0 0
          %2521 = vmatprep.subr.bf16.mxu0 0
          %2522 = vmatpush1.bf16.msra.mxu0 0
          %2523 = vmatprep.mubr.bf16.mxu0 0
          %2524 = vmatmul.mubr.bf16.gmra.mrb[0].mxu0 %v2489
          %v2525 = vpop.f32.mrb[0].mxu0
          %v2526 = vadd.f32 0.0, %v2525
          %v2527 = vpop.f32.mrb[0].mxu0
          %v2528 = vadd.f32 0.0, %v2527
          %v2529 = vpop.f32.mrb[0].mxu0
          %v2530 = vpop.f32.mrb[0].mxu0
          %2531 = vdwg.mxu0
          %2532 = vst [vmem:[#allocation8] sm:$0xff] %v2526
          %2533 = vst [vmem:[#allocation8 + $0x8] sm:$0xff] %v2528
        $region80: #{tpu_custom_call.1} parent=71 // pred_fallthru
          _
        // Predicated region
        $region81: #{tpu_custom_call.1} parent=71 // pred_check
          %p2534 = pneg %p346
        $region82: #{tpu_custom_call.1} parent=71 // pred_check_branch
          %2536 = sbr.rel (%p2534) target = $region84
        $region83: #{tpu_custom_call.1} parent=71 // pred_region
          %s2538 = ssub.s32 256, 256
          %2539 = vsyncadd [#allocation9], %s2538
          %s2541 = sshll.u32 [#allocation8], 4
          %s2542 = int_to_ptr.vmem [resolvable:$true] %s2541
          %2544 = dma.vmem_to_hbm [thread:$0]  %s2542, 256, %s13, [#allocation9]
        $region84: #{tpu_custom_call.1} parent=71 // pred_fallthru
          _
        // Predicated region
        $region85: #{tpu_custom_call.1} parent=71 // pred_check
          %p2545 = pneg %p346
        $region86: #{tpu_custom_call.1} parent=71 // pred_check_branch
          %2547 = sbr.rel (%p2545) target = $region88
        $region87: #{tpu_custom_call.1} parent=71 // pred_region
          %2548 = dma.done [#allocation9], 256
        $region88: #{tpu_custom_call.1} parent=71 // pred_fallthru
          _
      $region72: #{tpu_custom_call.1} parent=5 // pred_fallthru
        _
      %p2549 = scmp.le.s32.totalorder 2, %s20
      // Predicated region
      $region89: #{tpu_custom_call.1} parent=5 // pred_check
        %p2550 = pneg %p2549
      $region90: #{tpu_custom_call.1} parent=5 // pred_check_branch
        %2552 = sbr.rel (%p2550) target = $region92
      $region91: #{tpu_custom_call.1} parent=5 // pred_region
        %s2553 = ssub.s32 %s20, 2
      $region92: #{tpu_custom_call.1} parent=5 // pred_fallthru
        _
    $region6: #{tpu_custom_call.1} parent=1 // loop_footer
      %s24 = sadd.s32 1, %s20
    $region7: #{tpu_custom_call.1} parent=1 // loop_footer_branch
      %19 = sbr.rel target = $region3
    $region8: #{tpu_custom_call.1} parent=1 // loop_exit
      _
    %2554 = vsyncpa [#allocation9], 1
    %s2555 = scalar_lea.sflag [#allocation9], 1
    %2556 = vsyncpa %s2555, 1

</llo_original>
